<compile_context>
chip_gen: v7x
topology: tpu7x:2x2x1
jax: 0.10.0
libtpu: 0.0.40
codegen_flags: <defaults>
</compile_context>

<pallas_src>
import functools

import jax
import jax.numpy as jnp
from jax.experimental import pallas as pl
from jax.experimental.pallas import tpu as pltpu

USE_BF16 = False  # flip to True on v6e/v7x for bf16 MXU operands (f32 accum)


# ----------------------------------------------------------------------------
# Pallas kernels
# ----------------------------------------------------------------------------
def _conv_relu_pool_kernel(x_ref, w_ref, b_ref, o_ref):
    """x_ref: (4, tm, K) im2col rows for the 4 positions of a 2x2 pool window,
    w_ref: (K, N), b_ref: (1, N), o_ref: (tm, N) pooled conv output."""
    w = w_ref[...]
    b = b_ref[...]

    def win(i):  # conv + bias + ReLU for one pooling-window position
        acc = jnp.dot(x_ref[i], w, preferred_element_type=jnp.float32)
        return jnp.maximum(acc + b, 0.0)

    o_ref[...] = jnp.maximum(
        jnp.maximum(win(0), win(1)), jnp.maximum(win(2), win(3))
    ).astype(o_ref.dtype)


def _matmul_bias_act_kernel(x_ref, w_ref, b_ref, o_ref, *, relu):
    # (tm, K) @ (K, N) + (1, N)  [+ ReLU]
    acc = jnp.dot(x_ref[...], w_ref[...], preferred_element_type=jnp.float32)
    acc = acc + b_ref[...]
    if relu:
        acc = jnp.maximum(acc, 0.0)
    o_ref[...] = acc.astype(o_ref.dtype)


# ----------------------------------------------------------------------------
# Tiling helper: largest row tile <= target that evenly divides M (mult. of 8)
# ----------------------------------------------------------------------------
def _pick_tile(m, target=512, align=8):
    if m <= target:
        return m
    t = (target // align) * align
    while t >= align:
        if m % t == 0:
            return t
        t -= align
    return m  # fall back to a single full block


# ----------------------------------------------------------------------------
# Pallas wrappers
# ----------------------------------------------------------------------------
def conv_relu_pool(patches, w, b, *, tm_target=512, use_bf16=USE_BF16):
    """Fused conv-as-matmul + bias + ReLU + 2x2 maxpool.
    patches: (4, M, K)   (window position, pooled output row, patch features)
    w: (K, N), b: (N,)   ->  (M, N) pooled NHWC-flattened activations."""
    _, M, K = patches.shape
    N = w.shape[1]
    tm = _pick_tile(M, tm_target)
    op_dtype = jnp.bfloat16 if use_bf16 else jnp.float32
    b2 = b.reshape(1, N).astype(jnp.float32)
    itemsize = 2 if use_bf16 else 4
    return pl.pallas_call(
        _conv_relu_pool_kernel,
        out_shape=jax.ShapeDtypeStruct((M, N), jnp.float32),
        grid=(M // tm,),
        in_specs=[
            pl.BlockSpec((4, tm, K), lambda i: (0, i, 0)),
            pl.BlockSpec((K, N), lambda i: (0, 0)),
            pl.BlockSpec((1, N), lambda i: (0, 0)),
        ],
        out_specs=pl.BlockSpec((tm, N), lambda i: (i, 0)),
        compiler_params=pltpu.CompilerParams(
            dimension_semantics=("parallel",)),
        cost_estimate=pl.CostEstimate(
            flops=2 * 4 * M * K * N,
            transcendentals=0,
            bytes_accessed=itemsize * (4 * M * K + K * N) + 4 * (M * N + N)),
    )(patches.astype(op_dtype), w.astype(op_dtype), b2)


def matmul_bias_act(x, w, b, *, relu, tm_target=512, use_bf16=USE_BF16):
    """y = relu?(x @ w + b); x:(M,K) w:(K,N) b:(N,). Rows tiled over a grid."""
    M, K = x.shape
    N = w.shape[1]
    tm = _pick_tile(M, tm_target)
    op_dtype = jnp.bfloat16 if use_bf16 else jnp.float32
    b2 = b.reshape(1, N).astype(jnp.float32)
    itemsize = 2 if use_bf16 else 4
    return pl.pallas_call(
        functools.partial(_matmul_bias_act_kernel, relu=relu),
        out_shape=jax.ShapeDtypeStruct((M, N), jnp.float32),
        grid=(M // tm,),
        in_specs=[
            pl.BlockSpec((tm, K), lambda i: (i, 0)),
            pl.BlockSpec((K, N), lambda i: (0, 0)),
            pl.BlockSpec((1, N), lambda i: (0, 0)),
        ],
        out_specs=pl.BlockSpec((tm, N), lambda i: (i, 0)),
        compiler_params=pltpu.CompilerParams(
            dimension_semantics=("parallel",)),
        cost_estimate=pl.CostEstimate(
            flops=2 * M * K * N,
            transcendentals=0,
            bytes_accessed=itemsize * (M * K + K * N) + 4 * (M * N + N)),
    )(x.astype(op_dtype), w.astype(op_dtype), b2)


# ----------------------------------------------------------------------------
# Glue: NHWC im2col with pooling-window-major row layout
# ----------------------------------------------------------------------------
# TODO(synk): patch extraction stays as XLA glue; fusing it into the kernel
# would need a manual gather-style DMA which is not worth it at these sizes.
def im2col_for_pool(x, k):
    """x: (B, H, W, C) NHWC -> (4, B*(OH/2)*(OW/2), k*k*C).
    Leading axis = 2x2-pool window position (wh*2+ww) of the conv output;
    rows ordered (b, oh//2, ow//2); columns ordered (ki, kj, c)."""
    B, H, W, C = x.shape
    OH, OW = H - k + 1, W - k + 1
    OH2, OW2 = OH // 2, OW // 2
    cols = []
    for i in range(k):
        for j in range(k):
            cols.append(x[:, i:i + OH, j:j + OW, :])          # (B, OH, OW, C)
    p = jnp.stack(cols, axis=0).reshape(k, k, B, OH, OW, C)
    p = p.reshape(k, k, B, OH2, 2, OW2, 2, C)
    p = p.transpose(4, 6, 2, 3, 5, 0, 1, 7)  # (wh, ww, B, OH2, OW2, ki, kj, C)
    return p.reshape(4, B * OH2 * OW2, k * k * C)


# ----------------------------------------------------------------------------
# Parameters (deterministic, PyTorch-default-style uniform init) + one-time prep
# ----------------------------------------------------------------------------
def init_params(key):
    ks = jax.random.split(key, 8)

    def u(k_, shape, fan_in):
        bound = 1.0 / (fan_in ** 0.5)
        return jax.random.uniform(k_, shape, jnp.float32, -bound, bound)

    return {
        "conv1_w": u(ks[0], (20, 1, 5, 5), 1 * 5 * 5),
        "conv1_b": u(ks[1], (20,), 1 * 5 * 5),
        "conv2_w": u(ks[2], (50, 20, 5, 5), 20 * 5 * 5),
        "conv2_b": u(ks[3], (50,), 20 * 5 * 5),
        "fc1_w": u(ks[4], (500, 4 * 4 * 50), 4 * 4 * 50),
        "fc1_b": u(ks[5], (500,), 4 * 4 * 50),
        "fc2_w": u(ks[6], (10, 500), 500),
        "fc2_b": u(ks[7], (10,), 500),
    }


def prepare_params(params):
    """One-time layout prep (hoisted out of forward, so no per-call transposes).
    conv: OIHW -> (kh*kw*Cin, Cout) matching the (ki, kj, c) im2col columns.
    fc1 : permute columns (c,h,w)->(h,w,c) to match the NHWC flatten, K-major.
    fc2 : K-major."""
    conv1_w = params["conv1_w"].transpose(2, 3, 1, 0).reshape(5 * 5 * 1, 20)
    conv2_w = params["conv2_w"].transpose(2, 3, 1, 0).reshape(5 * 5 * 20, 50)
    fc1_w = (params["fc1_w"].reshape(500, 50, 4, 4)
             .transpose(0, 2, 3, 1).reshape(500, 4 * 4 * 50).T)   # (800, 500)
    fc2_w = params["fc2_w"].T                                     # (500, 10)
    return {
        "conv1_w": conv1_w, "conv1_b": params["conv1_b"],
        "conv2_w": conv2_w, "conv2_b": params["conv2_b"],
        "fc1_w": fc1_w, "fc1_b": params["fc1_b"],
        "fc2_w": fc2_w, "fc2_b": params["fc2_b"],
    }


# ----------------------------------------------------------------------------
# Forward pass (mirrors PyTorch Model.forward exactly)
# ----------------------------------------------------------------------------
def forward(prep, x):
    """x: (B, 1, 28, 28) NCHW float32 -> logits (B, 10)."""
    B = x.shape[0]
    y = x.transpose(0, 2, 3, 1)                          # NHWC (B, 28, 28, 1)

    # conv1 (1->20, k=5) + ReLU + maxpool 2x2  (fused kernel)
    p = im2col_for_pool(y, 5)                            # (4, B*144, 25)
    y = conv_relu_pool(p, prep["conv1_w"], prep["conv1_b"])
    y = y.reshape(B, 12, 12, 20)                         # NHWC

    # conv2 (20->50, k=5) + ReLU + maxpool 2x2  (fused kernel)
    p = im2col_for_pool(y, 5)                            # (4, B*16, 500)
    y = conv_relu_pool(p, prep["conv2_w"], prep["conv2_b"])
    y = y.reshape(B, 4 * 4 * 50)                         # NHWC flat (h, w, c)

    # fc1 + ReLU, fc2  (fc1 weight columns pre-permuted to the NHWC order)
    y = matmul_bias_act(y, prep["fc1_w"], prep["fc1_b"], relu=True)
    y = matmul_bias_act(y, prep["fc2_w"], prep["fc2_b"], relu=False)
    return y                                             # (B, 10)


# ----------------------------------------------------------------------------
# Pure-JAX reference (PyTorch semantics) for a correctness self-check
# ----------------------------------------------------------------------------
def reference_forward(params, x):
    dn = ("NCHW", "OIHW", "NCHW")
    y = jax.lax.conv_general_dilated(x, params["conv1_w"], (1, 1), "VALID",
                                     dimension_numbers=dn)
    y = jax.nn.relu(y + params["conv1_b"].reshape(1, -1, 1, 1))
    y = jax.lax.reduce_window(y, -jnp.inf, jax.lax.max,
                              (1, 1, 2, 2), (1, 1, 2, 2), "VALID")
    y = jax.lax.conv_general_dilated(y, params["conv2_w"], (1, 1), "VALID",
                                     dimension_numbers=dn)
    y = jax.nn.relu(y + params["conv2_b"].reshape(1, -1, 1, 1))
    y = jax.lax.reduce_window(y, -jnp.inf, jax.lax.max,
                              (1, 1, 2, 2), (1, 1, 2, 2), "VALID")
    y = y.reshape(y.shape[0], -1)                        # channel-major flatten
    y = jax.nn.relu(y @ params["fc1_w"].T + params["fc1_b"])
    return y @ params["fc2_w"].T + params["fc2_b"]


if __name__ == "__main__":
    key = jax.random.PRNGKey(0)
    pkey, xkey = jax.random.split(key)
    params = init_params(pkey)
    prep = prepare_params(params)   # one-time weight layout prep (not per-call)

    # MNIST-shaped input: fc1 (4*4*50) pins the spatial size to 28x28.
    x = jax.random.normal(xkey, (2, 1, 28, 28), dtype=jnp.float32)

    out = jax.jit(forward)(prep, x)
    jax.block_until_ready(out)
    assert out.shape == (2, 10)

    ref = reference_forward(params, x)
    max_err = float(jnp.max(jnp.abs(out - ref)))
    assert max_err < 2e-3, f"mismatch vs reference: {max_err}"

    print("KERNEL_OK")
</pallas_src>

<mosaic_0001>
module attributes {stable_mosaic.version = 11 : i64} {
  func.func @_conv_relu_pool_kernel(%arg0: i32, %arg1: memref<4x288x25xf32, #tpu.memory_space<vmem>>, %arg2: memref<25x20xf32, #tpu.memory_space<vmem>>, %arg3: memref<1x20xf32, #tpu.memory_space<vmem>>, %arg4: memref<288x20xf32, #tpu.memory_space<vmem>>) attributes {dimension_semantics = [#tpu.dimension_semantics<parallel>], iteration_bounds = array<i64: 1>, scalar_prefetch = 0 : i64, scratch_operands = 0 : i64, tpu.core_type = #tpu.core_type<tc>, window_params = [{transform_indices = @transform_0, window_bounds = array<i64: 4, 288, 25>}, {pipeline_mode = #tpu.pipeline_mode<synchronous>, transform_indices = @transform_1, window_bounds = array<i64: 25, 20>}, {pipeline_mode = #tpu.pipeline_mode<synchronous>, transform_indices = @transform_2, window_bounds = array<i64: 1, 20>}, {transform_indices = @transform_3, window_bounds = array<i64: 288, 20>}]} {
    %c0 = arith.constant 0 : index
    %c0_0 = arith.constant 0 : index
    %0 = vector.load %arg2[%c0, %c0_0] : memref<25x20xf32, #tpu.memory_space<vmem>>, vector<25x20xf32>
    %c0_1 = arith.constant 0 : index
    %c0_2 = arith.constant 0 : index
    %1 = vector.load %arg3[%c0_1, %c0_2] : memref<1x20xf32, #tpu.memory_space<vmem>>, vector<1x20xf32>
    %c0_3 = arith.constant 0 : index
    %c0_4 = arith.constant 0 : index
    %c0_5 = arith.constant 0 : index
    %2 = vector.load %arg1[%c0_3, %c0_4, %c0_5] : memref<4x288x25xf32, #tpu.memory_space<vmem>>, vector<1x288x25xf32>
    %3 = vector.shape_cast %2 : vector<1x288x25xf32> to vector<288x25xf32>
    %cst = arith.constant dense<0.000000e+00> : vector<288x20xf32>
    %4 = tpu.matmul %3, %0, %cst {dimension_numbers = #tpu.dot_dimension_numbers<[1], [0], [0], [1], [0, 0, 1, 1], [], []>} : vector<288x25xf32>, vector<25x20xf32>, vector<288x20xf32> -> vector<288x20xf32>
    %5 = vector.broadcast %1 : vector<1x20xf32> to vector<288x20xf32>
    %6 = arith.addf %4, %5 : vector<288x20xf32>
    %cst_6 = arith.constant 0.000000e+00 : f32
    %7 = vector.broadcast %cst_6 : f32 to vector<288x20xf32>
    %8 = arith.maximumf %6, %7 : vector<288x20xf32>
    %c1 = arith.constant 1 : index
    %c0_7 = arith.constant 0 : index
    %c0_8 = arith.constant 0 : index
    %9 = vector.load %arg1[%c1, %c0_7, %c0_8] : memref<4x288x25xf32, #tpu.memory_space<vmem>>, vector<1x288x25xf32>
    %10 = vector.shape_cast %9 : vector<1x288x25xf32> to vector<288x25xf32>
    %cst_9 = arith.constant dense<0.000000e+00> : vector<288x20xf32>
    %11 = tpu.matmul %10, %0, %cst_9 {dimension_numbers = #tpu.dot_dimension_numbers<[1], [0], [0], [1], [0, 0, 1, 1], [], []>} : vector<288x25xf32>, vector<25x20xf32>, vector<288x20xf32> -> vector<288x20xf32>
    %12 = vector.broadcast %1 : vector<1x20xf32> to vector<288x20xf32>
    %13 = arith.addf %11, %12 : vector<288x20xf32>
    %cst_10 = arith.constant 0.000000e+00 : f32
    %14 = vector.broadcast %cst_10 : f32 to vector<288x20xf32>
    %15 = arith.maximumf %13, %14 : vector<288x20xf32>
    %16 = arith.maximumf %8, %15 : vector<288x20xf32>
    %c2 = arith.constant 2 : index
    %c0_11 = arith.constant 0 : index
    %c0_12 = arith.constant 0 : index
    %17 = vector.load %arg1[%c2, %c0_11, %c0_12] : memref<4x288x25xf32, #tpu.memory_space<vmem>>, vector<1x288x25xf32>
    %18 = vector.shape_cast %17 : vector<1x288x25xf32> to vector<288x25xf32>
    %cst_13 = arith.constant dense<0.000000e+00> : vector<288x20xf32>
    %19 = tpu.matmul %18, %0, %cst_13 {dimension_numbers = #tpu.dot_dimension_numbers<[1], [0], [0], [1], [0, 0, 1, 1], [], []>} : vector<288x25xf32>, vector<25x20xf32>, vector<288x20xf32> -> vector<288x20xf32>
    %20 = vector.broadcast %1 : vector<1x20xf32> to vector<288x20xf32>
    %21 = arith.addf %19, %20 : vector<288x20xf32>
    %cst_14 = arith.constant 0.000000e+00 : f32
    %22 = vector.broadcast %cst_14 : f32 to vector<288x20xf32>
    %23 = arith.maximumf %21, %22 : vector<288x20xf32>
    %c3 = arith.constant 3 : index
    %c0_15 = arith.constant 0 : index
    %c0_16 = arith.constant 0 : index
    %24 = vector.load %arg1[%c3, %c0_15, %c0_16] : memref<4x288x25xf32, #tpu.memory_space<vmem>>, vector<1x288x25xf32>
    %25 = vector.shape_cast %24 : vector<1x288x25xf32> to vector<288x25xf32>
    %cst_17 = arith.constant dense<0.000000e+00> : vector<288x20xf32>
    %26 = tpu.matmul %25, %0, %cst_17 {dimension_numbers = #tpu.dot_dimension_numbers<[1], [0], [0], [1], [0, 0, 1, 1], [], []>} : vector<288x25xf32>, vector<25x20xf32>, vector<288x20xf32> -> vector<288x20xf32>
    %27 = vector.broadcast %1 : vector<1x20xf32> to vector<288x20xf32>
    %28 = arith.addf %26, %27 : vector<288x20xf32>
    %cst_18 = arith.constant 0.000000e+00 : f32
    %29 = vector.broadcast %cst_18 : f32 to vector<288x20xf32>
    %30 = arith.maximumf %28, %29 : vector<288x20xf32>
    %31 = arith.maximumf %23, %30 : vector<288x20xf32>
    %32 = arith.maximumf %16, %31 : vector<288x20xf32>
    %c0_19 = arith.constant 0 : index
    %c0_20 = arith.constant 0 : index
    %33 = vector.load %arg4[%c0_19, %c0_20] : memref<288x20xf32, #tpu.memory_space<vmem>>, vector<288x20xf32>
    tpu.vector_store %arg4[%c0_19, %c0_20], %32 {strides = array<i32>} : memref<288x20xf32, #tpu.memory_space<vmem>>, vector<288x20xf32>,
    return
  }
  func.func @transform_0(%arg0: i32) -> (i32, i32, i32) {
    %c0_i32 = arith.constant 0 : i32
    %c0_i32_0 = arith.constant 0 : i32
    %c0_i32_1 = arith.constant 0 : i32
    return %c0_i32, %arg0, %c0_i32_0 : i32, i32, i32
  }
  func.func @transform_1(%arg0: i32) -> (i32, i32) {
    %c0_i32 = arith.constant 0 : i32
    %c0_i32_0 = arith.constant 0 : i32
    %c0_i32_1 = arith.constant 0 : i32
    return %c0_i32, %c0_i32_0 : i32, i32
  }
  func.func @transform_2(%arg0: i32) -> (i32, i32) {
    %c0_i32 = arith.constant 0 : i32
    %c0_i32_0 = arith.constant 0 : i32
    %c0_i32_1 = arith.constant 0 : i32
    return %c0_i32, %c0_i32_0 : i32, i32
  }
  func.func @transform_3(%arg0: i32) -> (i32, i32) {
    %c0_i32 = arith.constant 0 : i32
    %c0_i32_0 = arith.constant 0 : i32
    return %arg0, %c0_i32 : i32, i32
  }
}

module attributes {stable_mosaic.version = 11 : i64} {
  func.func @_conv_relu_pool_kernel(%arg0: i32, %arg1: memref<4x32x500xf32, #tpu.memory_space<vmem>>, %arg2: memref<500x50xf32, #tpu.memory_space<vmem>>, %arg3: memref<1x50xf32, #tpu.memory_space<vmem>>, %arg4: memref<32x50xf32, #tpu.memory_space<vmem>>) attributes {dimension_semantics = [#tpu.dimension_semantics<parallel>], iteration_bounds = array<i64: 1>, scalar_prefetch = 0 : i64, scratch_operands = 0 : i64, tpu.core_type = #tpu.core_type<tc>, window_params = [{transform_indices = @transform_0, window_bounds = array<i64: 4, 32, 500>}, {pipeline_mode = #tpu.pipeline_mode<synchronous>, transform_indices = @transform_1, window_bounds = array<i64: 500, 50>}, {pipeline_mode = #tpu.pipeline_mode<synchronous>, transform_indices = @transform_2, window_bounds = array<i64: 1, 50>}, {transform_indices = @transform_3, window_bounds = array<i64: 32, 50>}]} {
    %c0 = arith.constant 0 : index
    %c0_0 = arith.constant 0 : index
    %0 = vector.load %arg2[%c0, %c0_0] : memref<500x50xf32, #tpu.memory_space<vmem>>, vector<500x50xf32>
    %c0_1 = arith.constant 0 : index
    %c0_2 = arith.constant 0 : index
    %1 = vector.load %arg3[%c0_1, %c0_2] : memref<1x50xf32, #tpu.memory_space<vmem>>, vector<1x50xf32>
    %c0_3 = arith.constant 0 : index
    %c0_4 = arith.constant 0 : index
    %c0_5 = arith.constant 0 : index
    %2 = vector.load %arg1[%c0_3, %c0_4, %c0_5] : memref<4x32x500xf32, #tpu.memory_space<vmem>>, vector<1x32x500xf32>
    %3 = vector.shape_cast %2 : vector<1x32x500xf32> to vector<32x500xf32>
    %cst = arith.constant dense<0.000000e+00> : vector<32x50xf32>
    %4 = tpu.matmul %3, %0, %cst {dimension_numbers = #tpu.dot_dimension_numbers<[1], [0], [0], [1], [0, 0, 1, 1], [], []>} : vector<32x500xf32>, vector<500x50xf32>, vector<32x50xf32> -> vector<32x50xf32>
    %5 = vector.broadcast %1 : vector<1x50xf32> to vector<32x50xf32>
    %6 = arith.addf %4, %5 : vector<32x50xf32>
    %cst_6 = arith.constant 0.000000e+00 : f32
    %7 = vector.broadcast %cst_6 : f32 to vector<32x50xf32>
    %8 = arith.maximumf %6, %7 : vector<32x50xf32>
    %c1 = arith.constant 1 : index
    %c0_7 = arith.constant 0 : index
    %c0_8 = arith.constant 0 : index
    %9 = vector.load %arg1[%c1, %c0_7, %c0_8] : memref<4x32x500xf32, #tpu.memory_space<vmem>>, vector<1x32x500xf32>
    %10 = vector.shape_cast %9 : vector<1x32x500xf32> to vector<32x500xf32>
    %cst_9 = arith.constant dense<0.000000e+00> : vector<32x50xf32>
    %11 = tpu.matmul %10, %0, %cst_9 {dimension_numbers = #tpu.dot_dimension_numbers<[1], [0], [0], [1], [0, 0, 1, 1], [], []>} : vector<32x500xf32>, vector<500x50xf32>, vector<32x50xf32> -> vector<32x50xf32>
    %12 = vector.broadcast %1 : vector<1x50xf32> to vector<32x50xf32>
    %13 = arith.addf %11, %12 : vector<32x50xf32>
    %cst_10 = arith.constant 0.000000e+00 : f32
    %14 = vector.broadcast %cst_10 : f32 to vector<32x50xf32>
    %15 = arith.maximumf %13, %14 : vector<32x50xf32>
    %16 = arith.maximumf %8, %15 : vector<32x50xf32>
    %c2 = arith.constant 2 : index
    %c0_11 = arith.constant 0 : index
    %c0_12 = arith.constant 0 : index
    %17 = vector.load %arg1[%c2, %c0_11, %c0_12] : memref<4x32x500xf32, #tpu.memory_space<vmem>>, vector<1x32x500xf32>
    %18 = vector.shape_cast %17 : vector<1x32x500xf32> to vector<32x500xf32>
    %cst_13 = arith.constant dense<0.000000e+00> : vector<32x50xf32>
    %19 = tpu.matmul %18, %0, %cst_13 {dimension_numbers = #tpu.dot_dimension_numbers<[1], [0], [0], [1], [0, 0, 1, 1], [], []>} : vector<32x500xf32>, vector<500x50xf32>, vector<32x50xf32> -> vector<32x50xf32>
    %20 = vector.broadcast %1 : vector<1x50xf32> to vector<32x50xf32>
    %21 = arith.addf %19, %20 : vector<32x50xf32>
    %cst_14 = arith.constant 0.000000e+00 : f32
    %22 = vector.broadcast %cst_14 : f32 to vector<32x50xf32>
    %23 = arith.maximumf %21, %22 : vector<32x50xf32>
    %c3 = arith.constant 3 : index
    %c0_15 = arith.constant 0 : index
    %c0_16 = arith.constant 0 : index
    %24 = vector.load %arg1[%c3, %c0_15, %c0_16] : memref<4x32x500xf32, #tpu.memory_space<vmem>>, vector<1x32x500xf32>
    %25 = vector.shape_cast %24 : vector<1x32x500xf32> to vector<32x500xf32>
    %cst_17 = arith.constant dense<0.000000e+00> : vector<32x50xf32>
    %26 = tpu.matmul %25, %0, %cst_17 {dimension_numbers = #tpu.dot_dimension_numbers<[1], [0], [0], [1], [0, 0, 1, 1], [], []>} : vector<32x500xf32>, vector<500x50xf32>, vector<32x50xf32> -> vector<32x50xf32>
    %27 = vector.broadcast %1 : vector<1x50xf32> to vector<32x50xf32>
    %28 = arith.addf %26, %27 : vector<32x50xf32>
    %cst_18 = arith.constant 0.000000e+00 : f32
    %29 = vector.broadcast %cst_18 : f32 to vector<32x50xf32>
    %30 = arith.maximumf %28, %29 : vector<32x50xf32>
    %31 = arith.maximumf %23, %30 : vector<32x50xf32>
    %32 = arith.maximumf %16, %31 : vector<32x50xf32>
    %c0_19 = arith.constant 0 : index
    %c0_20 = arith.constant 0 : index
    %33 = vector.load %arg4[%c0_19, %c0_20] : memref<32x50xf32, #tpu.memory_space<vmem>>, vector<32x50xf32>
    tpu.vector_store %arg4[%c0_19, %c0_20], %32 {strides = array<i32>} : memref<32x50xf32, #tpu.memory_space<vmem>>, vector<32x50xf32>,
    return
  }
  func.func @transform_0(%arg0: i32) -> (i32, i32, i32) {
    %c0_i32 = arith.constant 0 : i32
    %c0_i32_0 = arith.constant 0 : i32
    %c0_i32_1 = arith.constant 0 : i32
    return %c0_i32, %arg0, %c0_i32_0 : i32, i32, i32
  }
  func.func @transform_1(%arg0: i32) -> (i32, i32) {
    %c0_i32 = arith.constant 0 : i32
    %c0_i32_0 = arith.constant 0 : i32
    %c0_i32_1 = arith.constant 0 : i32
    return %c0_i32, %c0_i32_0 : i32, i32
  }
  func.func @transform_2(%arg0: i32) -> (i32, i32) {
    %c0_i32 = arith.constant 0 : i32
    %c0_i32_0 = arith.constant 0 : i32
    %c0_i32_1 = arith.constant 0 : i32
    return %c0_i32, %c0_i32_0 : i32, i32
  }
  func.func @transform_3(%arg0: i32) -> (i32, i32) {
    %c0_i32 = arith.constant 0 : i32
    %c0_i32_0 = arith.constant 0 : i32
    return %arg0, %c0_i32 : i32, i32
  }
}

module attributes {stable_mosaic.version = 11 : i64} {
  func.func @_matmul_bias_act_kernel(%arg0: i32, %arg1: memref<2x800xf32, #tpu.memory_space<vmem>>, %arg2: memref<800x500xf32, #tpu.memory_space<vmem>>, %arg3: memref<1x500xf32, #tpu.memory_space<vmem>>, %arg4: memref<2x500xf32, #tpu.memory_space<vmem>>) attributes {dimension_semantics = [#tpu.dimension_semantics<parallel>], iteration_bounds = array<i64: 1>, scalar_prefetch = 0 : i64, scratch_operands = 0 : i64, tpu.core_type = #tpu.core_type<tc>, window_params = [{transform_indices = @transform_0, window_bounds = array<i64: 2, 800>}, {pipeline_mode = #tpu.pipeline_mode<synchronous>, transform_indices = @transform_1, window_bounds = array<i64: 800, 500>}, {pipeline_mode = #tpu.pipeline_mode<synchronous>, transform_indices = @transform_2, window_bounds = array<i64: 1, 500>}, {transform_indices = @transform_3, window_bounds = array<i64: 2, 500>}]} {
    %c0 = arith.constant 0 : index
    %c0_0 = arith.constant 0 : index
    %0 = vector.load %arg1[%c0, %c0_0] : memref<2x800xf32, #tpu.memory_space<vmem>>, vector<2x800xf32>
    %c0_1 = arith.constant 0 : index
    %c0_2 = arith.constant 0 : index
    %1 = vector.load %arg2[%c0_1, %c0_2] : memref<800x500xf32, #tpu.memory_space<vmem>>, vector<800x500xf32>
    %cst = arith.constant dense<0.000000e+00> : vector<2x500xf32>
    %2 = tpu.matmul %0, %1, %cst {dimension_numbers = #tpu.dot_dimension_numbers<[1], [0], [0], [1], [0, 0, 1, 1], [], []>} : vector<2x800xf32>, vector<800x500xf32>, vector<2x500xf32> -> vector<2x500xf32>
    %c0_3 = arith.constant 0 : index
    %c0_4 = arith.constant 0 : index
    %3 = vector.load %arg3[%c0_3, %c0_4] : memref<1x500xf32, #tpu.memory_space<vmem>>, vector<1x500xf32>
    %4 = vector.broadcast %3 : vector<1x500xf32> to vector<2x500xf32>
    %5 = arith.addf %2, %4 : vector<2x500xf32>
    %cst_5 = arith.constant 0.000000e+00 : f32
    %6 = vector.broadcast %cst_5 : f32 to vector<2x500xf32>
    %7 = arith.maximumf %5, %6 : vector<2x500xf32>
    %c0_6 = arith.constant 0 : index
    %c0_7 = arith.constant 0 : index
    %8 = vector.load %arg4[%c0_6, %c0_7] : memref<2x500xf32, #tpu.memory_space<vmem>>, vector<2x500xf32>
    tpu.vector_store %arg4[%c0_6, %c0_7], %7 {strides = array<i32>} : memref<2x500xf32, #tpu.memory_space<vmem>>, vector<2x500xf32>,
    return
  }
  func.func @transform_0(%arg0: i32) -> (i32, i32) {
    %c0_i32 = arith.constant 0 : i32
    %c0_i32_0 = arith.constant 0 : i32
    return %arg0, %c0_i32 : i32, i32
  }
  func.func @transform_1(%arg0: i32) -> (i32, i32) {
    %c0_i32 = arith.constant 0 : i32
    %c0_i32_0 = arith.constant 0 : i32
    %c0_i32_1 = arith.constant 0 : i32
    return %c0_i32, %c0_i32_0 : i32, i32
  }
  func.func @transform_2(%arg0: i32) -> (i32, i32) {
    %c0_i32 = arith.constant 0 : i32
    %c0_i32_0 = arith.constant 0 : i32
    %c0_i32_1 = arith.constant 0 : i32
    return %c0_i32, %c0_i32_0 : i32, i32
  }
  func.func @transform_3(%arg0: i32) -> (i32, i32) {
    %c0_i32 = arith.constant 0 : i32
    %c0_i32_0 = arith.constant 0 : i32
    return %arg0, %c0_i32 : i32, i32
  }
}

module attributes {stable_mosaic.version = 11 : i64} {
  func.func @_matmul_bias_act_kernel(%arg0: i32, %arg1: memref<2x500xf32, #tpu.memory_space<vmem>>, %arg2: memref<500x10xf32, #tpu.memory_space<vmem>>, %arg3: memref<1x10xf32, #tpu.memory_space<vmem>>, %arg4: memref<2x10xf32, #tpu.memory_space<vmem>>) attributes {dimension_semantics = [#tpu.dimension_semantics<parallel>], iteration_bounds = array<i64: 1>, scalar_prefetch = 0 : i64, scratch_operands = 0 : i64, tpu.core_type = #tpu.core_type<tc>, window_params = [{transform_indices = @transform_0, window_bounds = array<i64: 2, 500>}, {pipeline_mode = #tpu.pipeline_mode<synchronous>, transform_indices = @transform_1, window_bounds = array<i64: 500, 10>}, {pipeline_mode = #tpu.pipeline_mode<synchronous>, transform_indices = @transform_2, window_bounds = array<i64: 1, 10>}, {transform_indices = @transform_3, window_bounds = array<i64: 2, 10>}]} {
    %c0 = arith.constant 0 : index
    %c0_0 = arith.constant 0 : index
    %0 = vector.load %arg1[%c0, %c0_0] : memref<2x500xf32, #tpu.memory_space<vmem>>, vector<2x500xf32>
    %c0_1 = arith.constant 0 : index
    %c0_2 = arith.constant 0 : index
    %1 = vector.load %arg2[%c0_1, %c0_2] : memref<500x10xf32, #tpu.memory_space<vmem>>, vector<500x10xf32>
    %cst = arith.constant dense<0.000000e+00> : vector<2x10xf32>
    %2 = tpu.matmul %0, %1, %cst {dimension_numbers = #tpu.dot_dimension_numbers<[1], [0], [0], [1], [0, 0, 1, 1], [], []>} : vector<2x500xf32>, vector<500x10xf32>, vector<2x10xf32> -> vector<2x10xf32>
    %c0_3 = arith.constant 0 : index
    %c0_4 = arith.constant 0 : index
    %3 = vector.load %arg3[%c0_3, %c0_4] : memref<1x10xf32, #tpu.memory_space<vmem>>, vector<1x10xf32>
    %4 = vector.broadcast %3 : vector<1x10xf32> to vector<2x10xf32>
    %5 = arith.addf %2, %4 : vector<2x10xf32>
    %c0_5 = arith.constant 0 : index
    %c0_6 = arith.constant 0 : index
    %6 = vector.load %arg4[%c0_5, %c0_6] : memref<2x10xf32, #tpu.memory_space<vmem>>, vector<2x10xf32>
    tpu.vector_store %arg4[%c0_5, %c0_6], %5 {strides = array<i32>} : memref<2x10xf32, #tpu.memory_space<vmem>>, vector<2x10xf32>,
    return
  }
  func.func @transform_0(%arg0: i32) -> (i32, i32) {
    %c0_i32 = arith.constant 0 : i32
    %c0_i32_0 = arith.constant 0 : i32
    return %arg0, %c0_i32 : i32, i32
  }
  func.func @transform_1(%arg0: i32) -> (i32, i32) {
    %c0_i32 = arith.constant 0 : i32
    %c0_i32_0 = arith.constant 0 : i32
    %c0_i32_1 = arith.constant 0 : i32
    return %c0_i32, %c0_i32_0 : i32, i32
  }
  func.func @transform_2(%arg0: i32) -> (i32, i32) {
    %c0_i32 = arith.constant 0 : i32
    %c0_i32_0 = arith.constant 0 : i32
    %c0_i32_1 = arith.constant 0 : i32
    return %c0_i32, %c0_i32_0 : i32, i32
  }
  func.func @transform_3(%arg0: i32) -> (i32, i32) {
    %c0_i32 = arith.constant 0 : i32
    %c0_i32_0 = arith.constant 0 : i32
    return %arg0, %c0_i32 : i32, i32
  }
}

</mosaic_0001>

<llo_original>
// kernel: forward.4
$region0: #{forward.4}
  #allocation0 [shape = 'u32[]', space=smem, size = 0x4, offset = 0x4, fixed_abs, tag = 'smem constant byte address 0x4 - core index']
  #allocation1 [shape = 'u32[144,128]{1,0:T(1,128)}', space=vmem, size = 0x12000, scoped, tag = 'internal scratch']
  %s0 = inlined_call_operand.vmem [shape: f32[4,288,25], index: 0, kind: input, shape index: {}]
  %s1 = inlined_call_operand.vmem [shape: f32[25,20], index: 1, kind: input, shape index: {}]
  %s2 = inlined_call_operand.vmem [shape: f32[1,20], index: 2, kind: input, shape index: {}]
  %s3 = inlined_call_operand.vmem [shape: f32[288,20], index: 3, kind: output, shape index: {}]
  %s4 = sld [smem:[#allocation0]]
  $region22: #{forward.4} parent=0
    _
  %s6 = ssub.s32 1, %s4
  %s7 = scalar_select 0, %s6, %s4
  // Predicated region
  $region2: #{forward.4} parent=0 // pred_check
    _
  $region3: #{forward.4} parent=0 // pred_check_branch
    %9 = sbr.rel (0) target = $region5
  $region4: #{forward.4} parent=0 // pred_region
    _
  $region5: #{forward.4} parent=0 // pred_fallthru
    _
  // Predicated region
  $region6: #{forward.4} parent=0 // pred_check
    _
  $region7: #{forward.4} parent=0 // pred_check_branch
    %11 = sbr.rel (0) target = $region9
  $region8: #{forward.4} parent=0 // pred_region
    _
  $region9: #{forward.4} parent=0 // pred_fallthru
    _
  // Predicated region
  $region10: #{forward.4} parent=0 // pred_check
    _
  $region11: #{forward.4} parent=0 // pred_check_branch
    %13 = sbr.rel (0) target = $region13
  $region12: #{forward.4} parent=0 // pred_region
    _
  $region13: #{forward.4} parent=0 // pred_fallthru
    _
  %v14 = vld [vmem:[%s1] sm:$0xff]
  %v15 = vld [vmem:[%s1 + $0x8] sm:$0xff]
  %v16 = vld [vmem:[%s1 + $0x10] sm:$0xff]
  %v17 = vld [vmem:[%s1 + $0x18] sm:$0x1]
  %v18 = vld [vmem:[%s2] sm:$0x1]
  %v19 = vld [vmem:[%s0] sm:$0xff]
  %v20 = vld [vmem:[%s0 + $0x8] sm:$0xff]
  %v21 = vld [vmem:[%s0 + $0x10] sm:$0xff]
  %v22 = vld [vmem:[%s0 + $0x18] sm:$0xff]
  %v23 = vld [vmem:[%s0 + $0x20] sm:$0xff]
  %v24 = vld [vmem:[%s0 + $0x28] sm:$0xff]
  %v25 = vld [vmem:[%s0 + $0x30] sm:$0xff]
  %v26 = vld [vmem:[%s0 + $0x38] sm:$0xff]
  %v27 = vld [vmem:[%s0 + $0x40] sm:$0xff]
  %v28 = vld [vmem:[%s0 + $0x48] sm:$0xff]
  %v29 = vld [vmem:[%s0 + $0x50] sm:$0xff]
  %v30 = vld [vmem:[%s0 + $0x58] sm:$0xff]
  %v31 = vld [vmem:[%s0 + $0x60] sm:$0xff]
  %v32 = vld [vmem:[%s0 + $0x68] sm:$0xff]
  %v33 = vld [vmem:[%s0 + $0x70] sm:$0xff]
  %v34 = vld [vmem:[%s0 + $0x78] sm:$0xff]
  %v35 = vld [vmem:[%s0 + $0x80] sm:$0xff]
  %v36 = vld [vmem:[%s0 + $0x88] sm:$0xff]
  %v37 = vld [vmem:[%s0 + $0x90] sm:$0xff]
  %v38 = vld [vmem:[%s0 + $0x98] sm:$0xff]
  %v39 = vld [vmem:[%s0 + $0xa0] sm:$0xff]
  %v40 = vld [vmem:[%s0 + $0xa8] sm:$0xff]
  %v41 = vld [vmem:[%s0 + $0xb0] sm:$0xff]
  %v42 = vld [vmem:[%s0 + $0xb8] sm:$0xff]
  %v43 = vld [vmem:[%s0 + $0xc0] sm:$0xff]
  %v44 = vld [vmem:[%s0 + $0xc8] sm:$0xff]
  %v45 = vld [vmem:[%s0 + $0xd0] sm:$0xff]
  %v46 = vld [vmem:[%s0 + $0xd8] sm:$0xff]
  %v47 = vld [vmem:[%s0 + $0xe0] sm:$0xff]
  %v48 = vld [vmem:[%s0 + $0xe8] sm:$0xff]
  %v49 = vld [vmem:[%s0 + $0xf0] sm:$0xff]
  %v50 = vld [vmem:[%s0 + $0xf8] sm:$0xff]
  %v51 = vld [vmem:[%s0 + $0x100] sm:$0xff]
  %v52 = vld [vmem:[%s0 + $0x108] sm:$0xff]
  %v53 = vld [vmem:[%s0 + $0x110] sm:$0xff]
  %v54 = vld [vmem:[%s0 + $0x118] sm:$0xff]
  %v56 = vlaneseq
  %v57 = vshrl.u32 %v56, 7
  %v58 = vsub.s32 0, %v57
  %v59 = vrot.slane %v18, %v58
  %vm61 = vcmask 203776
  %v63 = vsel %vm61, %v19, 0
  %v66 = vsel %vm61, %v20, 0
  %v69 = vsel %vm61, %v21, 0
  %v72 = vsel %vm61, %v22, 0
  %v75 = vsel %vm61, %v23, 0
  %v78 = vsel %vm61, %v24, 0
  %v81 = vsel %vm61, %v25, 0
  %v84 = vsel %vm61, %v26, 0
  %v87 = vsel %vm61, %v27, 0
  %v90 = vsel %vm61, %v28, 0
  %v93 = vsel %vm61, %v29, 0
  %v96 = vsel %vm61, %v30, 0
  %v99 = vsel %vm61, %v31, 0
  %v102 = vsel %vm61, %v32, 0
  %v105 = vsel %vm61, %v33, 0
  %v108 = vsel %vm61, %v34, 0
  %v111 = vsel %vm61, %v35, 0
  %v114 = vsel %vm61, %v36, 0
  %v117 = vsel %vm61, %v37, 0
  %v120 = vsel %vm61, %v38, 0
  %v123 = vsel %vm61, %v39, 0
  %v126 = vsel %vm61, %v40, 0
  %v129 = vsel %vm61, %v41, 0
  %v132 = vsel %vm61, %v42, 0
  %v135 = vsel %vm61, %v43, 0
  %v138 = vsel %vm61, %v44, 0
  %v141 = vsel %vm61, %v45, 0
  %v144 = vsel %vm61, %v46, 0
  %v147 = vsel %vm61, %v47, 0
  %v150 = vsel %vm61, %v48, 0
  %v153 = vsel %vm61, %v49, 0
  %v156 = vsel %vm61, %v50, 0
  %v159 = vsel %vm61, %v51, 0
  %v162 = vsel %vm61, %v52, 0
  %v165 = vsel %vm61, %v53, 0
  %v168 = vsel %vm61, %v54, 0
  %vm170 = vcmask 1040384
  %v172 = vsel %vm170, %v17, 0
  %174 = vmatprep.subr.mxu0 0.0
  %175 = vmatpush1.msra.mxu0 %v14
  %176 = vmatprep.subr.mxu0 0.0
  %177 = vmatpush1.msra.mxu0 %v15
  %178 = vmatprep.subr.mxu0 0.0
  %179 = vmatpush1.msra.mxu0 %v16
  %180 = vmatprep.subr.mxu0 0.0
  %181 = vmatpush1.msra.mxu0 %v172
  %182 = vmatprep.subr.mxu0 0.0
  %183 = vmatpush1.msra.mxu0 0.0
  %184 = vmatprep.subr.mxu0 0.0
  %185 = vmatpush1.msra.mxu0 0.0
  %186 = vmatprep.subr.mxu0 0.0
  %187 = vmatpush1.msra.mxu0 0.0
  %188 = vmatprep.subr.mxu0 0.0
  %189 = vmatpush1.msra.mxu0 0.0
  %190 = vmatprep.subr.mxu0 0.0
  %191 = vmatpush1.msra.mxu0 0.0
  %192 = vmatprep.subr.mxu0 0.0
  %193 = vmatpush1.msra.mxu0 0.0
  %194 = vmatprep.subr.mxu0 0.0
  %195 = vmatpush1.msra.mxu0 0.0
  %196 = vmatprep.subr.mxu0 0.0
  %197 = vmatpush1.msra.mxu0 0.0
  %198 = vmatprep.subr.mxu0 0.0
  %199 = vmatpush1.msra.mxu0 0.0
  %200 = vmatprep.subr.mxu0 0.0
  %201 = vmatpush1.msra.mxu0 0.0
  %202 = vmatprep.subr.mxu0 0.0
  %203 = vmatpush1.msra.mxu0 0.0
  %204 = vmatprep.subr.mxu0 0.0
  %205 = vmatpush1.msra.mxu0 0.0
  %206 = vmatprep.subr.mxu0 0.0
  %207 = vmatpush1.msra.mxu0 0.0
  %208 = vmatprep.subr.mxu0 0.0
  %209 = vmatpush1.msra.mxu0 0.0
  %210 = vmatprep.subr.mxu0 0.0
  %211 = vmatpush1.msra.mxu0 0.0
  %212 = vmatprep.subr.mxu0 0.0
  %213 = vmatpush1.msra.mxu0 0.0
  %214 = vmatprep.subr.mxu0 0.0
  %215 = vmatpush1.msra.mxu0 0.0
  %216 = vmatprep.subr.mxu0 0.0
  %217 = vmatpush1.msra.mxu0 0.0
  %218 = vmatprep.subr.mxu0 0.0
  %219 = vmatpush1.msra.mxu0 0.0
  %220 = vmatprep.subr.mxu0 0.0
  %221 = vmatpush1.msra.mxu0 0.0
  %222 = vmatprep.subr.mxu0 0.0
  %223 = vmatpush1.msra.mxu0 0.0
  %224 = vmatprep.subr.mxu0 0.0
  %225 = vmatpush1.msra.mxu0 0.0
  %226 = vmatprep.subr.mxu0 0.0
  %227 = vmatpush1.msra.mxu0 0.0
  %228 = vmatprep.subr.mxu0 0.0
  %229 = vmatpush1.msra.mxu0 0.0
  %230 = vmatprep.subr.mxu0 0.0
  %231 = vmatpush1.msra.mxu0 0.0
  %232 = vmatprep.subr.mxu0 0.0
  %233 = vmatpush1.msra.mxu0 0.0
  %234 = vmatprep.subr.mxu0 0.0
  %235 = vmatpush1.msra.mxu0 0.0
  %236 = vmatprep.subr.mxu0 0.0
  %237 = vmatpush1.msra.mxu0 0.0
  %238 = vmatprep.mubr.f32.mxu0 0.0
  %239 = vmatmul.mubr.f32.gmra.mrb[0].mxu0 %v63
  %v240 = vpop.f32.mrb[0].mxu0
  %v241 = vadd.f32 %v59, %v240
  %v242 = vpop.f32.mrb[0].mxu0
  %243 = vmatprep.mubr.f32.mxu0 0.0
  %244 = vmatmul.mubr.f32.gmra.mrb[0].mxu0 %v66
  %v245 = vpop.f32.mrb[0].mxu0
  %v246 = vadd.f32 %v59, %v245
  %v247 = vpop.f32.mrb[0].mxu0
  %248 = vmatprep.mubr.f32.mxu0 0.0
  %249 = vmatmul.mubr.f32.gmra.mrb[0].mxu0 %v69
  %v250 = vpop.f32.mrb[0].mxu0
  %v251 = vadd.f32 %v59, %v250
  %v252 = vpop.f32.mrb[0].mxu0
  %253 = vmatprep.mubr.f32.mxu0 0.0
  %254 = vmatmul.mubr.f32.gmra.mrb[0].mxu0 %v72
  %v255 = vpop.f32.mrb[0].mxu0
  %v256 = vadd.f32 %v59, %v255
  %v257 = vpop.f32.mrb[0].mxu0
  %258 = vmatprep.mubr.f32.mxu0 0.0
  %259 = vmatmul.mubr.f32.gmra.mrb[0].mxu0 %v75
  %v260 = vpop.f32.mrb[0].mxu0
  %v261 = vadd.f32 %v59, %v260
  %v262 = vpop.f32.mrb[0].mxu0
  %263 = vmatprep.mubr.f32.mxu0 0.0
  %264 = vmatmul.mubr.f32.gmra.mrb[0].mxu0 %v78
  %v265 = vpop.f32.mrb[0].mxu0
  %v266 = vadd.f32 %v59, %v265
  %v267 = vpop.f32.mrb[0].mxu0
  %268 = vmatprep.mubr.f32.mxu0 0.0
  %269 = vmatmul.mubr.f32.gmra.mrb[0].mxu0 %v81
  %v270 = vpop.f32.mrb[0].mxu0
  %v271 = vadd.f32 %v59, %v270
  %v272 = vpop.f32.mrb[0].mxu0
  %273 = vmatprep.mubr.f32.mxu0 0.0
  %274 = vmatmul.mubr.f32.gmra.mrb[0].mxu0 %v84
  %v275 = vpop.f32.mrb[0].mxu0
  %v276 = vadd.f32 %v59, %v275
  %v277 = vpop.f32.mrb[0].mxu0
  %278 = vmatprep.mubr.f32.mxu0 0.0
  %279 = vmatmul.mubr.f32.gmra.mrb[0].mxu0 %v87
  %v280 = vpop.f32.mrb[0].mxu0
  %v281 = vadd.f32 %v59, %v280
  %v282 = vpop.f32.mrb[0].mxu0
  %283 = vmatprep.mubr.f32.mxu0 0.0
  %284 = vmatmul.mubr.f32.gmra.mrb[0].mxu0 %v90
  %v285 = vpop.f32.mrb[0].mxu0
  %v286 = vadd.f32 %v59, %v285
  %v287 = vpop.f32.mrb[0].mxu0
  %288 = vmatprep.mubr.f32.mxu0 0.0
  %289 = vmatmul.mubr.f32.gmra.mrb[0].mxu0 %v93
  %v290 = vpop.f32.mrb[0].mxu0
  %v291 = vadd.f32 %v59, %v290
  %v292 = vpop.f32.mrb[0].mxu0
  %293 = vmatprep.mubr.f32.mxu0 0.0
  %294 = vmatmul.mubr.f32.gmra.mrb[0].mxu0 %v96
  %v295 = vpop.f32.mrb[0].mxu0
  %v296 = vadd.f32 %v59, %v295
  %v297 = vpop.f32.mrb[0].mxu0
  %298 = vmatprep.mubr.f32.mxu0 0.0
  %299 = vmatmul.mubr.f32.gmra.mrb[0].mxu0 %v99
  %v300 = vpop.f32.mrb[0].mxu0
  %v301 = vadd.f32 %v59, %v300
  %v302 = vpop.f32.mrb[0].mxu0
  %303 = vmatprep.mubr.f32.mxu0 0.0
  %304 = vmatmul.mubr.f32.gmra.mrb[0].mxu0 %v102
  %v305 = vpop.f32.mrb[0].mxu0
  %v306 = vadd.f32 %v59, %v305
  %v307 = vpop.f32.mrb[0].mxu0
  %308 = vmatprep.mubr.f32.mxu0 0.0
  %309 = vmatmul.mubr.f32.gmra.mrb[0].mxu0 %v105
  %v310 = vpop.f32.mrb[0].mxu0
  %v311 = vadd.f32 %v59, %v310
  %v312 = vpop.f32.mrb[0].mxu0
  %313 = vmatprep.mubr.f32.mxu0 0.0
  %314 = vmatmul.mubr.f32.gmra.mrb[0].mxu0 %v108
  %v315 = vpop.f32.mrb[0].mxu0
  %v316 = vadd.f32 %v59, %v315
  %v317 = vpop.f32.mrb[0].mxu0
  %318 = vmatprep.mubr.f32.mxu0 0.0
  %319 = vmatmul.mubr.f32.gmra.mrb[0].mxu0 %v111
  %v320 = vpop.f32.mrb[0].mxu0
  %v321 = vadd.f32 %v59, %v320
  %v322 = vpop.f32.mrb[0].mxu0
  %323 = vmatprep.mubr.f32.mxu0 0.0
  %324 = vmatmul.mubr.f32.gmra.mrb[0].mxu0 %v114
  %v325 = vpop.f32.mrb[0].mxu0
  %v326 = vadd.f32 %v59, %v325
  %v327 = vpop.f32.mrb[0].mxu0
  %328 = vmatprep.mubr.f32.mxu0 0.0
  %329 = vmatmul.mubr.f32.gmra.mrb[0].mxu0 %v117
  %v330 = vpop.f32.mrb[0].mxu0
  %v331 = vadd.f32 %v59, %v330
  %v332 = vpop.f32.mrb[0].mxu0
  %333 = vmatprep.mubr.f32.mxu0 0.0
  %334 = vmatmul.mubr.f32.gmra.mrb[0].mxu0 %v120
  %v335 = vpop.f32.mrb[0].mxu0
  %v336 = vadd.f32 %v59, %v335
  %v337 = vpop.f32.mrb[0].mxu0
  %338 = vmatprep.mubr.f32.mxu0 0.0
  %339 = vmatmul.mubr.f32.gmra.mrb[0].mxu0 %v123
  %v340 = vpop.f32.mrb[0].mxu0
  %v341 = vadd.f32 %v59, %v340
  %v342 = vpop.f32.mrb[0].mxu0
  %343 = vmatprep.mubr.f32.mxu0 0.0
  %344 = vmatmul.mubr.f32.gmra.mrb[0].mxu0 %v126
  %v345 = vpop.f32.mrb[0].mxu0
  %v346 = vadd.f32 %v59, %v345
  %v347 = vpop.f32.mrb[0].mxu0
  %348 = vmatprep.mubr.f32.mxu0 0.0
  %349 = vmatmul.mubr.f32.gmra.mrb[0].mxu0 %v129
  %v350 = vpop.f32.mrb[0].mxu0
  %v351 = vadd.f32 %v59, %v350
  %v352 = vpop.f32.mrb[0].mxu0
  %353 = vmatprep.mubr.f32.mxu0 0.0
  %354 = vmatmul.mubr.f32.gmra.mrb[0].mxu0 %v132
  %v355 = vpop.f32.mrb[0].mxu0
  %v356 = vadd.f32 %v59, %v355
  %v357 = vpop.f32.mrb[0].mxu0
  %358 = vmatprep.mubr.f32.mxu0 0.0
  %359 = vmatmul.mubr.f32.gmra.mrb[0].mxu0 %v135
  %v360 = vpop.f32.mrb[0].mxu0
  %v361 = vadd.f32 %v59, %v360
  %v362 = vpop.f32.mrb[0].mxu0
  %363 = vmatprep.mubr.f32.mxu0 0.0
  %364 = vmatmul.mubr.f32.gmra.mrb[0].mxu0 %v138
  %v365 = vpop.f32.mrb[0].mxu0
  %v366 = vadd.f32 %v59, %v365
  %v367 = vpop.f32.mrb[0].mxu0
  %368 = vmatprep.mubr.f32.mxu0 0.0
  %369 = vmatmul.mubr.f32.gmra.mrb[0].mxu0 %v141
  %v370 = vpop.f32.mrb[0].mxu0
  %v371 = vadd.f32 %v59, %v370
  %v372 = vpop.f32.mrb[0].mxu0
  %373 = vmatprep.mubr.f32.mxu0 0.0
  %374 = vmatmul.mubr.f32.gmra.mrb[0].mxu0 %v144
  %v375 = vpop.f32.mrb[0].mxu0
  %v376 = vadd.f32 %v59, %v375
  %v377 = vpop.f32.mrb[0].mxu0
  %378 = vmatprep.mubr.f32.mxu0 0.0
  %379 = vmatmul.mubr.f32.gmra.mrb[0].mxu0 %v147
  %v380 = vpop.f32.mrb[0].mxu0
  %v381 = vadd.f32 %v59, %v380
  %v382 = vpop.f32.mrb[0].mxu0
  %383 = vmatprep.mubr.f32.mxu0 0.0
  %384 = vmatmul.mubr.f32.gmra.mrb[0].mxu0 %v150
  %v385 = vpop.f32.mrb[0].mxu0
  %v386 = vadd.f32 %v59, %v385
  %v387 = vpop.f32.mrb[0].mxu0
  %388 = vmatprep.mubr.f32.mxu0 0.0
  %389 = vmatmul.mubr.f32.gmra.mrb[0].mxu0 %v153
  %v390 = vpop.f32.mrb[0].mxu0
  %v391 = vadd.f32 %v59, %v390
  %v392 = vpop.f32.mrb[0].mxu0
  %393 = vmatprep.mubr.f32.mxu0 0.0
  %394 = vmatmul.mubr.f32.gmra.mrb[0].mxu0 %v156
  %v395 = vpop.f32.mrb[0].mxu0
  %v396 = vadd.f32 %v59, %v395
  %v397 = vpop.f32.mrb[0].mxu0
  %398 = vmatprep.mubr.f32.mxu0 0.0
  %399 = vmatmul.mubr.f32.gmra.mrb[0].mxu0 %v159
  %v400 = vpop.f32.mrb[0].mxu0
  %v401 = vadd.f32 %v59, %v400
  %v402 = vpop.f32.mrb[0].mxu0
  %403 = vmatprep.mubr.f32.mxu0 0.0
  %404 = vmatmul.mubr.f32.gmra.mrb[0].mxu0 %v162
  %v405 = vpop.f32.mrb[0].mxu0
  %v406 = vadd.f32 %v59, %v405
  %v407 = vpop.f32.mrb[0].mxu0
  %408 = vmatprep.mubr.f32.mxu0 0.0
  %409 = vmatmul.mubr.f32.gmra.mrb[0].mxu0 %v165
  %v410 = vpop.f32.mrb[0].mxu0
  %v411 = vadd.f32 %v59, %v410
  %v412 = vpop.f32.mrb[0].mxu0
  %413 = vmatprep.mubr.f32.mxu0 0.0
  %414 = vmatmul.mubr.f32.gmra.mrb[0].mxu0 %v168
  %v415 = vpop.f32.mrb[0].mxu0
  %v416 = vadd.f32 %v59, %v415
  %v417 = vpop.f32.mrb[0].mxu0
  %418 = vdwg.mxu0
  %v419 = vmax.f32 %v241, 0.0
  %v420 = vmax.f32 %v246, 0.0
  %v421 = vmax.f32 %v251, 0.0
  %v422 = vmax.f32 %v256, 0.0
  %v423 = vmax.f32 %v261, 0.0
  %v424 = vmax.f32 %v266, 0.0
  %v425 = vmax.f32 %v271, 0.0
  %v426 = vmax.f32 %v276, 0.0
  %v427 = vmax.f32 %v281, 0.0
  %v428 = vmax.f32 %v286, 0.0
  %v429 = vmax.f32 %v291, 0.0
  %v430 = vmax.f32 %v296, 0.0
  %v431 = vmax.f32 %v301, 0.0
  %v432 = vmax.f32 %v306, 0.0
  %v433 = vmax.f32 %v311, 0.0
  %v434 = vmax.f32 %v316, 0.0
  %v435 = vmax.f32 %v321, 0.0
  %v436 = vmax.f32 %v326, 0.0
  %v437 = vmax.f32 %v331, 0.0
  %v438 = vmax.f32 %v336, 0.0
  %v439 = vmax.f32 %v341, 0.0
  %v440 = vmax.f32 %v346, 0.0
  %v441 = vmax.f32 %v351, 0.0
  %v442 = vmax.f32 %v356, 0.0
  %v443 = vmax.f32 %v361, 0.0
  %v444 = vmax.f32 %v366, 0.0
  %v445 = vmax.f32 %v371, 0.0
  %v446 = vmax.f32 %v376, 0.0
  %v447 = vmax.f32 %v381, 0.0
  %v448 = vmax.f32 %v386, 0.0
  %v449 = vmax.f32 %v391, 0.0
  %v450 = vmax.f32 %v396, 0.0
  %v451 = vmax.f32 %v401, 0.0
  %v452 = vmax.f32 %v406, 0.0
  %v453 = vmax.f32 %v411, 0.0
  %v454 = vmax.f32 %v416, 0.0
  %s455 = scalar_lea.vmem %s0, 288
  %v456 = vld [vmem:[%s455] sm:$0xff]
  %v457 = vld [vmem:[%s455 + $0x8] sm:$0xff]
  %v458 = vld [vmem:[%s455 + $0x10] sm:$0xff]
  %v459 = vld [vmem:[%s455 + $0x18] sm:$0xff]
  %v460 = vld [vmem:[%s455 + $0x20] sm:$0xff]
  %v461 = vld [vmem:[%s455 + $0x28] sm:$0xff]
  %v462 = vld [vmem:[%s455 + $0x30] sm:$0xff]
  %v463 = vld [vmem:[%s455 + $0x38] sm:$0xff]
  %v464 = vld [vmem:[%s455 + $0x40] sm:$0xff]
  %v465 = vld [vmem:[%s455 + $0x48] sm:$0xff]
  %v466 = vld [vmem:[%s455 + $0x50] sm:$0xff]
  %v467 = vld [vmem:[%s455 + $0x58] sm:$0xff]
  %v468 = vld [vmem:[%s455 + $0x60] sm:$0xff]
  %v469 = vld [vmem:[%s455 + $0x68] sm:$0xff]
  %v470 = vld [vmem:[%s455 + $0x70] sm:$0xff]
  %v471 = vld [vmem:[%s455 + $0x78] sm:$0xff]
  %v472 = vld [vmem:[%s455 + $0x80] sm:$0xff]
  %v473 = vld [vmem:[%s455 + $0x88] sm:$0xff]
  %v474 = vld [vmem:[%s455 + $0x90] sm:$0xff]
  %v475 = vld [vmem:[%s455 + $0x98] sm:$0xff]
  %v476 = vld [vmem:[%s455 + $0xa0] sm:$0xff]
  %v477 = vld [vmem:[%s455 + $0xa8] sm:$0xff]
  %v478 = vld [vmem:[%s455 + $0xb0] sm:$0xff]
  %v479 = vld [vmem:[%s455 + $0xb8] sm:$0xff]
  %v480 = vld [vmem:[%s455 + $0xc0] sm:$0xff]
  %v481 = vld [vmem:[%s455 + $0xc8] sm:$0xff]
  %v482 = vld [vmem:[%s455 + $0xd0] sm:$0xff]
  %v483 = vld [vmem:[%s455 + $0xd8] sm:$0xff]
  %v484 = vld [vmem:[%s455 + $0xe0] sm:$0xff]
  %v485 = vld [vmem:[%s455 + $0xe8] sm:$0xff]
  %v486 = vld [vmem:[%s455 + $0xf0] sm:$0xff]
  %v487 = vld [vmem:[%s455 + $0xf8] sm:$0xff]
  %v488 = vld [vmem:[%s455 + $0x100] sm:$0xff]
  %v489 = vld [vmem:[%s455 + $0x108] sm:$0xff]
  %v490 = vld [vmem:[%s455 + $0x110] sm:$0xff]
  %v491 = vld [vmem:[%s455 + $0x118] sm:$0xff]
  %v493 = vsel %vm61, %v456, 0
  %v496 = vsel %vm61, %v457, 0
  %v499 = vsel %vm61, %v458, 0
  %v502 = vsel %vm61, %v459, 0
  %v505 = vsel %vm61, %v460, 0
  %v508 = vsel %vm61, %v461, 0
  %v511 = vsel %vm61, %v462, 0
  %v514 = vsel %vm61, %v463, 0
  %v517 = vsel %vm61, %v464, 0
  %v520 = vsel %vm61, %v465, 0
  %v523 = vsel %vm61, %v466, 0
  %v526 = vsel %vm61, %v467, 0
  %v529 = vsel %vm61, %v468, 0
  %v532 = vsel %vm61, %v469, 0
  %v535 = vsel %vm61, %v470, 0
  %v538 = vsel %vm61, %v471, 0
  %v541 = vsel %vm61, %v472, 0
  %v544 = vsel %vm61, %v473, 0
  %v547 = vsel %vm61, %v474, 0
  %v550 = vsel %vm61, %v475, 0
  %v553 = vsel %vm61, %v476, 0
  %v556 = vsel %vm61, %v477, 0
  %v559 = vsel %vm61, %v478, 0
  %v562 = vsel %vm61, %v479, 0
  %v565 = vsel %vm61, %v480, 0
  %v568 = vsel %vm61, %v481, 0
  %v571 = vsel %vm61, %v482, 0
  %v574 = vsel %vm61, %v483, 0
  %v577 = vsel %vm61, %v484, 0
  %v580 = vsel %vm61, %v485, 0
  %v583 = vsel %vm61, %v486, 0
  %v586 = vsel %vm61, %v487, 0
  %v589 = vsel %vm61, %v488, 0
  %v592 = vsel %vm61, %v489, 0
  %v595 = vsel %vm61, %v490, 0
  %v598 = vsel %vm61, %v491, 0
  %600 = vmatprep.subr.mxu0 0.0
  %601 = vmatpush1.msra.mxu0 %v14
  %602 = vmatprep.subr.mxu0 0.0
  %603 = vmatpush1.msra.mxu0 %v15
  %604 = vmatprep.subr.mxu0 0.0
  %605 = vmatpush1.msra.mxu0 %v16
  %606 = vmatprep.subr.mxu0 0.0
  %607 = vmatpush1.msra.mxu0 %v172
  %608 = vmatprep.subr.mxu0 0.0
  %609 = vmatpush1.msra.mxu0 0.0
  %610 = vmatprep.subr.mxu0 0.0
  %611 = vmatpush1.msra.mxu0 0.0
  %612 = vmatprep.subr.mxu0 0.0
  %613 = vmatpush1.msra.mxu0 0.0
  %614 = vmatprep.subr.mxu0 0.0
  %615 = vmatpush1.msra.mxu0 0.0
  %616 = vmatprep.subr.mxu0 0.0
  %617 = vmatpush1.msra.mxu0 0.0
  %618 = vmatprep.subr.mxu0 0.0
  %619 = vmatpush1.msra.mxu0 0.0
  %620 = vmatprep.subr.mxu0 0.0
  %621 = vmatpush1.msra.mxu0 0.0
  %622 = vmatprep.subr.mxu0 0.0
  %623 = vmatpush1.msra.mxu0 0.0
  %624 = vmatprep.subr.mxu0 0.0
  %625 = vmatpush1.msra.mxu0 0.0
  %626 = vmatprep.subr.mxu0 0.0
  %627 = vmatpush1.msra.mxu0 0.0
  %628 = vmatprep.subr.mxu0 0.0
  %629 = vmatpush1.msra.mxu0 0.0
  %630 = vmatprep.subr.mxu0 0.0
  %631 = vmatpush1.msra.mxu0 0.0
  %632 = vmatprep.subr.mxu0 0.0
  %633 = vmatpush1.msra.mxu0 0.0
  %634 = vmatprep.subr.mxu0 0.0
  %635 = vmatpush1.msra.mxu0 0.0
  %636 = vmatprep.subr.mxu0 0.0
  %637 = vmatpush1.msra.mxu0 0.0
  %638 = vmatprep.subr.mxu0 0.0
  %639 = vmatpush1.msra.mxu0 0.0
  %640 = vmatprep.subr.mxu0 0.0
  %641 = vmatpush1.msra.mxu0 0.0
  %642 = vmatprep.subr.mxu0 0.0
  %643 = vmatpush1.msra.mxu0 0.0
  %644 = vmatprep.subr.mxu0 0.0
  %645 = vmatpush1.msra.mxu0 0.0
  %646 = vmatprep.subr.mxu0 0.0
  %647 = vmatpush1.msra.mxu0 0.0
  %648 = vmatprep.subr.mxu0 0.0
  %649 = vmatpush1.msra.mxu0 0.0
  %650 = vmatprep.subr.mxu0 0.0
  %651 = vmatpush1.msra.mxu0 0.0
  %652 = vmatprep.subr.mxu0 0.0
  %653 = vmatpush1.msra.mxu0 0.0
  %654 = vmatprep.subr.mxu0 0.0
  %655 = vmatpush1.msra.mxu0 0.0
  %656 = vmatprep.subr.mxu0 0.0
  %657 = vmatpush1.msra.mxu0 0.0
  %658 = vmatprep.subr.mxu0 0.0
  %659 = vmatpush1.msra.mxu0 0.0
  %660 = vmatprep.subr.mxu0 0.0
  %661 = vmatpush1.msra.mxu0 0.0
  %662 = vmatprep.subr.mxu0 0.0
  %663 = vmatpush1.msra.mxu0 0.0
  %664 = vmatprep.mubr.f32.mxu0 0.0
  %665 = vmatmul.mubr.f32.gmra.mrb[0].mxu0 %v493
  %v666 = vpop.f32.mrb[0].mxu0
  %v667 = vadd.f32 %v59, %v666
  %v668 = vpop.f32.mrb[0].mxu0
  %669 = vmatprep.mubr.f32.mxu0 0.0
  %670 = vmatmul.mubr.f32.gmra.mrb[0].mxu0 %v496
  %v671 = vpop.f32.mrb[0].mxu0
  %v672 = vadd.f32 %v59, %v671
  %v673 = vpop.f32.mrb[0].mxu0
  %674 = vmatprep.mubr.f32.mxu0 0.0
  %675 = vmatmul.mubr.f32.gmra.mrb[0].mxu0 %v499
  %v676 = vpop.f32.mrb[0].mxu0
  %v677 = vadd.f32 %v59, %v676
  %v678 = vpop.f32.mrb[0].mxu0
  %679 = vmatprep.mubr.f32.mxu0 0.0
  %680 = vmatmul.mubr.f32.gmra.mrb[0].mxu0 %v502
  %v681 = vpop.f32.mrb[0].mxu0
  %v682 = vadd.f32 %v59, %v681
  %v683 = vpop.f32.mrb[0].mxu0
  %684 = vmatprep.mubr.f32.mxu0 0.0
  %685 = vmatmul.mubr.f32.gmra.mrb[0].mxu0 %v505
  %v686 = vpop.f32.mrb[0].mxu0
  %v687 = vadd.f32 %v59, %v686
  %v688 = vpop.f32.mrb[0].mxu0
  %689 = vmatprep.mubr.f32.mxu0 0.0
  %690 = vmatmul.mubr.f32.gmra.mrb[0].mxu0 %v508
  %v691 = vpop.f32.mrb[0].mxu0
  %v692 = vadd.f32 %v59, %v691
  %v693 = vpop.f32.mrb[0].mxu0
  %694 = vmatprep.mubr.f32.mxu0 0.0
  %695 = vmatmul.mubr.f32.gmra.mrb[0].mxu0 %v511
  %v696 = vpop.f32.mrb[0].mxu0
  %v697 = vadd.f32 %v59, %v696
  %v698 = vpop.f32.mrb[0].mxu0
  %699 = vmatprep.mubr.f32.mxu0 0.0
  %700 = vmatmul.mubr.f32.gmra.mrb[0].mxu0 %v514
  %v701 = vpop.f32.mrb[0].mxu0
  %v702 = vadd.f32 %v59, %v701
  %v703 = vpop.f32.mrb[0].mxu0
  %704 = vmatprep.mubr.f32.mxu0 0.0
  %705 = vmatmul.mubr.f32.gmra.mrb[0].mxu0 %v517
  %v706 = vpop.f32.mrb[0].mxu0
  %v707 = vadd.f32 %v59, %v706
  %v708 = vpop.f32.mrb[0].mxu0
  %709 = vmatprep.mubr.f32.mxu0 0.0
  %710 = vmatmul.mubr.f32.gmra.mrb[0].mxu0 %v520
  %v711 = vpop.f32.mrb[0].mxu0
  %v712 = vadd.f32 %v59, %v711
  %v713 = vpop.f32.mrb[0].mxu0
  %714 = vmatprep.mubr.f32.mxu0 0.0
  %715 = vmatmul.mubr.f32.gmra.mrb[0].mxu0 %v523
  %v716 = vpop.f32.mrb[0].mxu0
  %v717 = vadd.f32 %v59, %v716
  %v718 = vpop.f32.mrb[0].mxu0
  %719 = vmatprep.mubr.f32.mxu0 0.0
  %720 = vmatmul.mubr.f32.gmra.mrb[0].mxu0 %v526
  %v721 = vpop.f32.mrb[0].mxu0
  %v722 = vadd.f32 %v59, %v721
  %v723 = vpop.f32.mrb[0].mxu0
  %724 = vmatprep.mubr.f32.mxu0 0.0
  %725 = vmatmul.mubr.f32.gmra.mrb[0].mxu0 %v529
  %v726 = vpop.f32.mrb[0].mxu0
  %v727 = vadd.f32 %v59, %v726
  %v728 = vpop.f32.mrb[0].mxu0
  %729 = vmatprep.mubr.f32.mxu0 0.0
  %730 = vmatmul.mubr.f32.gmra.mrb[0].mxu0 %v532
  %v731 = vpop.f32.mrb[0].mxu0
  %v732 = vadd.f32 %v59, %v731
  %v733 = vpop.f32.mrb[0].mxu0
  %734 = vmatprep.mubr.f32.mxu0 0.0
  %735 = vmatmul.mubr.f32.gmra.mrb[0].mxu0 %v535
  %v736 = vpop.f32.mrb[0].mxu0
  %v737 = vadd.f32 %v59, %v736
  %v738 = vpop.f32.mrb[0].mxu0
  %739 = vmatprep.mubr.f32.mxu0 0.0
  %740 = vmatmul.mubr.f32.gmra.mrb[0].mxu0 %v538
  %v741 = vpop.f32.mrb[0].mxu0
  %v742 = vadd.f32 %v59, %v741
  %v743 = vpop.f32.mrb[0].mxu0
  %744 = vmatprep.mubr.f32.mxu0 0.0
  %745 = vmatmul.mubr.f32.gmra.mrb[0].mxu0 %v541
  %v746 = vpop.f32.mrb[0].mxu0
  %v747 = vadd.f32 %v59, %v746
  %v748 = vpop.f32.mrb[0].mxu0
  %749 = vmatprep.mubr.f32.mxu0 0.0
  %750 = vmatmul.mubr.f32.gmra.mrb[0].mxu0 %v544
  %v751 = vpop.f32.mrb[0].mxu0
  %v752 = vadd.f32 %v59, %v751
  %v753 = vpop.f32.mrb[0].mxu0
  %754 = vmatprep.mubr.f32.mxu0 0.0
  %755 = vmatmul.mubr.f32.gmra.mrb[0].mxu0 %v547
  %v756 = vpop.f32.mrb[0].mxu0
  %v757 = vadd.f32 %v59, %v756
  %v758 = vpop.f32.mrb[0].mxu0
  %759 = vmatprep.mubr.f32.mxu0 0.0
  %760 = vmatmul.mubr.f32.gmra.mrb[0].mxu0 %v550
  %v761 = vpop.f32.mrb[0].mxu0
  %v762 = vadd.f32 %v59, %v761
  %v763 = vpop.f32.mrb[0].mxu0
  %764 = vmatprep.mubr.f32.mxu0 0.0
  %765 = vmatmul.mubr.f32.gmra.mrb[0].mxu0 %v553
  %v766 = vpop.f32.mrb[0].mxu0
  %v767 = vadd.f32 %v59, %v766
  %v768 = vpop.f32.mrb[0].mxu0
  %769 = vmatprep.mubr.f32.mxu0 0.0
  %770 = vmatmul.mubr.f32.gmra.mrb[0].mxu0 %v556
  %v771 = vpop.f32.mrb[0].mxu0
  %v772 = vadd.f32 %v59, %v771
  %v773 = vpop.f32.mrb[0].mxu0
  %774 = vmatprep.mubr.f32.mxu0 0.0
  %775 = vmatmul.mubr.f32.gmra.mrb[0].mxu0 %v559
  %v776 = vpop.f32.mrb[0].mxu0
  %v777 = vadd.f32 %v59, %v776
  %v778 = vpop.f32.mrb[0].mxu0
  %779 = vmatprep.mubr.f32.mxu0 0.0
  %780 = vmatmul.mubr.f32.gmra.mrb[0].mxu0 %v562
  %v781 = vpop.f32.mrb[0].mxu0
  %v782 = vadd.f32 %v59, %v781
  %v783 = vpop.f32.mrb[0].mxu0
  %784 = vmatprep.mubr.f32.mxu0 0.0
  %785 = vmatmul.mubr.f32.gmra.mrb[0].mxu0 %v565
  %v786 = vpop.f32.mrb[0].mxu0
  %v787 = vadd.f32 %v59, %v786
  %v788 = vpop.f32.mrb[0].mxu0
  %789 = vmatprep.mubr.f32.mxu0 0.0
  %790 = vmatmul.mubr.f32.gmra.mrb[0].mxu0 %v568
  %v791 = vpop.f32.mrb[0].mxu0
  %v792 = vadd.f32 %v59, %v791
  %v793 = vpop.f32.mrb[0].mxu0
  %794 = vmatprep.mubr.f32.mxu0 0.0
  %795 = vmatmul.mubr.f32.gmra.mrb[0].mxu0 %v571
  %v796 = vpop.f32.mrb[0].mxu0
  %v797 = vadd.f32 %v59, %v796
  %v798 = vpop.f32.mrb[0].mxu0
  %799 = vmatprep.mubr.f32.mxu0 0.0
  %800 = vmatmul.mubr.f32.gmra.mrb[0].mxu0 %v574
  %v801 = vpop.f32.mrb[0].mxu0
  %v802 = vadd.f32 %v59, %v801
  %v803 = vpop.f32.mrb[0].mxu0
  %804 = vmatprep.mubr.f32.mxu0 0.0
  %805 = vmatmul.mubr.f32.gmra.mrb[0].mxu0 %v577
  %v806 = vpop.f32.mrb[0].mxu0
  %v807 = vadd.f32 %v59, %v806
  %v808 = vpop.f32.mrb[0].mxu0
  %809 = vmatprep.mubr.f32.mxu0 0.0
  %810 = vmatmul.mubr.f32.gmra.mrb[0].mxu0 %v580
  %v811 = vpop.f32.mrb[0].mxu0
  %v812 = vadd.f32 %v59, %v811
  %v813 = vpop.f32.mrb[0].mxu0
  %814 = vmatprep.mubr.f32.mxu0 0.0
  %815 = vmatmul.mubr.f32.gmra.mrb[0].mxu0 %v583
  %v816 = vpop.f32.mrb[0].mxu0
  %v817 = vadd.f32 %v59, %v816
  %v818 = vpop.f32.mrb[0].mxu0
  %819 = vmatprep.mubr.f32.mxu0 0.0
  %820 = vmatmul.mubr.f32.gmra.mrb[0].mxu0 %v586
  %v821 = vpop.f32.mrb[0].mxu0
  %v822 = vadd.f32 %v59, %v821
  %v823 = vpop.f32.mrb[0].mxu0
  %824 = vmatprep.mubr.f32.mxu0 0.0
  %825 = vmatmul.mubr.f32.gmra.mrb[0].mxu0 %v589
  %v826 = vpop.f32.mrb[0].mxu0
  %v827 = vadd.f32 %v59, %v826
  %v828 = vpop.f32.mrb[0].mxu0
  %829 = vmatprep.mubr.f32.mxu0 0.0
  %830 = vmatmul.mubr.f32.gmra.mrb[0].mxu0 %v592
  %v831 = vpop.f32.mrb[0].mxu0
  %v832 = vadd.f32 %v59, %v831
  %v833 = vpop.f32.mrb[0].mxu0
  %834 = vmatprep.mubr.f32.mxu0 0.0
  %835 = vmatmul.mubr.f32.gmra.mrb[0].mxu0 %v595
  %v836 = vpop.f32.mrb[0].mxu0
  %v837 = vadd.f32 %v59, %v836
  %v838 = vpop.f32.mrb[0].mxu0
  %839 = vmatprep.mubr.f32.mxu0 0.0
  %840 = vmatmul.mubr.f32.gmra.mrb[0].mxu0 %v598
  %v841 = vpop.f32.mrb[0].mxu0
  %v842 = vadd.f32 %v59, %v841
  %v843 = vpop.f32.mrb[0].mxu0
  %844 = vdwg.mxu0
  %v845 = vmax.f32 %v667, 0.0
  %v846 = vmax.f32 %v672, 0.0
  %v847 = vmax.f32 %v677, 0.0
  %v848 = vmax.f32 %v682, 0.0
  %v849 = vmax.f32 %v687, 0.0
  %v850 = vmax.f32 %v692, 0.0
  %v851 = vmax.f32 %v697, 0.0
  %v852 = vmax.f32 %v702, 0.0
  %v853 = vmax.f32 %v707, 0.0
  %v854 = vmax.f32 %v712, 0.0
  %v855 = vmax.f32 %v717, 0.0
  %v856 = vmax.f32 %v722, 0.0
  %v857 = vmax.f32 %v727, 0.0
  %v858 = vmax.f32 %v732, 0.0
  %v859 = vmax.f32 %v737, 0.0
  %v860 = vmax.f32 %v742, 0.0
  %v861 = vmax.f32 %v747, 0.0
  %v862 = vmax.f32 %v752, 0.0
  %v863 = vmax.f32 %v757, 0.0
  %v864 = vmax.f32 %v762, 0.0
  %v865 = vmax.f32 %v767, 0.0
  %v866 = vmax.f32 %v772, 0.0
  %v867 = vmax.f32 %v777, 0.0
  %v868 = vmax.f32 %v782, 0.0
  %v869 = vmax.f32 %v787, 0.0
  %v870 = vmax.f32 %v792, 0.0
  %v871 = vmax.f32 %v797, 0.0
  %v872 = vmax.f32 %v802, 0.0
  %v873 = vmax.f32 %v807, 0.0
  %v874 = vmax.f32 %v812, 0.0
  %v875 = vmax.f32 %v817, 0.0
  %v876 = vmax.f32 %v822, 0.0
  %v877 = vmax.f32 %v827, 0.0
  %v878 = vmax.f32 %v832, 0.0
  %v879 = vmax.f32 %v837, 0.0
  %v880 = vmax.f32 %v842, 0.0
  %v881 = vmax.f32 %v419, %v845
  %v882 = vmax.f32 %v420, %v846
  %v883 = vmax.f32 %v421, %v847
  %v884 = vmax.f32 %v422, %v848
  %v885 = vmax.f32 %v423, %v849
  %v886 = vmax.f32 %v424, %v850
  %v887 = vmax.f32 %v425, %v851
  %v888 = vmax.f32 %v426, %v852
  %v889 = vmax.f32 %v427, %v853
  %v890 = vmax.f32 %v428, %v854
  %v891 = vmax.f32 %v429, %v855
  %v892 = vmax.f32 %v430, %v856
  %v893 = vmax.f32 %v431, %v857
  %v894 = vmax.f32 %v432, %v858
  %v895 = vmax.f32 %v433, %v859
  %v896 = vmax.f32 %v434, %v860
  %v897 = vmax.f32 %v435, %v861
  %v898 = vmax.f32 %v436, %v862
  %v899 = vmax.f32 %v437, %v863
  %v900 = vmax.f32 %v438, %v864
  %v901 = vmax.f32 %v439, %v865
  %v902 = vmax.f32 %v440, %v866
  %v903 = vmax.f32 %v441, %v867
  %v904 = vmax.f32 %v442, %v868
  %v905 = vmax.f32 %v443, %v869
  %v906 = vmax.f32 %v444, %v870
  %v907 = vmax.f32 %v445, %v871
  %v908 = vmax.f32 %v446, %v872
  %v909 = vmax.f32 %v447, %v873
  %v910 = vmax.f32 %v448, %v874
  %v911 = vmax.f32 %v449, %v875
  %v912 = vmax.f32 %v450, %v876
  %v913 = vmax.f32 %v451, %v877
  %v914 = vmax.f32 %v452, %v878
  %v915 = vmax.f32 %v453, %v879
  %v916 = vmax.f32 %v454, %v880
  %s917 = scalar_lea.vmem %s0, 576
  %v918 = vld [vmem:[%s917] sm:$0xff]
  %v919 = vld [vmem:[%s917 + $0x8] sm:$0xff]
  %v920 = vld [vmem:[%s917 + $0x10] sm:$0xff]
  %v921 = vld [vmem:[%s917 + $0x18] sm:$0xff]
  %v922 = vld [vmem:[%s917 + $0x20] sm:$0xff]
  %v923 = vld [vmem:[%s917 + $0x28] sm:$0xff]
  %v924 = vld [vmem:[%s917 + $0x30] sm:$0xff]
  %v925 = vld [vmem:[%s917 + $0x38] sm:$0xff]
  %v926 = vld [vmem:[%s917 + $0x40] sm:$0xff]
  %v927 = vld [vmem:[%s917 + $0x48] sm:$0xff]
  %v928 = vld [vmem:[%s917 + $0x50] sm:$0xff]
  %v929 = vld [vmem:[%s917 + $0x58] sm:$0xff]
  %v930 = vld [vmem:[%s917 + $0x60] sm:$0xff]
  %v931 = vld [vmem:[%s917 + $0x68] sm:$0xff]
  %v932 = vld [vmem:[%s917 + $0x70] sm:$0xff]
  %v933 = vld [vmem:[%s917 + $0x78] sm:$0xff]
  %v934 = vld [vmem:[%s917 + $0x80] sm:$0xff]
  %v935 = vld [vmem:[%s917 + $0x88] sm:$0xff]
  %v936 = vld [vmem:[%s917 + $0x90] sm:$0xff]
  %v937 = vld [vmem:[%s917 + $0x98] sm:$0xff]
  %v938 = vld [vmem:[%s917 + $0xa0] sm:$0xff]
  %v939 = vld [vmem:[%s917 + $0xa8] sm:$0xff]
  %v940 = vld [vmem:[%s917 + $0xb0] sm:$0xff]
  %v941 = vld [vmem:[%s917 + $0xb8] sm:$0xff]
  %v942 = vld [vmem:[%s917 + $0xc0] sm:$0xff]
  %v943 = vld [vmem:[%s917 + $0xc8] sm:$0xff]
  %v944 = vld [vmem:[%s917 + $0xd0] sm:$0xff]
  %v945 = vld [vmem:[%s917 + $0xd8] sm:$0xff]
  %v946 = vld [vmem:[%s917 + $0xe0] sm:$0xff]
  %v947 = vld [vmem:[%s917 + $0xe8] sm:$0xff]
  %v948 = vld [vmem:[%s917 + $0xf0] sm:$0xff]
  %v949 = vld [vmem:[%s917 + $0xf8] sm:$0xff]
  %v950 = vld [vmem:[%s917 + $0x100] sm:$0xff]
  %v951 = vld [vmem:[%s917 + $0x108] sm:$0xff]
  %v952 = vld [vmem:[%s917 + $0x110] sm:$0xff]
  %v953 = vld [vmem:[%s917 + $0x118] sm:$0xff]
  %v955 = vsel %vm61, %v918, 0
  %v958 = vsel %vm61, %v919, 0
  %v961 = vsel %vm61, %v920, 0
  %v964 = vsel %vm61, %v921, 0
  %v967 = vsel %vm61, %v922, 0
  %v970 = vsel %vm61, %v923, 0
  %v973 = vsel %vm61, %v924, 0
  %v976 = vsel %vm61, %v925, 0
  %v979 = vsel %vm61, %v926, 0
  %v982 = vsel %vm61, %v927, 0
  %v985 = vsel %vm61, %v928, 0
  %v988 = vsel %vm61, %v929, 0
  %v991 = vsel %vm61, %v930, 0
  %v994 = vsel %vm61, %v931, 0
  %v997 = vsel %vm61, %v932, 0
  %v1000 = vsel %vm61, %v933, 0
  %v1003 = vsel %vm61, %v934, 0
  %v1006 = vsel %vm61, %v935, 0
  %v1009 = vsel %vm61, %v936, 0
  %v1012 = vsel %vm61, %v937, 0
  %v1015 = vsel %vm61, %v938, 0
  %v1018 = vsel %vm61, %v939, 0
  %v1021 = vsel %vm61, %v940, 0
  %v1024 = vsel %vm61, %v941, 0
  %v1027 = vsel %vm61, %v942, 0
  %v1030 = vsel %vm61, %v943, 0
  %v1033 = vsel %vm61, %v944, 0
  %v1036 = vsel %vm61, %v945, 0
  %v1039 = vsel %vm61, %v946, 0
  %v1042 = vsel %vm61, %v947, 0
  %v1045 = vsel %vm61, %v948, 0
  %v1048 = vsel %vm61, %v949, 0
  %v1051 = vsel %vm61, %v950, 0
  %v1054 = vsel %vm61, %v951, 0
  %v1057 = vsel %vm61, %v952, 0
  %v1060 = vsel %vm61, %v953, 0
  %1062 = vmatprep.subr.mxu0 0.0
  %1063 = vmatpush1.msra.mxu0 %v14
  %1064 = vmatprep.subr.mxu0 0.0
  %1065 = vmatpush1.msra.mxu0 %v15
  %1066 = vmatprep.subr.mxu0 0.0
  %1067 = vmatpush1.msra.mxu0 %v16
  %1068 = vmatprep.subr.mxu0 0.0
  %1069 = vmatpush1.msra.mxu0 %v172
  %1070 = vmatprep.subr.mxu0 0.0
  %1071 = vmatpush1.msra.mxu0 0.0
  %1072 = vmatprep.subr.mxu0 0.0
  %1073 = vmatpush1.msra.mxu0 0.0
  %1074 = vmatprep.subr.mxu0 0.0
  %1075 = vmatpush1.msra.mxu0 0.0
  %1076 = vmatprep.subr.mxu0 0.0
  %1077 = vmatpush1.msra.mxu0 0.0
  %1078 = vmatprep.subr.mxu0 0.0
  %1079 = vmatpush1.msra.mxu0 0.0
  %1080 = vmatprep.subr.mxu0 0.0
  %1081 = vmatpush1.msra.mxu0 0.0
  %1082 = vmatprep.subr.mxu0 0.0
  %1083 = vmatpush1.msra.mxu0 0.0
  %1084 = vmatprep.subr.mxu0 0.0
  %1085 = vmatpush1.msra.mxu0 0.0
  %1086 = vmatprep.subr.mxu0 0.0
  %1087 = vmatpush1.msra.mxu0 0.0
  %1088 = vmatprep.subr.mxu0 0.0
  %1089 = vmatpush1.msra.mxu0 0.0
  %1090 = vmatprep.subr.mxu0 0.0
  %1091 = vmatpush1.msra.mxu0 0.0
  %1092 = vmatprep.subr.mxu0 0.0
  %1093 = vmatpush1.msra.mxu0 0.0
  %1094 = vmatprep.subr.mxu0 0.0
  %1095 = vmatpush1.msra.mxu0 0.0
  %1096 = vmatprep.subr.mxu0 0.0
  %1097 = vmatpush1.msra.mxu0 0.0
  %1098 = vmatprep.subr.mxu0 0.0
  %1099 = vmatpush1.msra.mxu0 0.0
  %1100 = vmatprep.subr.mxu0 0.0
  %1101 = vmatpush1.msra.mxu0 0.0
  %1102 = vmatprep.subr.mxu0 0.0
  %1103 = vmatpush1.msra.mxu0 0.0
  %1104 = vmatprep.subr.mxu0 0.0
  %1105 = vmatpush1.msra.mxu0 0.0
  %1106 = vmatprep.subr.mxu0 0.0
  %1107 = vmatpush1.msra.mxu0 0.0
  %1108 = vmatprep.subr.mxu0 0.0
  %1109 = vmatpush1.msra.mxu0 0.0
  %1110 = vmatprep.subr.mxu0 0.0
  %1111 = vmatpush1.msra.mxu0 0.0
  %1112 = vmatprep.subr.mxu0 0.0
  %1113 = vmatpush1.msra.mxu0 0.0
  %1114 = vmatprep.subr.mxu0 0.0
  %1115 = vmatpush1.msra.mxu0 0.0
  %1116 = vmatprep.subr.mxu0 0.0
  %1117 = vmatpush1.msra.mxu0 0.0
  %1118 = vmatprep.subr.mxu0 0.0
  %1119 = vmatpush1.msra.mxu0 0.0
  %1120 = vmatprep.subr.mxu0 0.0
  %1121 = vmatpush1.msra.mxu0 0.0
  %1122 = vmatprep.subr.mxu0 0.0
  %1123 = vmatpush1.msra.mxu0 0.0
  %1124 = vmatprep.subr.mxu0 0.0
  %1125 = vmatpush1.msra.mxu0 0.0
  %1126 = vmatprep.mubr.f32.mxu0 0.0
  %1127 = vmatmul.mubr.f32.gmra.mrb[0].mxu0 %v955
  %v1128 = vpop.f32.mrb[0].mxu0
  %v1129 = vadd.f32 %v59, %v1128
  %v1130 = vpop.f32.mrb[0].mxu0
  %1131 = vmatprep.mubr.f32.mxu0 0.0
  %1132 = vmatmul.mubr.f32.gmra.mrb[0].mxu0 %v958
  %v1133 = vpop.f32.mrb[0].mxu0
  %v1134 = vadd.f32 %v59, %v1133
  %v1135 = vpop.f32.mrb[0].mxu0
  %1136 = vmatprep.mubr.f32.mxu0 0.0
  %1137 = vmatmul.mubr.f32.gmra.mrb[0].mxu0 %v961
  %v1138 = vpop.f32.mrb[0].mxu0
  %v1139 = vadd.f32 %v59, %v1138
  %v1140 = vpop.f32.mrb[0].mxu0
  %1141 = vmatprep.mubr.f32.mxu0 0.0
  %1142 = vmatmul.mubr.f32.gmra.mrb[0].mxu0 %v964
  %v1143 = vpop.f32.mrb[0].mxu0
  %v1144 = vadd.f32 %v59, %v1143
  %v1145 = vpop.f32.mrb[0].mxu0
  %1146 = vmatprep.mubr.f32.mxu0 0.0
  %1147 = vmatmul.mubr.f32.gmra.mrb[0].mxu0 %v967
  %v1148 = vpop.f32.mrb[0].mxu0
  %v1149 = vadd.f32 %v59, %v1148
  %v1150 = vpop.f32.mrb[0].mxu0
  %1151 = vmatprep.mubr.f32.mxu0 0.0
  %1152 = vmatmul.mubr.f32.gmra.mrb[0].mxu0 %v970
  %v1153 = vpop.f32.mrb[0].mxu0
  %v1154 = vadd.f32 %v59, %v1153
  %v1155 = vpop.f32.mrb[0].mxu0
  %1156 = vmatprep.mubr.f32.mxu0 0.0
  %1157 = vmatmul.mubr.f32.gmra.mrb[0].mxu0 %v973
  %v1158 = vpop.f32.mrb[0].mxu0
  %v1159 = vadd.f32 %v59, %v1158
  %v1160 = vpop.f32.mrb[0].mxu0
  %1161 = vmatprep.mubr.f32.mxu0 0.0
  %1162 = vmatmul.mubr.f32.gmra.mrb[0].mxu0 %v976
  %v1163 = vpop.f32.mrb[0].mxu0
  %v1164 = vadd.f32 %v59, %v1163
  %v1165 = vpop.f32.mrb[0].mxu0
  %1166 = vmatprep.mubr.f32.mxu0 0.0
  %1167 = vmatmul.mubr.f32.gmra.mrb[0].mxu0 %v979
  %v1168 = vpop.f32.mrb[0].mxu0
  %v1169 = vadd.f32 %v59, %v1168
  %v1170 = vpop.f32.mrb[0].mxu0
  %1171 = vmatprep.mubr.f32.mxu0 0.0
  %1172 = vmatmul.mubr.f32.gmra.mrb[0].mxu0 %v982
  %v1173 = vpop.f32.mrb[0].mxu0
  %v1174 = vadd.f32 %v59, %v1173
  %v1175 = vpop.f32.mrb[0].mxu0
  %1176 = vmatprep.mubr.f32.mxu0 0.0
  %1177 = vmatmul.mubr.f32.gmra.mrb[0].mxu0 %v985
  %v1178 = vpop.f32.mrb[0].mxu0
  %v1179 = vadd.f32 %v59, %v1178
  %v1180 = vpop.f32.mrb[0].mxu0
  %1181 = vmatprep.mubr.f32.mxu0 0.0
  %1182 = vmatmul.mubr.f32.gmra.mrb[0].mxu0 %v988
  %v1183 = vpop.f32.mrb[0].mxu0
  %v1184 = vadd.f32 %v59, %v1183
  %v1185 = vpop.f32.mrb[0].mxu0
  %1186 = vmatprep.mubr.f32.mxu0 0.0
  %1187 = vmatmul.mubr.f32.gmra.mrb[0].mxu0 %v991
  %v1188 = vpop.f32.mrb[0].mxu0
  %v1189 = vadd.f32 %v59, %v1188
  %v1190 = vpop.f32.mrb[0].mxu0
  %1191 = vmatprep.mubr.f32.mxu0 0.0
  %1192 = vmatmul.mubr.f32.gmra.mrb[0].mxu0 %v994
  %v1193 = vpop.f32.mrb[0].mxu0
  %v1194 = vadd.f32 %v59, %v1193
  %v1195 = vpop.f32.mrb[0].mxu0
  %1196 = vmatprep.mubr.f32.mxu0 0.0
  %1197 = vmatmul.mubr.f32.gmra.mrb[0].mxu0 %v997
  %v1198 = vpop.f32.mrb[0].mxu0
  %v1199 = vadd.f32 %v59, %v1198
  %v1200 = vpop.f32.mrb[0].mxu0
  %1201 = vmatprep.mubr.f32.mxu0 0.0
  %1202 = vmatmul.mubr.f32.gmra.mrb[0].mxu0 %v1000
  %v1203 = vpop.f32.mrb[0].mxu0
  %v1204 = vadd.f32 %v59, %v1203
  %v1205 = vpop.f32.mrb[0].mxu0
  %1206 = vmatprep.mubr.f32.mxu0 0.0
  %1207 = vmatmul.mubr.f32.gmra.mrb[0].mxu0 %v1003
  %v1208 = vpop.f32.mrb[0].mxu0
  %v1209 = vadd.f32 %v59, %v1208
  %v1210 = vpop.f32.mrb[0].mxu0
  %1211 = vmatprep.mubr.f32.mxu0 0.0
  %1212 = vmatmul.mubr.f32.gmra.mrb[0].mxu0 %v1006
  %v1213 = vpop.f32.mrb[0].mxu0
  %v1214 = vadd.f32 %v59, %v1213
  %v1215 = vpop.f32.mrb[0].mxu0
  %1216 = vmatprep.mubr.f32.mxu0 0.0
  %1217 = vmatmul.mubr.f32.gmra.mrb[0].mxu0 %v1009
  %v1218 = vpop.f32.mrb[0].mxu0
  %v1219 = vadd.f32 %v59, %v1218
  %v1220 = vpop.f32.mrb[0].mxu0
  %1221 = vmatprep.mubr.f32.mxu0 0.0
  %1222 = vmatmul.mubr.f32.gmra.mrb[0].mxu0 %v1012
  %v1223 = vpop.f32.mrb[0].mxu0
  %v1224 = vadd.f32 %v59, %v1223
  %v1225 = vpop.f32.mrb[0].mxu0
  %1226 = vmatprep.mubr.f32.mxu0 0.0
  %1227 = vmatmul.mubr.f32.gmra.mrb[0].mxu0 %v1015
  %v1228 = vpop.f32.mrb[0].mxu0
  %v1229 = vadd.f32 %v59, %v1228
  %v1230 = vpop.f32.mrb[0].mxu0
  %1231 = vmatprep.mubr.f32.mxu0 0.0
  %1232 = vmatmul.mubr.f32.gmra.mrb[0].mxu0 %v1018
  %v1233 = vpop.f32.mrb[0].mxu0
  %v1234 = vadd.f32 %v59, %v1233
  %v1235 = vpop.f32.mrb[0].mxu0
  %1236 = vmatprep.mubr.f32.mxu0 0.0
  %1237 = vmatmul.mubr.f32.gmra.mrb[0].mxu0 %v1021
  %v1238 = vpop.f32.mrb[0].mxu0
  %v1239 = vadd.f32 %v59, %v1238
  %v1240 = vpop.f32.mrb[0].mxu0
  %1241 = vmatprep.mubr.f32.mxu0 0.0
  %1242 = vmatmul.mubr.f32.gmra.mrb[0].mxu0 %v1024
  %v1243 = vpop.f32.mrb[0].mxu0
  %v1244 = vadd.f32 %v59, %v1243
  %v1245 = vpop.f32.mrb[0].mxu0
  %1246 = vmatprep.mubr.f32.mxu0 0.0
  %1247 = vmatmul.mubr.f32.gmra.mrb[0].mxu0 %v1027
  %v1248 = vpop.f32.mrb[0].mxu0
  %v1249 = vadd.f32 %v59, %v1248
  %v1250 = vpop.f32.mrb[0].mxu0
  %1251 = vmatprep.mubr.f32.mxu0 0.0
  %1252 = vmatmul.mubr.f32.gmra.mrb[0].mxu0 %v1030
  %v1253 = vpop.f32.mrb[0].mxu0
  %v1254 = vadd.f32 %v59, %v1253
  %v1255 = vpop.f32.mrb[0].mxu0
  %1256 = vmatprep.mubr.f32.mxu0 0.0
  %1257 = vmatmul.mubr.f32.gmra.mrb[0].mxu0 %v1033
  %v1258 = vpop.f32.mrb[0].mxu0
  %v1259 = vadd.f32 %v59, %v1258
  %v1260 = vpop.f32.mrb[0].mxu0
  %1261 = vmatprep.mubr.f32.mxu0 0.0
  %1262 = vmatmul.mubr.f32.gmra.mrb[0].mxu0 %v1036
  %v1263 = vpop.f32.mrb[0].mxu0
  %v1264 = vadd.f32 %v59, %v1263
  %v1265 = vpop.f32.mrb[0].mxu0
  %1266 = vmatprep.mubr.f32.mxu0 0.0
  %1267 = vmatmul.mubr.f32.gmra.mrb[0].mxu0 %v1039
  %v1268 = vpop.f32.mrb[0].mxu0
  %v1269 = vadd.f32 %v59, %v1268
  %v1270 = vpop.f32.mrb[0].mxu0
  %1271 = vmatprep.mubr.f32.mxu0 0.0
  %1272 = vmatmul.mubr.f32.gmra.mrb[0].mxu0 %v1042
  %v1273 = vpop.f32.mrb[0].mxu0
  %v1274 = vadd.f32 %v59, %v1273
  %v1275 = vpop.f32.mrb[0].mxu0
  %1276 = vmatprep.mubr.f32.mxu0 0.0
  %1277 = vmatmul.mubr.f32.gmra.mrb[0].mxu0 %v1045
  %v1278 = vpop.f32.mrb[0].mxu0
  %v1279 = vadd.f32 %v59, %v1278
  %v1280 = vpop.f32.mrb[0].mxu0
  %1281 = vmatprep.mubr.f32.mxu0 0.0
  %1282 = vmatmul.mubr.f32.gmra.mrb[0].mxu0 %v1048
  %v1283 = vpop.f32.mrb[0].mxu0
  %v1284 = vadd.f32 %v59, %v1283
  %v1285 = vpop.f32.mrb[0].mxu0
  %1286 = vmatprep.mubr.f32.mxu0 0.0
  %1287 = vmatmul.mubr.f32.gmra.mrb[0].mxu0 %v1051
  %v1288 = vpop.f32.mrb[0].mxu0
  %v1289 = vadd.f32 %v59, %v1288
  %v1290 = vpop.f32.mrb[0].mxu0
  %1291 = vmatprep.mubr.f32.mxu0 0.0
  %1292 = vmatmul.mubr.f32.gmra.mrb[0].mxu0 %v1054
  %v1293 = vpop.f32.mrb[0].mxu0
  %v1294 = vadd.f32 %v59, %v1293
  %v1295 = vpop.f32.mrb[0].mxu0
  %1296 = vmatprep.mubr.f32.mxu0 0.0
  %1297 = vmatmul.mubr.f32.gmra.mrb[0].mxu0 %v1057
  %v1298 = vpop.f32.mrb[0].mxu0
  %v1299 = vadd.f32 %v59, %v1298
  %v1300 = vpop.f32.mrb[0].mxu0
  %1301 = vmatprep.mubr.f32.mxu0 0.0
  %1302 = vmatmul.mubr.f32.gmra.mrb[0].mxu0 %v1060
  %v1303 = vpop.f32.mrb[0].mxu0
  %v1304 = vadd.f32 %v59, %v1303
  %v1305 = vpop.f32.mrb[0].mxu0
  %1306 = vdwg.mxu0
  %v1307 = vmax.f32 %v1129, 0.0
  %v1308 = vmax.f32 %v1134, 0.0
  %v1309 = vmax.f32 %v1139, 0.0
  %v1310 = vmax.f32 %v1144, 0.0
  %v1311 = vmax.f32 %v1149, 0.0
  %v1312 = vmax.f32 %v1154, 0.0
  %v1313 = vmax.f32 %v1159, 0.0
  %v1314 = vmax.f32 %v1164, 0.0
  %v1315 = vmax.f32 %v1169, 0.0
  %v1316 = vmax.f32 %v1174, 0.0
  %v1317 = vmax.f32 %v1179, 0.0
  %v1318 = vmax.f32 %v1184, 0.0
  %v1319 = vmax.f32 %v1189, 0.0
  %v1320 = vmax.f32 %v1194, 0.0
  %v1321 = vmax.f32 %v1199, 0.0
  %v1322 = vmax.f32 %v1204, 0.0
  %v1323 = vmax.f32 %v1209, 0.0
  %v1324 = vmax.f32 %v1214, 0.0
  %v1325 = vmax.f32 %v1219, 0.0
  %v1326 = vmax.f32 %v1224, 0.0
  %v1327 = vmax.f32 %v1229, 0.0
  %v1328 = vmax.f32 %v1234, 0.0
  %v1329 = vmax.f32 %v1239, 0.0
  %v1330 = vmax.f32 %v1244, 0.0
  %v1331 = vmax.f32 %v1249, 0.0
  %v1332 = vmax.f32 %v1254, 0.0
  %v1333 = vmax.f32 %v1259, 0.0
  %v1334 = vmax.f32 %v1264, 0.0
  %v1335 = vmax.f32 %v1269, 0.0
  %v1336 = vmax.f32 %v1274, 0.0
  %v1337 = vmax.f32 %v1279, 0.0
  %v1338 = vmax.f32 %v1284, 0.0
  %v1339 = vmax.f32 %v1289, 0.0
  %v1340 = vmax.f32 %v1294, 0.0
  %v1341 = vmax.f32 %v1299, 0.0
  %v1342 = vmax.f32 %v1304, 0.0
  %s1343 = scalar_lea.vmem %s0, 864
  %v1344 = vld [vmem:[%s1343] sm:$0xff]
  %v1345 = vld [vmem:[%s1343 + $0x8] sm:$0xff]
  %v1346 = vld [vmem:[%s1343 + $0x10] sm:$0xff]
  %v1347 = vld [vmem:[%s1343 + $0x18] sm:$0xff]
  %v1348 = vld [vmem:[%s1343 + $0x20] sm:$0xff]
  %v1349 = vld [vmem:[%s1343 + $0x28] sm:$0xff]
  %v1350 = vld [vmem:[%s1343 + $0x30] sm:$0xff]
  %v1351 = vld [vmem:[%s1343 + $0x38] sm:$0xff]
  %v1352 = vld [vmem:[%s1343 + $0x40] sm:$0xff]
  %v1353 = vld [vmem:[%s1343 + $0x48] sm:$0xff]
  %v1354 = vld [vmem:[%s1343 + $0x50] sm:$0xff]
  %v1355 = vld [vmem:[%s1343 + $0x58] sm:$0xff]
  %v1356 = vld [vmem:[%s1343 + $0x60] sm:$0xff]
  %v1357 = vld [vmem:[%s1343 + $0x68] sm:$0xff]
  %v1358 = vld [vmem:[%s1343 + $0x70] sm:$0xff]
  %v1359 = vld [vmem:[%s1343 + $0x78] sm:$0xff]
  %v1360 = vld [vmem:[%s1343 + $0x80] sm:$0xff]
  %v1361 = vld [vmem:[%s1343 + $0x88] sm:$0xff]
  %v1362 = vld [vmem:[%s1343 + $0x90] sm:$0xff]
  %v1363 = vld [vmem:[%s1343 + $0x98] sm:$0xff]
  %v1364 = vld [vmem:[%s1343 + $0xa0] sm:$0xff]
  %v1365 = vld [vmem:[%s1343 + $0xa8] sm:$0xff]
  %v1366 = vld [vmem:[%s1343 + $0xb0] sm:$0xff]
  %v1367 = vld [vmem:[%s1343 + $0xb8] sm:$0xff]
  %v1368 = vld [vmem:[%s1343 + $0xc0] sm:$0xff]
  %v1369 = vld [vmem:[%s1343 + $0xc8] sm:$0xff]
  %v1370 = vld [vmem:[%s1343 + $0xd0] sm:$0xff]
  %v1371 = vld [vmem:[%s1343 + $0xd8] sm:$0xff]
  %v1372 = vld [vmem:[%s1343 + $0xe0] sm:$0xff]
  %v1373 = vld [vmem:[%s1343 + $0xe8] sm:$0xff]
  %v1374 = vld [vmem:[%s1343 + $0xf0] sm:$0xff]
  %v1375 = vld [vmem:[%s1343 + $0xf8] sm:$0xff]
  %v1376 = vld [vmem:[%s1343 + $0x100] sm:$0xff]
  %v1377 = vld [vmem:[%s1343 + $0x108] sm:$0xff]
  %v1378 = vld [vmem:[%s1343 + $0x110] sm:$0xff]
  %v1379 = vld [vmem:[%s1343 + $0x118] sm:$0xff]
  %v1381 = vsel %vm61, %v1344, 0
  %v1384 = vsel %vm61, %v1345, 0
  %v1387 = vsel %vm61, %v1346, 0
  %v1390 = vsel %vm61, %v1347, 0
  %v1393 = vsel %vm61, %v1348, 0
  %v1396 = vsel %vm61, %v1349, 0
  %v1399 = vsel %vm61, %v1350, 0
  %v1402 = vsel %vm61, %v1351, 0
  %v1405 = vsel %vm61, %v1352, 0
  %v1408 = vsel %vm61, %v1353, 0
  %v1411 = vsel %vm61, %v1354, 0
  %v1414 = vsel %vm61, %v1355, 0
  %v1417 = vsel %vm61, %v1356, 0
  %v1420 = vsel %vm61, %v1357, 0
  %v1423 = vsel %vm61, %v1358, 0
  %v1426 = vsel %vm61, %v1359, 0
  %v1429 = vsel %vm61, %v1360, 0
  %v1432 = vsel %vm61, %v1361, 0
  %v1435 = vsel %vm61, %v1362, 0
  %v1438 = vsel %vm61, %v1363, 0
  %v1441 = vsel %vm61, %v1364, 0
  %v1444 = vsel %vm61, %v1365, 0
  %v1447 = vsel %vm61, %v1366, 0
  %v1450 = vsel %vm61, %v1367, 0
  %v1453 = vsel %vm61, %v1368, 0
  %v1456 = vsel %vm61, %v1369, 0
  %v1459 = vsel %vm61, %v1370, 0
  %v1462 = vsel %vm61, %v1371, 0
  %v1465 = vsel %vm61, %v1372, 0
  %v1468 = vsel %vm61, %v1373, 0
  %v1471 = vsel %vm61, %v1374, 0
  %v1474 = vsel %vm61, %v1375, 0
  %v1477 = vsel %vm61, %v1376, 0
  %v1480 = vsel %vm61, %v1377, 0
  %v1483 = vsel %vm61, %v1378, 0
  %v1486 = vsel %vm61, %v1379, 0
  %1488 = vmatprep.subr.mxu0 0.0
  %1489 = vmatpush1.msra.mxu0 %v14
  %1490 = vmatprep.subr.mxu0 0.0
  %1491 = vmatpush1.msra.mxu0 %v15
  %1492 = vmatprep.subr.mxu0 0.0
  %1493 = vmatpush1.msra.mxu0 %v16
  %1494 = vmatprep.subr.mxu0 0.0
  %1495 = vmatpush1.msra.mxu0 %v172
  %1496 = vmatprep.subr.mxu0 0.0
  %1497 = vmatpush1.msra.mxu0 0.0
  %1498 = vmatprep.subr.mxu0 0.0
  %1499 = vmatpush1.msra.mxu0 0.0
  %1500 = vmatprep.subr.mxu0 0.0
  %1501 = vmatpush1.msra.mxu0 0.0
  %1502 = vmatprep.subr.mxu0 0.0
  %1503 = vmatpush1.msra.mxu0 0.0
  %1504 = vmatprep.subr.mxu0 0.0
  %1505 = vmatpush1.msra.mxu0 0.0
  %1506 = vmatprep.subr.mxu0 0.0
  %1507 = vmatpush1.msra.mxu0 0.0
  %1508 = vmatprep.subr.mxu0 0.0
  %1509 = vmatpush1.msra.mxu0 0.0
  %1510 = vmatprep.subr.mxu0 0.0
  %1511 = vmatpush1.msra.mxu0 0.0
  %1512 = vmatprep.subr.mxu0 0.0
  %1513 = vmatpush1.msra.mxu0 0.0
  %1514 = vmatprep.subr.mxu0 0.0
  %1515 = vmatpush1.msra.mxu0 0.0
  %1516 = vmatprep.subr.mxu0 0.0
  %1517 = vmatpush1.msra.mxu0 0.0
  %1518 = vmatprep.subr.mxu0 0.0
  %1519 = vmatpush1.msra.mxu0 0.0
  %1520 = vmatprep.subr.mxu0 0.0
  %1521 = vmatpush1.msra.mxu0 0.0
  %1522 = vmatprep.subr.mxu0 0.0
  %1523 = vmatpush1.msra.mxu0 0.0
  %1524 = vmatprep.subr.mxu0 0.0
  %1525 = vmatpush1.msra.mxu0 0.0
  %1526 = vmatprep.subr.mxu0 0.0
  %1527 = vmatpush1.msra.mxu0 0.0
  %1528 = vmatprep.subr.mxu0 0.0
  %1529 = vmatpush1.msra.mxu0 0.0
  %1530 = vmatprep.subr.mxu0 0.0
  %1531 = vmatpush1.msra.mxu0 0.0
  %1532 = vmatprep.subr.mxu0 0.0
  %1533 = vmatpush1.msra.mxu0 0.0
  %1534 = vmatprep.subr.mxu0 0.0
  %1535 = vmatpush1.msra.mxu0 0.0
  %1536 = vmatprep.subr.mxu0 0.0
  %1537 = vmatpush1.msra.mxu0 0.0
  %1538 = vmatprep.subr.mxu0 0.0
  %1539 = vmatpush1.msra.mxu0 0.0
  %1540 = vmatprep.subr.mxu0 0.0
  %1541 = vmatpush1.msra.mxu0 0.0
  %1542 = vmatprep.subr.mxu0 0.0
  %1543 = vmatpush1.msra.mxu0 0.0
  %1544 = vmatprep.subr.mxu0 0.0
  %1545 = vmatpush1.msra.mxu0 0.0
  %1546 = vmatprep.subr.mxu0 0.0
  %1547 = vmatpush1.msra.mxu0 0.0
  %1548 = vmatprep.subr.mxu0 0.0
  %1549 = vmatpush1.msra.mxu0 0.0
  %1550 = vmatprep.subr.mxu0 0.0
  %1551 = vmatpush1.msra.mxu0 0.0
  %1552 = vmatprep.mubr.f32.mxu0 0.0
  %1553 = vmatmul.mubr.f32.gmra.mrb[0].mxu0 %v1381
  %v1554 = vpop.f32.mrb[0].mxu0
  %v1555 = vadd.f32 %v59, %v1554
  %v1556 = vpop.f32.mrb[0].mxu0
  %1557 = vmatprep.mubr.f32.mxu0 0.0
  %1558 = vmatmul.mubr.f32.gmra.mrb[0].mxu0 %v1384
  %v1559 = vpop.f32.mrb[0].mxu0
  %v1560 = vadd.f32 %v59, %v1559
  %v1561 = vpop.f32.mrb[0].mxu0
  %1562 = vmatprep.mubr.f32.mxu0 0.0
  %1563 = vmatmul.mubr.f32.gmra.mrb[0].mxu0 %v1387
  %v1564 = vpop.f32.mrb[0].mxu0
  %v1565 = vadd.f32 %v59, %v1564
  %v1566 = vpop.f32.mrb[0].mxu0
  %1567 = vmatprep.mubr.f32.mxu0 0.0
  %1568 = vmatmul.mubr.f32.gmra.mrb[0].mxu0 %v1390
  %v1569 = vpop.f32.mrb[0].mxu0
  %v1570 = vadd.f32 %v59, %v1569
  %v1571 = vpop.f32.mrb[0].mxu0
  %1572 = vmatprep.mubr.f32.mxu0 0.0
  %1573 = vmatmul.mubr.f32.gmra.mrb[0].mxu0 %v1393
  %v1574 = vpop.f32.mrb[0].mxu0
  %v1575 = vadd.f32 %v59, %v1574
  %v1576 = vpop.f32.mrb[0].mxu0
  %1577 = vmatprep.mubr.f32.mxu0 0.0
  %1578 = vmatmul.mubr.f32.gmra.mrb[0].mxu0 %v1396
  %v1579 = vpop.f32.mrb[0].mxu0
  %v1580 = vadd.f32 %v59, %v1579
  %v1581 = vpop.f32.mrb[0].mxu0
  %1582 = vmatprep.mubr.f32.mxu0 0.0
  %1583 = vmatmul.mubr.f32.gmra.mrb[0].mxu0 %v1399
  %v1584 = vpop.f32.mrb[0].mxu0
  %v1585 = vadd.f32 %v59, %v1584
  %v1586 = vpop.f32.mrb[0].mxu0
  %1587 = vmatprep.mubr.f32.mxu0 0.0
  %1588 = vmatmul.mubr.f32.gmra.mrb[0].mxu0 %v1402
  %v1589 = vpop.f32.mrb[0].mxu0
  %v1590 = vadd.f32 %v59, %v1589
  %v1591 = vpop.f32.mrb[0].mxu0
  %1592 = vmatprep.mubr.f32.mxu0 0.0
  %1593 = vmatmul.mubr.f32.gmra.mrb[0].mxu0 %v1405
  %v1594 = vpop.f32.mrb[0].mxu0
  %v1595 = vadd.f32 %v59, %v1594
  %v1596 = vpop.f32.mrb[0].mxu0
  %1597 = vmatprep.mubr.f32.mxu0 0.0
  %1598 = vmatmul.mubr.f32.gmra.mrb[0].mxu0 %v1408
  %v1599 = vpop.f32.mrb[0].mxu0
  %v1600 = vadd.f32 %v59, %v1599
  %v1601 = vpop.f32.mrb[0].mxu0
  %1602 = vmatprep.mubr.f32.mxu0 0.0
  %1603 = vmatmul.mubr.f32.gmra.mrb[0].mxu0 %v1411
  %v1604 = vpop.f32.mrb[0].mxu0
  %v1605 = vadd.f32 %v59, %v1604
  %v1606 = vpop.f32.mrb[0].mxu0
  %1607 = vmatprep.mubr.f32.mxu0 0.0
  %1608 = vmatmul.mubr.f32.gmra.mrb[0].mxu0 %v1414
  %v1609 = vpop.f32.mrb[0].mxu0
  %v1610 = vadd.f32 %v59, %v1609
  %v1611 = vpop.f32.mrb[0].mxu0
  %1612 = vmatprep.mubr.f32.mxu0 0.0
  %1613 = vmatmul.mubr.f32.gmra.mrb[0].mxu0 %v1417
  %v1614 = vpop.f32.mrb[0].mxu0
  %v1615 = vadd.f32 %v59, %v1614
  %v1616 = vpop.f32.mrb[0].mxu0
  %1617 = vmatprep.mubr.f32.mxu0 0.0
  %1618 = vmatmul.mubr.f32.gmra.mrb[0].mxu0 %v1420
  %v1619 = vpop.f32.mrb[0].mxu0
  %v1620 = vadd.f32 %v59, %v1619
  %v1621 = vpop.f32.mrb[0].mxu0
  %1622 = vmatprep.mubr.f32.mxu0 0.0
  %1623 = vmatmul.mubr.f32.gmra.mrb[0].mxu0 %v1423
  %v1624 = vpop.f32.mrb[0].mxu0
  %v1625 = vadd.f32 %v59, %v1624
  %v1626 = vpop.f32.mrb[0].mxu0
  %1627 = vmatprep.mubr.f32.mxu0 0.0
  %1628 = vmatmul.mubr.f32.gmra.mrb[0].mxu0 %v1426
  %v1629 = vpop.f32.mrb[0].mxu0
  %v1630 = vadd.f32 %v59, %v1629
  %v1631 = vpop.f32.mrb[0].mxu0
  %1632 = vmatprep.mubr.f32.mxu0 0.0
  %1633 = vmatmul.mubr.f32.gmra.mrb[0].mxu0 %v1429
  %v1634 = vpop.f32.mrb[0].mxu0
  %v1635 = vadd.f32 %v59, %v1634
  %v1636 = vpop.f32.mrb[0].mxu0
  %1637 = vmatprep.mubr.f32.mxu0 0.0
  %1638 = vmatmul.mubr.f32.gmra.mrb[0].mxu0 %v1432
  %v1639 = vpop.f32.mrb[0].mxu0
  %v1640 = vadd.f32 %v59, %v1639
  %v1641 = vpop.f32.mrb[0].mxu0
  %1642 = vmatprep.mubr.f32.mxu0 0.0
  %1643 = vmatmul.mubr.f32.gmra.mrb[0].mxu0 %v1435
  %v1644 = vpop.f32.mrb[0].mxu0
  %v1645 = vadd.f32 %v59, %v1644
  %v1646 = vpop.f32.mrb[0].mxu0
  %1647 = vmatprep.mubr.f32.mxu0 0.0
  %1648 = vmatmul.mubr.f32.gmra.mrb[0].mxu0 %v1438
  %v1649 = vpop.f32.mrb[0].mxu0
  %v1650 = vadd.f32 %v59, %v1649
  %v1651 = vpop.f32.mrb[0].mxu0
  %1652 = vmatprep.mubr.f32.mxu0 0.0
  %1653 = vmatmul.mubr.f32.gmra.mrb[0].mxu0 %v1441
  %v1654 = vpop.f32.mrb[0].mxu0
  %v1655 = vadd.f32 %v59, %v1654
  %v1656 = vpop.f32.mrb[0].mxu0
  %1657 = vmatprep.mubr.f32.mxu0 0.0
  %1658 = vmatmul.mubr.f32.gmra.mrb[0].mxu0 %v1444
  %v1659 = vpop.f32.mrb[0].mxu0
  %v1660 = vadd.f32 %v59, %v1659
  %v1661 = vpop.f32.mrb[0].mxu0
  %1662 = vmatprep.mubr.f32.mxu0 0.0
  %1663 = vmatmul.mubr.f32.gmra.mrb[0].mxu0 %v1447
  %v1664 = vpop.f32.mrb[0].mxu0
  %v1665 = vadd.f32 %v59, %v1664
  %v1666 = vpop.f32.mrb[0].mxu0
  %1667 = vmatprep.mubr.f32.mxu0 0.0
  %1668 = vmatmul.mubr.f32.gmra.mrb[0].mxu0 %v1450
  %v1669 = vpop.f32.mrb[0].mxu0
  %v1670 = vadd.f32 %v59, %v1669
  %v1671 = vpop.f32.mrb[0].mxu0
  %1672 = vmatprep.mubr.f32.mxu0 0.0
  %1673 = vmatmul.mubr.f32.gmra.mrb[0].mxu0 %v1453
  %v1674 = vpop.f32.mrb[0].mxu0
  %v1675 = vadd.f32 %v59, %v1674
  %v1676 = vpop.f32.mrb[0].mxu0
  %1677 = vmatprep.mubr.f32.mxu0 0.0
  %1678 = vmatmul.mubr.f32.gmra.mrb[0].mxu0 %v1456
  %v1679 = vpop.f32.mrb[0].mxu0
  %v1680 = vadd.f32 %v59, %v1679
  %v1681 = vpop.f32.mrb[0].mxu0
  %1682 = vmatprep.mubr.f32.mxu0 0.0
  %1683 = vmatmul.mubr.f32.gmra.mrb[0].mxu0 %v1459
  %v1684 = vpop.f32.mrb[0].mxu0
  %v1685 = vadd.f32 %v59, %v1684
  %v1686 = vpop.f32.mrb[0].mxu0
  %1687 = vmatprep.mubr.f32.mxu0 0.0
  %1688 = vmatmul.mubr.f32.gmra.mrb[0].mxu0 %v1462
  %v1689 = vpop.f32.mrb[0].mxu0
  %v1690 = vadd.f32 %v59, %v1689
  %v1691 = vpop.f32.mrb[0].mxu0
  %1692 = vmatprep.mubr.f32.mxu0 0.0
  %1693 = vmatmul.mubr.f32.gmra.mrb[0].mxu0 %v1465
  %v1694 = vpop.f32.mrb[0].mxu0
  %v1695 = vadd.f32 %v59, %v1694
  %v1696 = vpop.f32.mrb[0].mxu0
  %1697 = vmatprep.mubr.f32.mxu0 0.0
  %1698 = vmatmul.mubr.f32.gmra.mrb[0].mxu0 %v1468
  %v1699 = vpop.f32.mrb[0].mxu0
  %v1700 = vadd.f32 %v59, %v1699
  %v1701 = vpop.f32.mrb[0].mxu0
  %1702 = vmatprep.mubr.f32.mxu0 0.0
  %1703 = vmatmul.mubr.f32.gmra.mrb[0].mxu0 %v1471
  %v1704 = vpop.f32.mrb[0].mxu0
  %v1705 = vadd.f32 %v59, %v1704
  %v1706 = vpop.f32.mrb[0].mxu0
  %1707 = vmatprep.mubr.f32.mxu0 0.0
  %1708 = vmatmul.mubr.f32.gmra.mrb[0].mxu0 %v1474
  %v1709 = vpop.f32.mrb[0].mxu0
  %v1710 = vadd.f32 %v59, %v1709
  %v1711 = vpop.f32.mrb[0].mxu0
  %1712 = vmatprep.mubr.f32.mxu0 0.0
  %1713 = vmatmul.mubr.f32.gmra.mrb[0].mxu0 %v1477
  %v1714 = vpop.f32.mrb[0].mxu0
  %v1715 = vadd.f32 %v59, %v1714
  %v1716 = vpop.f32.mrb[0].mxu0
  %1717 = vmatprep.mubr.f32.mxu0 0.0
  %1718 = vmatmul.mubr.f32.gmra.mrb[0].mxu0 %v1480
  %v1719 = vpop.f32.mrb[0].mxu0
  %v1720 = vadd.f32 %v59, %v1719
  %v1721 = vpop.f32.mrb[0].mxu0
  %1722 = vmatprep.mubr.f32.mxu0 0.0
  %1723 = vmatmul.mubr.f32.gmra.mrb[0].mxu0 %v1483
  %v1724 = vpop.f32.mrb[0].mxu0
  %v1725 = vadd.f32 %v59, %v1724
  %v1726 = vpop.f32.mrb[0].mxu0
  %1727 = vmatprep.mubr.f32.mxu0 0.0
  %1728 = vmatmul.mubr.f32.gmra.mrb[0].mxu0 %v1486
  %v1729 = vpop.f32.mrb[0].mxu0
  %v1730 = vadd.f32 %v59, %v1729
  %v1731 = vpop.f32.mrb[0].mxu0
  %1732 = vdwg.mxu0
  %v1733 = vmax.f32 %v1555, 0.0
  %v1734 = vmax.f32 %v1560, 0.0
  %v1735 = vmax.f32 %v1565, 0.0
  %v1736 = vmax.f32 %v1570, 0.0
  %v1737 = vmax.f32 %v1575, 0.0
  %v1738 = vmax.f32 %v1580, 0.0
  %v1739 = vmax.f32 %v1585, 0.0
  %v1740 = vmax.f32 %v1590, 0.0
  %v1741 = vmax.f32 %v1595, 0.0
  %v1742 = vmax.f32 %v1600, 0.0
  %v1743 = vmax.f32 %v1605, 0.0
  %v1744 = vmax.f32 %v1610, 0.0
  %v1745 = vmax.f32 %v1615, 0.0
  %v1746 = vmax.f32 %v1620, 0.0
  %v1747 = vmax.f32 %v1625, 0.0
  %v1748 = vmax.f32 %v1630, 0.0
  %v1749 = vmax.f32 %v1635, 0.0
  %v1750 = vmax.f32 %v1640, 0.0
  %v1751 = vmax.f32 %v1645, 0.0
  %v1752 = vmax.f32 %v1650, 0.0
  %v1753 = vmax.f32 %v1655, 0.0
  %v1754 = vmax.f32 %v1660, 0.0
  %v1755 = vmax.f32 %v1665, 0.0
  %v1756 = vmax.f32 %v1670, 0.0
  %v1757 = vmax.f32 %v1675, 0.0
  %v1758 = vmax.f32 %v1680, 0.0
  %v1759 = vmax.f32 %v1685, 0.0
  %v1760 = vmax.f32 %v1690, 0.0
  %v1761 = vmax.f32 %v1695, 0.0
  %v1762 = vmax.f32 %v1700, 0.0
  %v1763 = vmax.f32 %v1705, 0.0
  %v1764 = vmax.f32 %v1710, 0.0
  %v1765 = vmax.f32 %v1715, 0.0
  %v1766 = vmax.f32 %v1720, 0.0
  %v1767 = vmax.f32 %v1725, 0.0
  %v1768 = vmax.f32 %v1730, 0.0
  %v1769 = vmax.f32 %v1307, %v1733
  %v1770 = vmax.f32 %v1308, %v1734
  %v1771 = vmax.f32 %v1309, %v1735
  %v1772 = vmax.f32 %v1310, %v1736
  %v1773 = vmax.f32 %v1311, %v1737
  %v1774 = vmax.f32 %v1312, %v1738
  %v1775 = vmax.f32 %v1313, %v1739
  %v1776 = vmax.f32 %v1314, %v1740
  %v1777 = vmax.f32 %v1315, %v1741
  %v1778 = vmax.f32 %v1316, %v1742
  %v1779 = vmax.f32 %v1317, %v1743
  %v1780 = vmax.f32 %v1318, %v1744
  %v1781 = vmax.f32 %v1319, %v1745
  %v1782 = vmax.f32 %v1320, %v1746
  %v1783 = vmax.f32 %v1321, %v1747
  %v1784 = vmax.f32 %v1322, %v1748
  %v1785 = vmax.f32 %v1323, %v1749
  %v1786 = vmax.f32 %v1324, %v1750
  %v1787 = vmax.f32 %v1325, %v1751
  %v1788 = vmax.f32 %v1326, %v1752
  %v1789 = vmax.f32 %v1327, %v1753
  %v1790 = vmax.f32 %v1328, %v1754
  %v1791 = vmax.f32 %v1329, %v1755
  %v1792 = vmax.f32 %v1330, %v1756
  %v1793 = vmax.f32 %v1331, %v1757
  %v1794 = vmax.f32 %v1332, %v1758
  %v1795 = vmax.f32 %v1333, %v1759
  %v1796 = vmax.f32 %v1334, %v1760
  %v1797 = vmax.f32 %v1335, %v1761
  %v1798 = vmax.f32 %v1336, %v1762
  %v1799 = vmax.f32 %v1337, %v1763
  %v1800 = vmax.f32 %v1338, %v1764
  %v1801 = vmax.f32 %v1339, %v1765
  %v1802 = vmax.f32 %v1340, %v1766
  %v1803 = vmax.f32 %v1341, %v1767
  %v1804 = vmax.f32 %v1342, %v1768
  %v1805 = vmax.f32 %v881, %v1769
  %v1806 = vmax.f32 %v882, %v1770
  %v1807 = vmax.f32 %v883, %v1771
  %v1808 = vmax.f32 %v884, %v1772
  %v1809 = vmax.f32 %v885, %v1773
  %v1810 = vmax.f32 %v886, %v1774
  %v1811 = vmax.f32 %v887, %v1775
  %v1812 = vmax.f32 %v888, %v1776
  %v1813 = vmax.f32 %v889, %v1777
  %v1814 = vmax.f32 %v890, %v1778
  %v1815 = vmax.f32 %v891, %v1779
  %v1816 = vmax.f32 %v892, %v1780
  %v1817 = vmax.f32 %v893, %v1781
  %v1818 = vmax.f32 %v894, %v1782
  %v1819 = vmax.f32 %v895, %v1783
  %v1820 = vmax.f32 %v896, %v1784
  %v1821 = vmax.f32 %v897, %v1785
  %v1822 = vmax.f32 %v898, %v1786
  %v1823 = vmax.f32 %v899, %v1787
  %v1824 = vmax.f32 %v900, %v1788
  %v1825 = vmax.f32 %v901, %v1789
  %v1826 = vmax.f32 %v902, %v1790
  %v1827 = vmax.f32 %v903, %v1791
  %v1828 = vmax.f32 %v904, %v1792
  %v1829 = vmax.f32 %v905, %v1793
  %v1830 = vmax.f32 %v906, %v1794
  %v1831 = vmax.f32 %v907, %v1795
  %v1832 = vmax.f32 %v908, %v1796
  %v1833 = vmax.f32 %v909, %v1797
  %v1834 = vmax.f32 %v910, %v1798
  %v1835 = vmax.f32 %v911, %v1799
  %v1836 = vmax.f32 %v912, %v1800
  %v1837 = vmax.f32 %v913, %v1801
  %v1838 = vmax.f32 %v914, %v1802
  %v1839 = vmax.f32 %v915, %v1803
  %v1840 = vmax.f32 %v916, %v1804
  %vm1841 = vcmask 162816
  %1842 = vst.msk [vmem:[%s3] sm:$0xff] %vm1841, %v1805
  %1843 = vst.msk [vmem:[%s3 + $0x8] sm:$0xff] %vm1841, %v1806
  %1844 = vst.msk [vmem:[%s3 + $0x10] sm:$0xff] %vm1841, %v1807
  %1845 = vst.msk [vmem:[%s3 + $0x18] sm:$0xff] %vm1841, %v1808
  %1846 = vst.msk [vmem:[%s3 + $0x20] sm:$0xff] %vm1841, %v1809
  %1847 = vst.msk [vmem:[%s3 + $0x28] sm:$0xff] %vm1841, %v1810
  %1848 = vst.msk [vmem:[%s3 + $0x30] sm:$0xff] %vm1841, %v1811
  %1849 = vst.msk [vmem:[%s3 + $0x38] sm:$0xff] %vm1841, %v1812
  %1850 = vst.msk [vmem:[%s3 + $0x40] sm:$0xff] %vm1841, %v1813
  %1851 = vst.msk [vmem:[%s3 + $0x48] sm:$0xff] %vm1841, %v1814
  %1852 = vst.msk [vmem:[%s3 + $0x50] sm:$0xff] %vm1841, %v1815
  %1853 = vst.msk [vmem:[%s3 + $0x58] sm:$0xff] %vm1841, %v1816
  %1854 = vst.msk [vmem:[%s3 + $0x60] sm:$0xff] %vm1841, %v1817
  %1855 = vst.msk [vmem:[%s3 + $0x68] sm:$0xff] %vm1841, %v1818
  %1856 = vst.msk [vmem:[%s3 + $0x70] sm:$0xff] %vm1841, %v1819
  %1857 = vst.msk [vmem:[%s3 + $0x78] sm:$0xff] %vm1841, %v1820
  %1858 = vst.msk [vmem:[%s3 + $0x80] sm:$0xff] %vm1841, %v1821
  %1859 = vst.msk [vmem:[%s3 + $0x88] sm:$0xff] %vm1841, %v1822
  %1860 = vst.msk [vmem:[%s3 + $0x90] sm:$0xff] %vm1841, %v1823
  %1861 = vst.msk [vmem:[%s3 + $0x98] sm:$0xff] %vm1841, %v1824
  %1862 = vst.msk [vmem:[%s3 + $0xa0] sm:$0xff] %vm1841, %v1825
  %1863 = vst.msk [vmem:[%s3 + $0xa8] sm:$0xff] %vm1841, %v1826
  %1864 = vst.msk [vmem:[%s3 + $0xb0] sm:$0xff] %vm1841, %v1827
  %1865 = vst.msk [vmem:[%s3 + $0xb8] sm:$0xff] %vm1841, %v1828
  %1866 = vst.msk [vmem:[%s3 + $0xc0] sm:$0xff] %vm1841, %v1829
  %1867 = vst.msk [vmem:[%s3 + $0xc8] sm:$0xff] %vm1841, %v1830
  %1868 = vst.msk [vmem:[%s3 + $0xd0] sm:$0xff] %vm1841, %v1831
  %1869 = vst.msk [vmem:[%s3 + $0xd8] sm:$0xff] %vm1841, %v1832
  %1870 = vst.msk [vmem:[%s3 + $0xe0] sm:$0xff] %vm1841, %v1833
  %1871 = vst.msk [vmem:[%s3 + $0xe8] sm:$0xff] %vm1841, %v1834
  %1872 = vst.msk [vmem:[%s3 + $0xf0] sm:$0xff] %vm1841, %v1835
  %1873 = vst.msk [vmem:[%s3 + $0xf8] sm:$0xff] %vm1841, %v1836
  %1874 = vst.msk [vmem:[%s3 + $0x100] sm:$0xff] %vm1841, %v1837
  %1875 = vst.msk [vmem:[%s3 + $0x108] sm:$0xff] %vm1841, %v1838
  %1876 = vst.msk [vmem:[%s3 + $0x110] sm:$0xff] %vm1841, %v1839
  %1877 = vst.msk [vmem:[%s3 + $0x118] sm:$0xff] %vm1841, %v1840
  // Predicated region
  $region14: #{forward.4} parent=0 // pred_check
    _
  $region15: #{forward.4} parent=0 // pred_check_branch
    %1879 = sbr.rel (0) target = $region17
  $region16: #{forward.4} parent=0 // pred_region
    _
  $region17: #{forward.4} parent=0 // pred_fallthru
    _
  // Predicated region
  $region18: #{forward.4} parent=0 // pred_check
    _
  $region19: #{forward.4} parent=0 // pred_check_branch
    %1881 = sbr.rel (0) target = $region21
  $region20: #{forward.4} parent=0 // pred_region
    _
  $region21: #{forward.4} parent=0 // pred_fallthru
    _

// kernel: forward.5
$region0: #{forward.5}
  #allocation0 [shape = 'u32[]', space=smem, size = 0x4, offset = 0x4, fixed_abs, tag = 'smem constant byte address 0x4 - core index']
  #allocation1 [shape = 'u32[144,128]{1,0:T(1,128)}', space=vmem, size = 0x12000, scoped, tag = 'internal scratch']
  %s0 = inlined_call_operand.vmem [shape: f32[4,32,500], index: 0, kind: input, shape index: {}]
  %s1 = inlined_call_operand.vmem [shape: f32[500,50], index: 1, kind: input, shape index: {}]
  %s2 = inlined_call_operand.vmem [shape: f32[1,50], index: 2, kind: input, shape index: {}]
  %s3 = inlined_call_operand.vmem [shape: f32[32,50], index: 3, kind: output, shape index: {}]
  %s4 = sld [smem:[#allocation0]]
  $region22: #{forward.5} parent=0
    _
  %s6 = ssub.s32 1, %s4
  %s7 = scalar_select 0, %s6, %s4
  // Predicated region
  $region2: #{forward.5} parent=0 // pred_check
    _
  $region3: #{forward.5} parent=0 // pred_check_branch
    %9 = sbr.rel (0) target = $region5
  $region4: #{forward.5} parent=0 // pred_region
    _
  $region5: #{forward.5} parent=0 // pred_fallthru
    _
  // Predicated region
  $region6: #{forward.5} parent=0 // pred_check
    _
  $region7: #{forward.5} parent=0 // pred_check_branch
    %11 = sbr.rel (0) target = $region9
  $region8: #{forward.5} parent=0 // pred_region
    _
  $region9: #{forward.5} parent=0 // pred_fallthru
    _
  // Predicated region
  $region10: #{forward.5} parent=0 // pred_check
    _
  $region11: #{forward.5} parent=0 // pred_check_branch
    %13 = sbr.rel (0) target = $region13
  $region12: #{forward.5} parent=0 // pred_region
    _
  $region13: #{forward.5} parent=0 // pred_fallthru
    _
  %v14 = vld [vmem:[%s1] sm:$0xff]
  %v15 = vld [vmem:[%s1 + $0x8] sm:$0xff]
  %v16 = vld [vmem:[%s1 + $0x10] sm:$0xff]
  %v17 = vld [vmem:[%s1 + $0x18] sm:$0xff]
  %v18 = vld [vmem:[%s1 + $0x20] sm:$0xff]
  %v19 = vld [vmem:[%s1 + $0x28] sm:$0xff]
  %v20 = vld [vmem:[%s1 + $0x30] sm:$0xff]
  %v21 = vld [vmem:[%s1 + $0x38] sm:$0xff]
  %v22 = vld [vmem:[%s1 + $0x40] sm:$0xff]
  %v23 = vld [vmem:[%s1 + $0x48] sm:$0xff]
  %v24 = vld [vmem:[%s1 + $0x50] sm:$0xff]
  %v25 = vld [vmem:[%s1 + $0x58] sm:$0xff]
  %v26 = vld [vmem:[%s1 + $0x60] sm:$0xff]
  %v27 = vld [vmem:[%s1 + $0x68] sm:$0xff]
  %v28 = vld [vmem:[%s1 + $0x70] sm:$0xff]
  %v29 = vld [vmem:[%s1 + $0x78] sm:$0xff]
  %v30 = vld [vmem:[%s1 + $0x80] sm:$0xff]
  %v31 = vld [vmem:[%s1 + $0x88] sm:$0xff]
  %v32 = vld [vmem:[%s1 + $0x90] sm:$0xff]
  %v33 = vld [vmem:[%s1 + $0x98] sm:$0xff]
  %v34 = vld [vmem:[%s1 + $0xa0] sm:$0xff]
  %v35 = vld [vmem:[%s1 + $0xa8] sm:$0xff]
  %v36 = vld [vmem:[%s1 + $0xb0] sm:$0xff]
  %v37 = vld [vmem:[%s1 + $0xb8] sm:$0xff]
  %v38 = vld [vmem:[%s1 + $0xc0] sm:$0xff]
  %v39 = vld [vmem:[%s1 + $0xc8] sm:$0xff]
  %v40 = vld [vmem:[%s1 + $0xd0] sm:$0xff]
  %v41 = vld [vmem:[%s1 + $0xd8] sm:$0xff]
  %v42 = vld [vmem:[%s1 + $0xe0] sm:$0xff]
  %v43 = vld [vmem:[%s1 + $0xe8] sm:$0xff]
  %v44 = vld [vmem:[%s1 + $0xf0] sm:$0xff]
  %v45 = vld [vmem:[%s1 + $0xf8] sm:$0xff]
  %v46 = vld [vmem:[%s1 + $0x100] sm:$0xff]
  %v47 = vld [vmem:[%s1 + $0x108] sm:$0xff]
  %v48 = vld [vmem:[%s1 + $0x110] sm:$0xff]
  %v49 = vld [vmem:[%s1 + $0x118] sm:$0xff]
  %v50 = vld [vmem:[%s1 + $0x120] sm:$0xff]
  %v51 = vld [vmem:[%s1 + $0x128] sm:$0xff]
  %v52 = vld [vmem:[%s1 + $0x130] sm:$0xff]
  %v53 = vld [vmem:[%s1 + $0x138] sm:$0xff]
  %v54 = vld [vmem:[%s1 + $0x140] sm:$0xff]
  %v55 = vld [vmem:[%s1 + $0x148] sm:$0xff]
  %v56 = vld [vmem:[%s1 + $0x150] sm:$0xff]
  %v57 = vld [vmem:[%s1 + $0x158] sm:$0xff]
  %v58 = vld [vmem:[%s1 + $0x160] sm:$0xff]
  %v59 = vld [vmem:[%s1 + $0x168] sm:$0xff]
  %v60 = vld [vmem:[%s1 + $0x170] sm:$0xff]
  %v61 = vld [vmem:[%s1 + $0x178] sm:$0xff]
  %v62 = vld [vmem:[%s1 + $0x180] sm:$0xff]
  %v63 = vld [vmem:[%s1 + $0x188] sm:$0xff]
  %v64 = vld [vmem:[%s1 + $0x190] sm:$0xff]
  %v65 = vld [vmem:[%s1 + $0x198] sm:$0xff]
  %v66 = vld [vmem:[%s1 + $0x1a0] sm:$0xff]
  %v67 = vld [vmem:[%s1 + $0x1a8] sm:$0xff]
  %v68 = vld [vmem:[%s1 + $0x1b0] sm:$0xff]
  %v69 = vld [vmem:[%s1 + $0x1b8] sm:$0xff]
  %v70 = vld [vmem:[%s1 + $0x1c0] sm:$0xff]
  %v71 = vld [vmem:[%s1 + $0x1c8] sm:$0xff]
  %v72 = vld [vmem:[%s1 + $0x1d0] sm:$0xff]
  %v73 = vld [vmem:[%s1 + $0x1d8] sm:$0xff]
  %v74 = vld [vmem:[%s1 + $0x1e0] sm:$0xff]
  %v75 = vld [vmem:[%s1 + $0x1e8] sm:$0xff]
  %v76 = vld [vmem:[%s1 + $0x1f0] sm:$0xf]
  %v77 = vld [vmem:[%s2] sm:$0x1]
  %v78 = vld [vmem:[%s0] sm:$0xff]
  %v79 = vld [vmem:[%s0 + $0x8] sm:$0xff]
  %v80 = vld [vmem:[%s0 + $0x10] sm:$0xff]
  %v81 = vld [vmem:[%s0 + $0x18] sm:$0xff]
  %v82 = vld [vmem:[%s0 + $0x20] sm:$0xff]
  %v83 = vld [vmem:[%s0 + $0x28] sm:$0xff]
  %v84 = vld [vmem:[%s0 + $0x30] sm:$0xff]
  %v85 = vld [vmem:[%s0 + $0x38] sm:$0xff]
  %v86 = vld [vmem:[%s0 + $0x40] sm:$0xff]
  %v87 = vld [vmem:[%s0 + $0x48] sm:$0xff]
  %v88 = vld [vmem:[%s0 + $0x50] sm:$0xff]
  %v89 = vld [vmem:[%s0 + $0x58] sm:$0xff]
  %v90 = vld [vmem:[%s0 + $0x60] sm:$0xff]
  %v91 = vld [vmem:[%s0 + $0x68] sm:$0xff]
  %v92 = vld [vmem:[%s0 + $0x70] sm:$0xff]
  %v93 = vld [vmem:[%s0 + $0x78] sm:$0xff]
  %v95 = vlaneseq
  %v96 = vshrl.u32 %v95, 7
  %v97 = vsub.s32 0, %v96
  %v98 = vrot.slane %v77, %v97
  %vm100 = vcmask 949248
  %v102 = vsel %vm100, %v81, 0
  %v105 = vsel %vm100, %v85, 0
  %v108 = vsel %vm100, %v89, 0
  %v111 = vsel %vm100, %v93, 0
  %vm113 = vcmask 1043456
  %v115 = vsel %vm113, %v76, 0
  %117 = vmatprep.subr.mxu0 0.0
  %118 = vmatpush1.msra.mxu0 %v14
  %119 = vmatprep.subr.mxu0 0.0
  %120 = vmatpush1.msra.mxu0 %v15
  %121 = vmatprep.subr.mxu0 0.0
  %122 = vmatpush1.msra.mxu0 %v16
  %123 = vmatprep.subr.mxu0 0.0
  %124 = vmatpush1.msra.mxu0 %v17
  %125 = vmatprep.subr.mxu0 0.0
  %126 = vmatpush1.msra.mxu0 %v18
  %127 = vmatprep.subr.mxu0 0.0
  %128 = vmatpush1.msra.mxu0 %v19
  %129 = vmatprep.subr.mxu0 0.0
  %130 = vmatpush1.msra.mxu0 %v20
  %131 = vmatprep.subr.mxu0 0.0
  %132 = vmatpush1.msra.mxu0 %v21
  %133 = vmatprep.subr.mxu0 0.0
  %134 = vmatpush1.msra.mxu0 %v22
  %135 = vmatprep.subr.mxu0 0.0
  %136 = vmatpush1.msra.mxu0 %v23
  %137 = vmatprep.subr.mxu0 0.0
  %138 = vmatpush1.msra.mxu0 %v24
  %139 = vmatprep.subr.mxu0 0.0
  %140 = vmatpush1.msra.mxu0 %v25
  %141 = vmatprep.subr.mxu0 0.0
  %142 = vmatpush1.msra.mxu0 %v26
  %143 = vmatprep.subr.mxu0 0.0
  %144 = vmatpush1.msra.mxu0 %v27
  %145 = vmatprep.subr.mxu0 0.0
  %146 = vmatpush1.msra.mxu0 %v28
  %147 = vmatprep.subr.mxu0 0.0
  %148 = vmatpush1.msra.mxu0 %v29
  %149 = vmatprep.subr.mxu0 0.0
  %150 = vmatpush1.msra.mxu0 %v30
  %151 = vmatprep.subr.mxu0 0.0
  %152 = vmatpush1.msra.mxu0 %v31
  %153 = vmatprep.subr.mxu0 0.0
  %154 = vmatpush1.msra.mxu0 %v32
  %155 = vmatprep.subr.mxu0 0.0
  %156 = vmatpush1.msra.mxu0 %v33
  %157 = vmatprep.subr.mxu0 0.0
  %158 = vmatpush1.msra.mxu0 %v34
  %159 = vmatprep.subr.mxu0 0.0
  %160 = vmatpush1.msra.mxu0 %v35
  %161 = vmatprep.subr.mxu0 0.0
  %162 = vmatpush1.msra.mxu0 %v36
  %163 = vmatprep.subr.mxu0 0.0
  %164 = vmatpush1.msra.mxu0 %v37
  %165 = vmatprep.subr.mxu0 0.0
  %166 = vmatpush1.msra.mxu0 %v38
  %167 = vmatprep.subr.mxu0 0.0
  %168 = vmatpush1.msra.mxu0 %v39
  %169 = vmatprep.subr.mxu0 0.0
  %170 = vmatpush1.msra.mxu0 %v40
  %171 = vmatprep.subr.mxu0 0.0
  %172 = vmatpush1.msra.mxu0 %v41
  %173 = vmatprep.subr.mxu0 0.0
  %174 = vmatpush1.msra.mxu0 %v42
  %175 = vmatprep.subr.mxu0 0.0
  %176 = vmatpush1.msra.mxu0 %v43
  %177 = vmatprep.subr.mxu0 0.0
  %178 = vmatpush1.msra.mxu0 %v44
  %179 = vmatprep.subr.mxu0 0.0
  %180 = vmatpush1.msra.mxu0 %v45
  %181 = vmatprep.mubr.f32.mxu0 %v79
  %182 = vmatmul.mubr.f32.gmra.mrb[0].mxu0 %v78
  %v183 = vpop.f32.mrb[0].mxu0
  %v184 = vadd.f32 %v98, %v183
  %v185 = vpop.f32.mrb[0].mxu0
  %186 = vmatprep.mubr.f32.mxu0 %v83
  %187 = vmatmul.mubr.f32.gmra.mrb[0].mxu0 %v82
  %v188 = vpop.f32.mrb[0].mxu0
  %v189 = vadd.f32 %v98, %v188
  %v190 = vpop.f32.mrb[0].mxu0
  %191 = vmatprep.mubr.f32.mxu0 %v87
  %192 = vmatmul.mubr.f32.gmra.mrb[0].mxu0 %v86
  %v193 = vpop.f32.mrb[0].mxu0
  %v194 = vadd.f32 %v98, %v193
  %v195 = vpop.f32.mrb[0].mxu0
  %196 = vmatprep.mubr.f32.mxu0 %v91
  %197 = vmatmul.mubr.f32.gmra.mrb[0].mxu0 %v90
  %v198 = vpop.f32.mrb[0].mxu0
  %v199 = vadd.f32 %v98, %v198
  %v200 = vpop.f32.mrb[0].mxu0
  %201 = vdwg.mxu0
  %202 = vmatprep.subr.mxu0 0.0
  %203 = vmatpush1.msra.mxu0 %v46
  %204 = vmatprep.subr.mxu0 0.0
  %205 = vmatpush1.msra.mxu0 %v47
  %206 = vmatprep.subr.mxu0 0.0
  %207 = vmatpush1.msra.mxu0 %v48
  %208 = vmatprep.subr.mxu0 0.0
  %209 = vmatpush1.msra.mxu0 %v49
  %210 = vmatprep.subr.mxu0 0.0
  %211 = vmatpush1.msra.mxu0 %v50
  %212 = vmatprep.subr.mxu0 0.0
  %213 = vmatpush1.msra.mxu0 %v51
  %214 = vmatprep.subr.mxu0 0.0
  %215 = vmatpush1.msra.mxu0 %v52
  %216 = vmatprep.subr.mxu0 0.0
  %217 = vmatpush1.msra.mxu0 %v53
  %218 = vmatprep.subr.mxu0 0.0
  %219 = vmatpush1.msra.mxu0 %v54
  %220 = vmatprep.subr.mxu0 0.0
  %221 = vmatpush1.msra.mxu0 %v55
  %222 = vmatprep.subr.mxu0 0.0
  %223 = vmatpush1.msra.mxu0 %v56
  %224 = vmatprep.subr.mxu0 0.0
  %225 = vmatpush1.msra.mxu0 %v57
  %226 = vmatprep.subr.mxu0 0.0
  %227 = vmatpush1.msra.mxu0 %v58
  %228 = vmatprep.subr.mxu0 0.0
  %229 = vmatpush1.msra.mxu0 %v59
  %230 = vmatprep.subr.mxu0 0.0
  %231 = vmatpush1.msra.mxu0 %v60
  %232 = vmatprep.subr.mxu0 0.0
  %233 = vmatpush1.msra.mxu0 %v61
  %234 = vmatprep.subr.mxu0 0.0
  %235 = vmatpush1.msra.mxu0 %v62
  %236 = vmatprep.subr.mxu0 0.0
  %237 = vmatpush1.msra.mxu0 %v63
  %238 = vmatprep.subr.mxu0 0.0
  %239 = vmatpush1.msra.mxu0 %v64
  %240 = vmatprep.subr.mxu0 0.0
  %241 = vmatpush1.msra.mxu0 %v65
  %242 = vmatprep.subr.mxu0 0.0
  %243 = vmatpush1.msra.mxu0 %v66
  %244 = vmatprep.subr.mxu0 0.0
  %245 = vmatpush1.msra.mxu0 %v67
  %246 = vmatprep.subr.mxu0 0.0
  %247 = vmatpush1.msra.mxu0 %v68
  %248 = vmatprep.subr.mxu0 0.0
  %249 = vmatpush1.msra.mxu0 %v69
  %250 = vmatprep.subr.mxu0 0.0
  %251 = vmatpush1.msra.mxu0 %v70
  %252 = vmatprep.subr.mxu0 0.0
  %253 = vmatpush1.msra.mxu0 %v71
  %254 = vmatprep.subr.mxu0 0.0
  %255 = vmatpush1.msra.mxu0 %v72
  %256 = vmatprep.subr.mxu0 0.0
  %257 = vmatpush1.msra.mxu0 %v73
  %258 = vmatprep.subr.mxu0 0.0
  %259 = vmatpush1.msra.mxu0 %v74
  %260 = vmatprep.subr.mxu0 0.0
  %261 = vmatpush1.msra.mxu0 %v75
  %262 = vmatprep.subr.mxu0 0.0
  %263 = vmatpush1.msra.mxu0 %v115
  %264 = vmatprep.subr.mxu0 0.0
  %265 = vmatpush1.msra.mxu0 0.0
  %266 = vmatprep.mubr.f32.mxu0 %v102
  %267 = vmatmul.mubr.f32.gmra.mrb[0].mxu0 %v80
  %v268 = vpop.f32.mrb[0].mxu0
  %v269 = vadd.f32 %v184, %v268
  %v270 = vpop.f32.mrb[0].mxu0
  %271 = vmatprep.mubr.f32.mxu0 %v105
  %272 = vmatmul.mubr.f32.gmra.mrb[0].mxu0 %v84
  %v273 = vpop.f32.mrb[0].mxu0
  %v274 = vadd.f32 %v189, %v273
  %v275 = vpop.f32.mrb[0].mxu0
  %276 = vmatprep.mubr.f32.mxu0 %v108
  %277 = vmatmul.mubr.f32.gmra.mrb[0].mxu0 %v88
  %v278 = vpop.f32.mrb[0].mxu0
  %v279 = vadd.f32 %v194, %v278
  %v280 = vpop.f32.mrb[0].mxu0
  %281 = vmatprep.mubr.f32.mxu0 %v111
  %282 = vmatmul.mubr.f32.gmra.mrb[0].mxu0 %v92
  %v283 = vpop.f32.mrb[0].mxu0
  %v284 = vadd.f32 %v199, %v283
  %v285 = vpop.f32.mrb[0].mxu0
  %286 = vdwg.mxu0
  %v287 = vmax.f32 %v269, 0.0
  %v288 = vmax.f32 %v274, 0.0
  %v289 = vmax.f32 %v279, 0.0
  %v290 = vmax.f32 %v284, 0.0
  %s291 = scalar_lea.vmem %s0, 128
  %v292 = vld [vmem:[%s291] sm:$0xff]
  %v293 = vld [vmem:[%s291 + $0x8] sm:$0xff]
  %v294 = vld [vmem:[%s291 + $0x10] sm:$0xff]
  %v295 = vld [vmem:[%s291 + $0x18] sm:$0xff]
  %v296 = vld [vmem:[%s291 + $0x20] sm:$0xff]
  %v297 = vld [vmem:[%s291 + $0x28] sm:$0xff]
  %v298 = vld [vmem:[%s291 + $0x30] sm:$0xff]
  %v299 = vld [vmem:[%s291 + $0x38] sm:$0xff]
  %v300 = vld [vmem:[%s291 + $0x40] sm:$0xff]
  %v301 = vld [vmem:[%s291 + $0x48] sm:$0xff]
  %v302 = vld [vmem:[%s291 + $0x50] sm:$0xff]
  %v303 = vld [vmem:[%s291 + $0x58] sm:$0xff]
  %v304 = vld [vmem:[%s291 + $0x60] sm:$0xff]
  %v305 = vld [vmem:[%s291 + $0x68] sm:$0xff]
  %v306 = vld [vmem:[%s291 + $0x70] sm:$0xff]
  %v307 = vld [vmem:[%s291 + $0x78] sm:$0xff]
  %v309 = vsel %vm100, %v295, 0
  %v312 = vsel %vm100, %v299, 0
  %v315 = vsel %vm100, %v303, 0
  %v318 = vsel %vm100, %v307, 0
  %320 = vmatprep.subr.mxu0 0.0
  %321 = vmatpush1.msra.mxu0 %v14
  %322 = vmatprep.subr.mxu0 0.0
  %323 = vmatpush1.msra.mxu0 %v15
  %324 = vmatprep.subr.mxu0 0.0
  %325 = vmatpush1.msra.mxu0 %v16
  %326 = vmatprep.subr.mxu0 0.0
  %327 = vmatpush1.msra.mxu0 %v17
  %328 = vmatprep.subr.mxu0 0.0
  %329 = vmatpush1.msra.mxu0 %v18
  %330 = vmatprep.subr.mxu0 0.0
  %331 = vmatpush1.msra.mxu0 %v19
  %332 = vmatprep.subr.mxu0 0.0
  %333 = vmatpush1.msra.mxu0 %v20
  %334 = vmatprep.subr.mxu0 0.0
  %335 = vmatpush1.msra.mxu0 %v21
  %336 = vmatprep.subr.mxu0 0.0
  %337 = vmatpush1.msra.mxu0 %v22
  %338 = vmatprep.subr.mxu0 0.0
  %339 = vmatpush1.msra.mxu0 %v23
  %340 = vmatprep.subr.mxu0 0.0
  %341 = vmatpush1.msra.mxu0 %v24
  %342 = vmatprep.subr.mxu0 0.0
  %343 = vmatpush1.msra.mxu0 %v25
  %344 = vmatprep.subr.mxu0 0.0
  %345 = vmatpush1.msra.mxu0 %v26
  %346 = vmatprep.subr.mxu0 0.0
  %347 = vmatpush1.msra.mxu0 %v27
  %348 = vmatprep.subr.mxu0 0.0
  %349 = vmatpush1.msra.mxu0 %v28
  %350 = vmatprep.subr.mxu0 0.0
  %351 = vmatpush1.msra.mxu0 %v29
  %352 = vmatprep.subr.mxu0 0.0
  %353 = vmatpush1.msra.mxu0 %v30
  %354 = vmatprep.subr.mxu0 0.0
  %355 = vmatpush1.msra.mxu0 %v31
  %356 = vmatprep.subr.mxu0 0.0
  %357 = vmatpush1.msra.mxu0 %v32
  %358 = vmatprep.subr.mxu0 0.0
  %359 = vmatpush1.msra.mxu0 %v33
  %360 = vmatprep.subr.mxu0 0.0
  %361 = vmatpush1.msra.mxu0 %v34
  %362 = vmatprep.subr.mxu0 0.0
  %363 = vmatpush1.msra.mxu0 %v35
  %364 = vmatprep.subr.mxu0 0.0
  %365 = vmatpush1.msra.mxu0 %v36
  %366 = vmatprep.subr.mxu0 0.0
  %367 = vmatpush1.msra.mxu0 %v37
  %368 = vmatprep.subr.mxu0 0.0
  %369 = vmatpush1.msra.mxu0 %v38
  %370 = vmatprep.subr.mxu0 0.0
  %371 = vmatpush1.msra.mxu0 %v39
  %372 = vmatprep.subr.mxu0 0.0
  %373 = vmatpush1.msra.mxu0 %v40
  %374 = vmatprep.subr.mxu0 0.0
  %375 = vmatpush1.msra.mxu0 %v41
  %376 = vmatprep.subr.mxu0 0.0
  %377 = vmatpush1.msra.mxu0 %v42
  %378 = vmatprep.subr.mxu0 0.0
  %379 = vmatpush1.msra.mxu0 %v43
  %380 = vmatprep.subr.mxu0 0.0
  %381 = vmatpush1.msra.mxu0 %v44
  %382 = vmatprep.subr.mxu0 0.0
  %383 = vmatpush1.msra.mxu0 %v45
  %384 = vmatprep.mubr.f32.mxu0 %v293
  %385 = vmatmul.mubr.f32.gmra.mrb[0].mxu0 %v292
  %v386 = vpop.f32.mrb[0].mxu0
  %v387 = vadd.f32 %v98, %v386
  %v388 = vpop.f32.mrb[0].mxu0
  %389 = vmatprep.mubr.f32.mxu0 %v297
  %390 = vmatmul.mubr.f32.gmra.mrb[0].mxu0 %v296
  %v391 = vpop.f32.mrb[0].mxu0
  %v392 = vadd.f32 %v98, %v391
  %v393 = vpop.f32.mrb[0].mxu0
  %394 = vmatprep.mubr.f32.mxu0 %v301
  %395 = vmatmul.mubr.f32.gmra.mrb[0].mxu0 %v300
  %v396 = vpop.f32.mrb[0].mxu0
  %v397 = vadd.f32 %v98, %v396
  %v398 = vpop.f32.mrb[0].mxu0
  %399 = vmatprep.mubr.f32.mxu0 %v305
  %400 = vmatmul.mubr.f32.gmra.mrb[0].mxu0 %v304
  %v401 = vpop.f32.mrb[0].mxu0
  %v402 = vadd.f32 %v98, %v401
  %v403 = vpop.f32.mrb[0].mxu0
  %404 = vdwg.mxu0
  %405 = vmatprep.subr.mxu0 0.0
  %406 = vmatpush1.msra.mxu0 %v46
  %407 = vmatprep.subr.mxu0 0.0
  %408 = vmatpush1.msra.mxu0 %v47
  %409 = vmatprep.subr.mxu0 0.0
  %410 = vmatpush1.msra.mxu0 %v48
  %411 = vmatprep.subr.mxu0 0.0
  %412 = vmatpush1.msra.mxu0 %v49
  %413 = vmatprep.subr.mxu0 0.0
  %414 = vmatpush1.msra.mxu0 %v50
  %415 = vmatprep.subr.mxu0 0.0
  %416 = vmatpush1.msra.mxu0 %v51
  %417 = vmatprep.subr.mxu0 0.0
  %418 = vmatpush1.msra.mxu0 %v52
  %419 = vmatprep.subr.mxu0 0.0
  %420 = vmatpush1.msra.mxu0 %v53
  %421 = vmatprep.subr.mxu0 0.0
  %422 = vmatpush1.msra.mxu0 %v54
  %423 = vmatprep.subr.mxu0 0.0
  %424 = vmatpush1.msra.mxu0 %v55
  %425 = vmatprep.subr.mxu0 0.0
  %426 = vmatpush1.msra.mxu0 %v56
  %427 = vmatprep.subr.mxu0 0.0
  %428 = vmatpush1.msra.mxu0 %v57
  %429 = vmatprep.subr.mxu0 0.0
  %430 = vmatpush1.msra.mxu0 %v58
  %431 = vmatprep.subr.mxu0 0.0
  %432 = vmatpush1.msra.mxu0 %v59
  %433 = vmatprep.subr.mxu0 0.0
  %434 = vmatpush1.msra.mxu0 %v60
  %435 = vmatprep.subr.mxu0 0.0
  %436 = vmatpush1.msra.mxu0 %v61
  %437 = vmatprep.subr.mxu0 0.0
  %438 = vmatpush1.msra.mxu0 %v62
  %439 = vmatprep.subr.mxu0 0.0
  %440 = vmatpush1.msra.mxu0 %v63
  %441 = vmatprep.subr.mxu0 0.0
  %442 = vmatpush1.msra.mxu0 %v64
  %443 = vmatprep.subr.mxu0 0.0
  %444 = vmatpush1.msra.mxu0 %v65
  %445 = vmatprep.subr.mxu0 0.0
  %446 = vmatpush1.msra.mxu0 %v66
  %447 = vmatprep.subr.mxu0 0.0
  %448 = vmatpush1.msra.mxu0 %v67
  %449 = vmatprep.subr.mxu0 0.0
  %450 = vmatpush1.msra.mxu0 %v68
  %451 = vmatprep.subr.mxu0 0.0
  %452 = vmatpush1.msra.mxu0 %v69
  %453 = vmatprep.subr.mxu0 0.0
  %454 = vmatpush1.msra.mxu0 %v70
  %455 = vmatprep.subr.mxu0 0.0
  %456 = vmatpush1.msra.mxu0 %v71
  %457 = vmatprep.subr.mxu0 0.0
  %458 = vmatpush1.msra.mxu0 %v72
  %459 = vmatprep.subr.mxu0 0.0
  %460 = vmatpush1.msra.mxu0 %v73
  %461 = vmatprep.subr.mxu0 0.0
  %462 = vmatpush1.msra.mxu0 %v74
  %463 = vmatprep.subr.mxu0 0.0
  %464 = vmatpush1.msra.mxu0 %v75
  %465 = vmatprep.subr.mxu0 0.0
  %466 = vmatpush1.msra.mxu0 %v115
  %467 = vmatprep.subr.mxu0 0.0
  %468 = vmatpush1.msra.mxu0 0.0
  %469 = vmatprep.mubr.f32.mxu0 %v309
  %470 = vmatmul.mubr.f32.gmra.mrb[0].mxu0 %v294
  %v471 = vpop.f32.mrb[0].mxu0
  %v472 = vadd.f32 %v387, %v471
  %v473 = vpop.f32.mrb[0].mxu0
  %474 = vmatprep.mubr.f32.mxu0 %v312
  %475 = vmatmul.mubr.f32.gmra.mrb[0].mxu0 %v298
  %v476 = vpop.f32.mrb[0].mxu0
  %v477 = vadd.f32 %v392, %v476
  %v478 = vpop.f32.mrb[0].mxu0
  %479 = vmatprep.mubr.f32.mxu0 %v315
  %480 = vmatmul.mubr.f32.gmra.mrb[0].mxu0 %v302
  %v481 = vpop.f32.mrb[0].mxu0
  %v482 = vadd.f32 %v397, %v481
  %v483 = vpop.f32.mrb[0].mxu0
  %484 = vmatprep.mubr.f32.mxu0 %v318
  %485 = vmatmul.mubr.f32.gmra.mrb[0].mxu0 %v306
  %v486 = vpop.f32.mrb[0].mxu0
  %v487 = vadd.f32 %v402, %v486
  %v488 = vpop.f32.mrb[0].mxu0
  %489 = vdwg.mxu0
  %v490 = vmax.f32 %v472, 0.0
  %v491 = vmax.f32 %v477, 0.0
  %v492 = vmax.f32 %v482, 0.0
  %v493 = vmax.f32 %v487, 0.0
  %v494 = vmax.f32 %v287, %v490
  %v495 = vmax.f32 %v288, %v491
  %v496 = vmax.f32 %v289, %v492
  %v497 = vmax.f32 %v290, %v493
  %s498 = scalar_lea.vmem %s0, 256
  %v499 = vld [vmem:[%s498] sm:$0xff]
  %v500 = vld [vmem:[%s498 + $0x8] sm:$0xff]
  %v501 = vld [vmem:[%s498 + $0x10] sm:$0xff]
  %v502 = vld [vmem:[%s498 + $0x18] sm:$0xff]
  %v503 = vld [vmem:[%s498 + $0x20] sm:$0xff]
  %v504 = vld [vmem:[%s498 + $0x28] sm:$0xff]
  %v505 = vld [vmem:[%s498 + $0x30] sm:$0xff]
  %v506 = vld [vmem:[%s498 + $0x38] sm:$0xff]
  %v507 = vld [vmem:[%s498 + $0x40] sm:$0xff]
  %v508 = vld [vmem:[%s498 + $0x48] sm:$0xff]
  %v509 = vld [vmem:[%s498 + $0x50] sm:$0xff]
  %v510 = vld [vmem:[%s498 + $0x58] sm:$0xff]
  %v511 = vld [vmem:[%s498 + $0x60] sm:$0xff]
  %v512 = vld [vmem:[%s498 + $0x68] sm:$0xff]
  %v513 = vld [vmem:[%s498 + $0x70] sm:$0xff]
  %v514 = vld [vmem:[%s498 + $0x78] sm:$0xff]
  %v516 = vsel %vm100, %v502, 0
  %v519 = vsel %vm100, %v506, 0
  %v522 = vsel %vm100, %v510, 0
  %v525 = vsel %vm100, %v514, 0
  %527 = vmatprep.subr.mxu0 0.0
  %528 = vmatpush1.msra.mxu0 %v14
  %529 = vmatprep.subr.mxu0 0.0
  %530 = vmatpush1.msra.mxu0 %v15
  %531 = vmatprep.subr.mxu0 0.0
  %532 = vmatpush1.msra.mxu0 %v16
  %533 = vmatprep.subr.mxu0 0.0
  %534 = vmatpush1.msra.mxu0 %v17
  %535 = vmatprep.subr.mxu0 0.0
  %536 = vmatpush1.msra.mxu0 %v18
  %537 = vmatprep.subr.mxu0 0.0
  %538 = vmatpush1.msra.mxu0 %v19
  %539 = vmatprep.subr.mxu0 0.0
  %540 = vmatpush1.msra.mxu0 %v20
  %541 = vmatprep.subr.mxu0 0.0
  %542 = vmatpush1.msra.mxu0 %v21
  %543 = vmatprep.subr.mxu0 0.0
  %544 = vmatpush1.msra.mxu0 %v22
  %545 = vmatprep.subr.mxu0 0.0
  %546 = vmatpush1.msra.mxu0 %v23
  %547 = vmatprep.subr.mxu0 0.0
  %548 = vmatpush1.msra.mxu0 %v24
  %549 = vmatprep.subr.mxu0 0.0
  %550 = vmatpush1.msra.mxu0 %v25
  %551 = vmatprep.subr.mxu0 0.0
  %552 = vmatpush1.msra.mxu0 %v26
  %553 = vmatprep.subr.mxu0 0.0
  %554 = vmatpush1.msra.mxu0 %v27
  %555 = vmatprep.subr.mxu0 0.0
  %556 = vmatpush1.msra.mxu0 %v28
  %557 = vmatprep.subr.mxu0 0.0
  %558 = vmatpush1.msra.mxu0 %v29
  %559 = vmatprep.subr.mxu0 0.0
  %560 = vmatpush1.msra.mxu0 %v30
  %561 = vmatprep.subr.mxu0 0.0
  %562 = vmatpush1.msra.mxu0 %v31
  %563 = vmatprep.subr.mxu0 0.0
  %564 = vmatpush1.msra.mxu0 %v32
  %565 = vmatprep.subr.mxu0 0.0
  %566 = vmatpush1.msra.mxu0 %v33
  %567 = vmatprep.subr.mxu0 0.0
  %568 = vmatpush1.msra.mxu0 %v34
  %569 = vmatprep.subr.mxu0 0.0
  %570 = vmatpush1.msra.mxu0 %v35
  %571 = vmatprep.subr.mxu0 0.0
  %572 = vmatpush1.msra.mxu0 %v36
  %573 = vmatprep.subr.mxu0 0.0
  %574 = vmatpush1.msra.mxu0 %v37
  %575 = vmatprep.subr.mxu0 0.0
  %576 = vmatpush1.msra.mxu0 %v38
  %577 = vmatprep.subr.mxu0 0.0
  %578 = vmatpush1.msra.mxu0 %v39
  %579 = vmatprep.subr.mxu0 0.0
  %580 = vmatpush1.msra.mxu0 %v40
  %581 = vmatprep.subr.mxu0 0.0
  %582 = vmatpush1.msra.mxu0 %v41
  %583 = vmatprep.subr.mxu0 0.0
  %584 = vmatpush1.msra.mxu0 %v42
  %585 = vmatprep.subr.mxu0 0.0
  %586 = vmatpush1.msra.mxu0 %v43
  %587 = vmatprep.subr.mxu0 0.0
  %588 = vmatpush1.msra.mxu0 %v44
  %589 = vmatprep.subr.mxu0 0.0
  %590 = vmatpush1.msra.mxu0 %v45
  %591 = vmatprep.mubr.f32.mxu0 %v500
  %592 = vmatmul.mubr.f32.gmra.mrb[0].mxu0 %v499
  %v593 = vpop.f32.mrb[0].mxu0
  %v594 = vadd.f32 %v98, %v593
  %v595 = vpop.f32.mrb[0].mxu0
  %596 = vmatprep.mubr.f32.mxu0 %v504
  %597 = vmatmul.mubr.f32.gmra.mrb[0].mxu0 %v503
  %v598 = vpop.f32.mrb[0].mxu0
  %v599 = vadd.f32 %v98, %v598
  %v600 = vpop.f32.mrb[0].mxu0
  %601 = vmatprep.mubr.f32.mxu0 %v508
  %602 = vmatmul.mubr.f32.gmra.mrb[0].mxu0 %v507
  %v603 = vpop.f32.mrb[0].mxu0
  %v604 = vadd.f32 %v98, %v603
  %v605 = vpop.f32.mrb[0].mxu0
  %606 = vmatprep.mubr.f32.mxu0 %v512
  %607 = vmatmul.mubr.f32.gmra.mrb[0].mxu0 %v511
  %v608 = vpop.f32.mrb[0].mxu0
  %v609 = vadd.f32 %v98, %v608
  %v610 = vpop.f32.mrb[0].mxu0
  %611 = vdwg.mxu0
  %612 = vmatprep.subr.mxu0 0.0
  %613 = vmatpush1.msra.mxu0 %v46
  %614 = vmatprep.subr.mxu0 0.0
  %615 = vmatpush1.msra.mxu0 %v47
  %616 = vmatprep.subr.mxu0 0.0
  %617 = vmatpush1.msra.mxu0 %v48
  %618 = vmatprep.subr.mxu0 0.0
  %619 = vmatpush1.msra.mxu0 %v49
  %620 = vmatprep.subr.mxu0 0.0
  %621 = vmatpush1.msra.mxu0 %v50
  %622 = vmatprep.subr.mxu0 0.0
  %623 = vmatpush1.msra.mxu0 %v51
  %624 = vmatprep.subr.mxu0 0.0
  %625 = vmatpush1.msra.mxu0 %v52
  %626 = vmatprep.subr.mxu0 0.0
  %627 = vmatpush1.msra.mxu0 %v53
  %628 = vmatprep.subr.mxu0 0.0
  %629 = vmatpush1.msra.mxu0 %v54
  %630 = vmatprep.subr.mxu0 0.0
  %631 = vmatpush1.msra.mxu0 %v55
  %632 = vmatprep.subr.mxu0 0.0
  %633 = vmatpush1.msra.mxu0 %v56
  %634 = vmatprep.subr.mxu0 0.0
  %635 = vmatpush1.msra.mxu0 %v57
  %636 = vmatprep.subr.mxu0 0.0
  %637 = vmatpush1.msra.mxu0 %v58
  %638 = vmatprep.subr.mxu0 0.0
  %639 = vmatpush1.msra.mxu0 %v59
  %640 = vmatprep.subr.mxu0 0.0
  %641 = vmatpush1.msra.mxu0 %v60
  %642 = vmatprep.subr.mxu0 0.0
  %643 = vmatpush1.msra.mxu0 %v61
  %644 = vmatprep.subr.mxu0 0.0
  %645 = vmatpush1.msra.mxu0 %v62
  %646 = vmatprep.subr.mxu0 0.0
  %647 = vmatpush1.msra.mxu0 %v63
  %648 = vmatprep.subr.mxu0 0.0
  %649 = vmatpush1.msra.mxu0 %v64
  %650 = vmatprep.subr.mxu0 0.0
  %651 = vmatpush1.msra.mxu0 %v65
  %652 = vmatprep.subr.mxu0 0.0
  %653 = vmatpush1.msra.mxu0 %v66
  %654 = vmatprep.subr.mxu0 0.0
  %655 = vmatpush1.msra.mxu0 %v67
  %656 = vmatprep.subr.mxu0 0.0
  %657 = vmatpush1.msra.mxu0 %v68
  %658 = vmatprep.subr.mxu0 0.0
  %659 = vmatpush1.msra.mxu0 %v69
  %660 = vmatprep.subr.mxu0 0.0
  %661 = vmatpush1.msra.mxu0 %v70
  %662 = vmatprep.subr.mxu0 0.0
  %663 = vmatpush1.msra.mxu0 %v71
  %664 = vmatprep.subr.mxu0 0.0
  %665 = vmatpush1.msra.mxu0 %v72
  %666 = vmatprep.subr.mxu0 0.0
  %667 = vmatpush1.msra.mxu0 %v73
  %668 = vmatprep.subr.mxu0 0.0
  %669 = vmatpush1.msra.mxu0 %v74
  %670 = vmatprep.subr.mxu0 0.0
  %671 = vmatpush1.msra.mxu0 %v75
  %672 = vmatprep.subr.mxu0 0.0
  %673 = vmatpush1.msra.mxu0 %v115
  %674 = vmatprep.subr.mxu0 0.0
  %675 = vmatpush1.msra.mxu0 0.0
  %676 = vmatprep.mubr.f32.mxu0 %v516
  %677 = vmatmul.mubr.f32.gmra.mrb[0].mxu0 %v501
  %v678 = vpop.f32.mrb[0].mxu0
  %v679 = vadd.f32 %v594, %v678
  %v680 = vpop.f32.mrb[0].mxu0
  %681 = vmatprep.mubr.f32.mxu0 %v519
  %682 = vmatmul.mubr.f32.gmra.mrb[0].mxu0 %v505
  %v683 = vpop.f32.mrb[0].mxu0
  %v684 = vadd.f32 %v599, %v683
  %v685 = vpop.f32.mrb[0].mxu0
  %686 = vmatprep.mubr.f32.mxu0 %v522
  %687 = vmatmul.mubr.f32.gmra.mrb[0].mxu0 %v509
  %v688 = vpop.f32.mrb[0].mxu0
  %v689 = vadd.f32 %v604, %v688
  %v690 = vpop.f32.mrb[0].mxu0
  %691 = vmatprep.mubr.f32.mxu0 %v525
  %692 = vmatmul.mubr.f32.gmra.mrb[0].mxu0 %v513
  %v693 = vpop.f32.mrb[0].mxu0
  %v694 = vadd.f32 %v609, %v693
  %v695 = vpop.f32.mrb[0].mxu0
  %696 = vdwg.mxu0
  %v697 = vmax.f32 %v679, 0.0
  %v698 = vmax.f32 %v684, 0.0
  %v699 = vmax.f32 %v689, 0.0
  %v700 = vmax.f32 %v694, 0.0
  %s701 = scalar_lea.vmem %s0, 384
  %v702 = vld [vmem:[%s701] sm:$0xff]
  %v703 = vld [vmem:[%s701 + $0x8] sm:$0xff]
  %v704 = vld [vmem:[%s701 + $0x10] sm:$0xff]
  %v705 = vld [vmem:[%s701 + $0x18] sm:$0xff]
  %v706 = vld [vmem:[%s701 + $0x20] sm:$0xff]
  %v707 = vld [vmem:[%s701 + $0x28] sm:$0xff]
  %v708 = vld [vmem:[%s701 + $0x30] sm:$0xff]
  %v709 = vld [vmem:[%s701 + $0x38] sm:$0xff]
  %v710 = vld [vmem:[%s701 + $0x40] sm:$0xff]
  %v711 = vld [vmem:[%s701 + $0x48] sm:$0xff]
  %v712 = vld [vmem:[%s701 + $0x50] sm:$0xff]
  %v713 = vld [vmem:[%s701 + $0x58] sm:$0xff]
  %v714 = vld [vmem:[%s701 + $0x60] sm:$0xff]
  %v715 = vld [vmem:[%s701 + $0x68] sm:$0xff]
  %v716 = vld [vmem:[%s701 + $0x70] sm:$0xff]
  %v717 = vld [vmem:[%s701 + $0x78] sm:$0xff]
  %v719 = vsel %vm100, %v705, 0
  %v722 = vsel %vm100, %v709, 0
  %v725 = vsel %vm100, %v713, 0
  %v728 = vsel %vm100, %v717, 0
  %730 = vmatprep.subr.mxu0 0.0
  %731 = vmatpush1.msra.mxu0 %v14
  %732 = vmatprep.subr.mxu0 0.0
  %733 = vmatpush1.msra.mxu0 %v15
  %734 = vmatprep.subr.mxu0 0.0
  %735 = vmatpush1.msra.mxu0 %v16
  %736 = vmatprep.subr.mxu0 0.0
  %737 = vmatpush1.msra.mxu0 %v17
  %738 = vmatprep.subr.mxu0 0.0
  %739 = vmatpush1.msra.mxu0 %v18
  %740 = vmatprep.subr.mxu0 0.0
  %741 = vmatpush1.msra.mxu0 %v19
  %742 = vmatprep.subr.mxu0 0.0
  %743 = vmatpush1.msra.mxu0 %v20
  %744 = vmatprep.subr.mxu0 0.0
  %745 = vmatpush1.msra.mxu0 %v21
  %746 = vmatprep.subr.mxu0 0.0
  %747 = vmatpush1.msra.mxu0 %v22
  %748 = vmatprep.subr.mxu0 0.0
  %749 = vmatpush1.msra.mxu0 %v23
  %750 = vmatprep.subr.mxu0 0.0
  %751 = vmatpush1.msra.mxu0 %v24
  %752 = vmatprep.subr.mxu0 0.0
  %753 = vmatpush1.msra.mxu0 %v25
  %754 = vmatprep.subr.mxu0 0.0
  %755 = vmatpush1.msra.mxu0 %v26
  %756 = vmatprep.subr.mxu0 0.0
  %757 = vmatpush1.msra.mxu0 %v27
  %758 = vmatprep.subr.mxu0 0.0
  %759 = vmatpush1.msra.mxu0 %v28
  %760 = vmatprep.subr.mxu0 0.0
  %761 = vmatpush1.msra.mxu0 %v29
  %762 = vmatprep.subr.mxu0 0.0
  %763 = vmatpush1.msra.mxu0 %v30
  %764 = vmatprep.subr.mxu0 0.0
  %765 = vmatpush1.msra.mxu0 %v31
  %766 = vmatprep.subr.mxu0 0.0
  %767 = vmatpush1.msra.mxu0 %v32
  %768 = vmatprep.subr.mxu0 0.0
  %769 = vmatpush1.msra.mxu0 %v33
  %770 = vmatprep.subr.mxu0 0.0
  %771 = vmatpush1.msra.mxu0 %v34
  %772 = vmatprep.subr.mxu0 0.0
  %773 = vmatpush1.msra.mxu0 %v35
  %774 = vmatprep.subr.mxu0 0.0
  %775 = vmatpush1.msra.mxu0 %v36
  %776 = vmatprep.subr.mxu0 0.0
  %777 = vmatpush1.msra.mxu0 %v37
  %778 = vmatprep.subr.mxu0 0.0
  %779 = vmatpush1.msra.mxu0 %v38
  %780 = vmatprep.subr.mxu0 0.0
  %781 = vmatpush1.msra.mxu0 %v39
  %782 = vmatprep.subr.mxu0 0.0
  %783 = vmatpush1.msra.mxu0 %v40
  %784 = vmatprep.subr.mxu0 0.0
  %785 = vmatpush1.msra.mxu0 %v41
  %786 = vmatprep.subr.mxu0 0.0
  %787 = vmatpush1.msra.mxu0 %v42
  %788 = vmatprep.subr.mxu0 0.0
  %789 = vmatpush1.msra.mxu0 %v43
  %790 = vmatprep.subr.mxu0 0.0
  %791 = vmatpush1.msra.mxu0 %v44
  %792 = vmatprep.subr.mxu0 0.0
  %793 = vmatpush1.msra.mxu0 %v45
  %794 = vmatprep.mubr.f32.mxu0 %v703
  %795 = vmatmul.mubr.f32.gmra.mrb[0].mxu0 %v702
  %v796 = vpop.f32.mrb[0].mxu0
  %v797 = vadd.f32 %v98, %v796
  %v798 = vpop.f32.mrb[0].mxu0
  %799 = vmatprep.mubr.f32.mxu0 %v707
  %800 = vmatmul.mubr.f32.gmra.mrb[0].mxu0 %v706
  %v801 = vpop.f32.mrb[0].mxu0
  %v802 = vadd.f32 %v98, %v801
  %v803 = vpop.f32.mrb[0].mxu0
  %804 = vmatprep.mubr.f32.mxu0 %v711
  %805 = vmatmul.mubr.f32.gmra.mrb[0].mxu0 %v710
  %v806 = vpop.f32.mrb[0].mxu0
  %v807 = vadd.f32 %v98, %v806
  %v808 = vpop.f32.mrb[0].mxu0
  %809 = vmatprep.mubr.f32.mxu0 %v715
  %810 = vmatmul.mubr.f32.gmra.mrb[0].mxu0 %v714
  %v811 = vpop.f32.mrb[0].mxu0
  %v812 = vadd.f32 %v98, %v811
  %v813 = vpop.f32.mrb[0].mxu0
  %814 = vdwg.mxu0
  %815 = vmatprep.subr.mxu0 0.0
  %816 = vmatpush1.msra.mxu0 %v46
  %817 = vmatprep.subr.mxu0 0.0
  %818 = vmatpush1.msra.mxu0 %v47
  %819 = vmatprep.subr.mxu0 0.0
  %820 = vmatpush1.msra.mxu0 %v48
  %821 = vmatprep.subr.mxu0 0.0
  %822 = vmatpush1.msra.mxu0 %v49
  %823 = vmatprep.subr.mxu0 0.0
  %824 = vmatpush1.msra.mxu0 %v50
  %825 = vmatprep.subr.mxu0 0.0
  %826 = vmatpush1.msra.mxu0 %v51
  %827 = vmatprep.subr.mxu0 0.0
  %828 = vmatpush1.msra.mxu0 %v52
  %829 = vmatprep.subr.mxu0 0.0
  %830 = vmatpush1.msra.mxu0 %v53
  %831 = vmatprep.subr.mxu0 0.0
  %832 = vmatpush1.msra.mxu0 %v54
  %833 = vmatprep.subr.mxu0 0.0
  %834 = vmatpush1.msra.mxu0 %v55
  %835 = vmatprep.subr.mxu0 0.0
  %836 = vmatpush1.msra.mxu0 %v56
  %837 = vmatprep.subr.mxu0 0.0
  %838 = vmatpush1.msra.mxu0 %v57
  %839 = vmatprep.subr.mxu0 0.0
  %840 = vmatpush1.msra.mxu0 %v58
  %841 = vmatprep.subr.mxu0 0.0
  %842 = vmatpush1.msra.mxu0 %v59
  %843 = vmatprep.subr.mxu0 0.0
  %844 = vmatpush1.msra.mxu0 %v60
  %845 = vmatprep.subr.mxu0 0.0
  %846 = vmatpush1.msra.mxu0 %v61
  %847 = vmatprep.subr.mxu0 0.0
  %848 = vmatpush1.msra.mxu0 %v62
  %849 = vmatprep.subr.mxu0 0.0
  %850 = vmatpush1.msra.mxu0 %v63
  %851 = vmatprep.subr.mxu0 0.0
  %852 = vmatpush1.msra.mxu0 %v64
  %853 = vmatprep.subr.mxu0 0.0
  %854 = vmatpush1.msra.mxu0 %v65
  %855 = vmatprep.subr.mxu0 0.0
  %856 = vmatpush1.msra.mxu0 %v66
  %857 = vmatprep.subr.mxu0 0.0
  %858 = vmatpush1.msra.mxu0 %v67
  %859 = vmatprep.subr.mxu0 0.0
  %860 = vmatpush1.msra.mxu0 %v68
  %861 = vmatprep.subr.mxu0 0.0
  %862 = vmatpush1.msra.mxu0 %v69
  %863 = vmatprep.subr.mxu0 0.0
  %864 = vmatpush1.msra.mxu0 %v70
  %865 = vmatprep.subr.mxu0 0.0
  %866 = vmatpush1.msra.mxu0 %v71
  %867 = vmatprep.subr.mxu0 0.0
  %868 = vmatpush1.msra.mxu0 %v72
  %869 = vmatprep.subr.mxu0 0.0
  %870 = vmatpush1.msra.mxu0 %v73
  %871 = vmatprep.subr.mxu0 0.0
  %872 = vmatpush1.msra.mxu0 %v74
  %873 = vmatprep.subr.mxu0 0.0
  %874 = vmatpush1.msra.mxu0 %v75
  %875 = vmatprep.subr.mxu0 0.0
  %876 = vmatpush1.msra.mxu0 %v115
  %877 = vmatprep.subr.mxu0 0.0
  %878 = vmatpush1.msra.mxu0 0.0
  %879 = vmatprep.mubr.f32.mxu0 %v719
  %880 = vmatmul.mubr.f32.gmra.mrb[0].mxu0 %v704
  %v881 = vpop.f32.mrb[0].mxu0
  %v882 = vadd.f32 %v797, %v881
  %v883 = vpop.f32.mrb[0].mxu0
  %884 = vmatprep.mubr.f32.mxu0 %v722
  %885 = vmatmul.mubr.f32.gmra.mrb[0].mxu0 %v708
  %v886 = vpop.f32.mrb[0].mxu0
  %v887 = vadd.f32 %v802, %v886
  %v888 = vpop.f32.mrb[0].mxu0
  %889 = vmatprep.mubr.f32.mxu0 %v725
  %890 = vmatmul.mubr.f32.gmra.mrb[0].mxu0 %v712
  %v891 = vpop.f32.mrb[0].mxu0
  %v892 = vadd.f32 %v807, %v891
  %v893 = vpop.f32.mrb[0].mxu0
  %894 = vmatprep.mubr.f32.mxu0 %v728
  %895 = vmatmul.mubr.f32.gmra.mrb[0].mxu0 %v716
  %v896 = vpop.f32.mrb[0].mxu0
  %v897 = vadd.f32 %v812, %v896
  %v898 = vpop.f32.mrb[0].mxu0
  %899 = vdwg.mxu0
  %v900 = vmax.f32 %v882, 0.0
  %v901 = vmax.f32 %v887, 0.0
  %v902 = vmax.f32 %v892, 0.0
  %v903 = vmax.f32 %v897, 0.0
  %v904 = vmax.f32 %v697, %v900
  %v905 = vmax.f32 %v698, %v901
  %v906 = vmax.f32 %v699, %v902
  %v907 = vmax.f32 %v700, %v903
  %v908 = vmax.f32 %v494, %v904
  %v909 = vmax.f32 %v495, %v905
  %v910 = vmax.f32 %v496, %v906
  %v911 = vmax.f32 %v497, %v907
  %vm912 = vcmask 408576
  %913 = vst.msk [vmem:[%s3] sm:$0xff] %vm912, %v908
  %914 = vst.msk [vmem:[%s3 + $0x8] sm:$0xff] %vm912, %v909
  %915 = vst.msk [vmem:[%s3 + $0x10] sm:$0xff] %vm912, %v910
  %916 = vst.msk [vmem:[%s3 + $0x18] sm:$0xff] %vm912, %v911
  // Predicated region
  $region14: #{forward.5} parent=0 // pred_check
    _
  $region15: #{forward.5} parent=0 // pred_check_branch
    %918 = sbr.rel (0) target = $region17
  $region16: #{forward.5} parent=0 // pred_region
    _
  $region17: #{forward.5} parent=0 // pred_fallthru
    _
  // Predicated region
  $region18: #{forward.5} parent=0 // pred_check
    _
  $region19: #{forward.5} parent=0 // pred_check_branch
    %920 = sbr.rel (0) target = $region21
  $region20: #{forward.5} parent=0 // pred_region
    _
  $region21: #{forward.5} parent=0 // pred_fallthru
    _

// kernel: forward.6
$region0: #{forward.6}
  #allocation0 [shape = 'u32[]', space=smem, size = 0x4, offset = 0x4, fixed_abs, tag = 'smem constant byte address 0x4 - core index']
  #allocation1 [shape = 'u32[144,128]{1,0:T(1,128)}', space=vmem, size = 0x12000, scoped, tag = 'internal scratch']
  %s0 = inlined_call_operand.vmem [shape: f32[2,800], index: 0, kind: input, shape index: {}]
  %s1 = inlined_call_operand.vmem [shape: f32[800,500], index: 1, kind: input, shape index: {}]
  %s2 = inlined_call_operand.vmem [shape: f32[1,500], index: 2, kind: input, shape index: {}]
  %s3 = inlined_call_operand.vmem [shape: f32[2,500], index: 3, kind: output, shape index: {}]
  %s4 = sld [smem:[#allocation0]]
  $region22: #{forward.6} parent=0
    _
  %s6 = ssub.s32 1, %s4
  %s7 = scalar_select 0, %s6, %s4
  // Predicated region
  $region2: #{forward.6} parent=0 // pred_check
    _
  $region3: #{forward.6} parent=0 // pred_check_branch
    %9 = sbr.rel (0) target = $region5
  $region4: #{forward.6} parent=0 // pred_region
    _
  $region5: #{forward.6} parent=0 // pred_fallthru
    _
  // Predicated region
  $region6: #{forward.6} parent=0 // pred_check
    _
  $region7: #{forward.6} parent=0 // pred_check_branch
    %11 = sbr.rel (0) target = $region9
  $region8: #{forward.6} parent=0 // pred_region
    _
  $region9: #{forward.6} parent=0 // pred_fallthru
    _
  // Predicated region
  $region10: #{forward.6} parent=0 // pred_check
    _
  $region11: #{forward.6} parent=0 // pred_check_branch
    %13 = sbr.rel (0) target = $region13
  $region12: #{forward.6} parent=0 // pred_region
    _
  $region13: #{forward.6} parent=0 // pred_fallthru
    _
  %v14 = vld [vmem:[%s0] sm:$0xff]
  %v15 = vld [vmem:[%s0 + $0x8] sm:$0x3f]
  %v16 = vld [vmem:[%s1] sm:$0xff]
  %v17 = vld [vmem:[%s1 + $0x8] sm:$0xff]
  %v18 = vld [vmem:[%s1 + $0x10] sm:$0xff]
  %v19 = vld [vmem:[%s1 + $0x18] sm:$0xff]
  %v20 = vld [vmem:[%s1 + $0x20] sm:$0xff]
  %v21 = vld [vmem:[%s1 + $0x28] sm:$0xff]
  %v22 = vld [vmem:[%s1 + $0x30] sm:$0xff]
  %v23 = vld [vmem:[%s1 + $0x38] sm:$0xff]
  %v24 = vld [vmem:[%s1 + $0x40] sm:$0xff]
  %v25 = vld [vmem:[%s1 + $0x48] sm:$0xff]
  %v26 = vld [vmem:[%s1 + $0x50] sm:$0xff]
  %v27 = vld [vmem:[%s1 + $0x58] sm:$0xff]
  %v28 = vld [vmem:[%s1 + $0x60] sm:$0xff]
  %v29 = vld [vmem:[%s1 + $0x68] sm:$0xff]
  %v30 = vld [vmem:[%s1 + $0x70] sm:$0xff]
  %v31 = vld [vmem:[%s1 + $0x78] sm:$0xff]
  %v32 = vld [vmem:[%s1 + $0x80] sm:$0xff]
  %v33 = vld [vmem:[%s1 + $0x88] sm:$0xff]
  %v34 = vld [vmem:[%s1 + $0x90] sm:$0xff]
  %v35 = vld [vmem:[%s1 + $0x98] sm:$0xff]
  %v36 = vld [vmem:[%s1 + $0xa0] sm:$0xff]
  %v37 = vld [vmem:[%s1 + $0xa8] sm:$0xff]
  %v38 = vld [vmem:[%s1 + $0xb0] sm:$0xff]
  %v39 = vld [vmem:[%s1 + $0xb8] sm:$0xff]
  %v40 = vld [vmem:[%s1 + $0xc0] sm:$0xff]
  %v41 = vld [vmem:[%s1 + $0xc8] sm:$0xff]
  %v42 = vld [vmem:[%s1 + $0xd0] sm:$0xff]
  %v43 = vld [vmem:[%s1 + $0xd8] sm:$0xff]
  %v44 = vld [vmem:[%s1 + $0xe0] sm:$0xff]
  %v45 = vld [vmem:[%s1 + $0xe8] sm:$0xff]
  %v46 = vld [vmem:[%s1 + $0xf0] sm:$0xff]
  %v47 = vld [vmem:[%s1 + $0xf8] sm:$0xff]
  %v48 = vld [vmem:[%s1 + $0x100] sm:$0xff]
  %v49 = vld [vmem:[%s1 + $0x108] sm:$0xff]
  %v50 = vld [vmem:[%s1 + $0x110] sm:$0xff]
  %v51 = vld [vmem:[%s1 + $0x118] sm:$0xff]
  %v52 = vld [vmem:[%s1 + $0x120] sm:$0xff]
  %v53 = vld [vmem:[%s1 + $0x128] sm:$0xff]
  %v54 = vld [vmem:[%s1 + $0x130] sm:$0xff]
  %v55 = vld [vmem:[%s1 + $0x138] sm:$0xff]
  %v56 = vld [vmem:[%s1 + $0x140] sm:$0xff]
  %v57 = vld [vmem:[%s1 + $0x148] sm:$0xff]
  %v58 = vld [vmem:[%s1 + $0x150] sm:$0xff]
  %v59 = vld [vmem:[%s1 + $0x158] sm:$0xff]
  %v60 = vld [vmem:[%s1 + $0x160] sm:$0xff]
  %v61 = vld [vmem:[%s1 + $0x168] sm:$0xff]
  %v62 = vld [vmem:[%s1 + $0x170] sm:$0xff]
  %v63 = vld [vmem:[%s1 + $0x178] sm:$0xff]
  %v64 = vld [vmem:[%s1 + $0x180] sm:$0xff]
  %v65 = vld [vmem:[%s1 + $0x188] sm:$0xff]
  %v66 = vld [vmem:[%s1 + $0x190] sm:$0xff]
  %v67 = vld [vmem:[%s1 + $0x198] sm:$0xff]
  %v68 = vld [vmem:[%s1 + $0x1a0] sm:$0xff]
  %v69 = vld [vmem:[%s1 + $0x1a8] sm:$0xff]
  %v70 = vld [vmem:[%s1 + $0x1b0] sm:$0xff]
  %v71 = vld [vmem:[%s1 + $0x1b8] sm:$0xff]
  %v72 = vld [vmem:[%s1 + $0x1c0] sm:$0xff]
  %v73 = vld [vmem:[%s1 + $0x1c8] sm:$0xff]
  %v74 = vld [vmem:[%s1 + $0x1d0] sm:$0xff]
  %v75 = vld [vmem:[%s1 + $0x1d8] sm:$0xff]
  %v76 = vld [vmem:[%s1 + $0x1e0] sm:$0xff]
  %v77 = vld [vmem:[%s1 + $0x1e8] sm:$0xff]
  %v78 = vld [vmem:[%s1 + $0x1f0] sm:$0xff]
  %v79 = vld [vmem:[%s1 + $0x1f8] sm:$0xff]
  %v80 = vld [vmem:[%s1 + $0x200] sm:$0xff]
  %v81 = vld [vmem:[%s1 + $0x208] sm:$0xff]
  %v82 = vld [vmem:[%s1 + $0x210] sm:$0xff]
  %v83 = vld [vmem:[%s1 + $0x218] sm:$0xff]
  %v84 = vld [vmem:[%s1 + $0x220] sm:$0xff]
  %v85 = vld [vmem:[%s1 + $0x228] sm:$0xff]
  %v86 = vld [vmem:[%s1 + $0x230] sm:$0xff]
  %v87 = vld [vmem:[%s1 + $0x238] sm:$0xff]
  %v88 = vld [vmem:[%s1 + $0x240] sm:$0xff]
  %v89 = vld [vmem:[%s1 + $0x248] sm:$0xff]
  %v90 = vld [vmem:[%s1 + $0x250] sm:$0xff]
  %v91 = vld [vmem:[%s1 + $0x258] sm:$0xff]
  %v92 = vld [vmem:[%s1 + $0x260] sm:$0xff]
  %v93 = vld [vmem:[%s1 + $0x268] sm:$0xff]
  %v94 = vld [vmem:[%s1 + $0x270] sm:$0xff]
  %v95 = vld [vmem:[%s1 + $0x278] sm:$0xff]
  %v96 = vld [vmem:[%s1 + $0x280] sm:$0xff]
  %v97 = vld [vmem:[%s1 + $0x288] sm:$0xff]
  %v98 = vld [vmem:[%s1 + $0x290] sm:$0xff]
  %v99 = vld [vmem:[%s1 + $0x298] sm:$0xff]
  %v100 = vld [vmem:[%s1 + $0x2a0] sm:$0xff]
  %v101 = vld [vmem:[%s1 + $0x2a8] sm:$0xff]
  %v102 = vld [vmem:[%s1 + $0x2b0] sm:$0xff]
  %v103 = vld [vmem:[%s1 + $0x2b8] sm:$0xff]
  %v104 = vld [vmem:[%s1 + $0x2c0] sm:$0xff]
  %v105 = vld [vmem:[%s1 + $0x2c8] sm:$0xff]
  %v106 = vld [vmem:[%s1 + $0x2d0] sm:$0xff]
  %v107 = vld [vmem:[%s1 + $0x2d8] sm:$0xff]
  %v108 = vld [vmem:[%s1 + $0x2e0] sm:$0xff]
  %v109 = vld [vmem:[%s1 + $0x2e8] sm:$0xff]
  %v110 = vld [vmem:[%s1 + $0x2f0] sm:$0xff]
  %v111 = vld [vmem:[%s1 + $0x2f8] sm:$0xff]
  %v112 = vld [vmem:[%s1 + $0x300] sm:$0xff]
  %v113 = vld [vmem:[%s1 + $0x308] sm:$0xff]
  %v114 = vld [vmem:[%s1 + $0x310] sm:$0xff]
  %v115 = vld [vmem:[%s1 + $0x318] sm:$0xff]
  %v116 = vld [vmem:[%s1 + $0x320] sm:$0xff]
  %v117 = vld [vmem:[%s1 + $0x328] sm:$0xff]
  %v118 = vld [vmem:[%s1 + $0x330] sm:$0xff]
  %v119 = vld [vmem:[%s1 + $0x338] sm:$0xff]
  %v120 = vld [vmem:[%s1 + $0x340] sm:$0xff]
  %v121 = vld [vmem:[%s1 + $0x348] sm:$0xff]
  %v122 = vld [vmem:[%s1 + $0x350] sm:$0xff]
  %v123 = vld [vmem:[%s1 + $0x358] sm:$0xff]
  %v124 = vld [vmem:[%s1 + $0x360] sm:$0xff]
  %v125 = vld [vmem:[%s1 + $0x368] sm:$0xff]
  %v126 = vld [vmem:[%s1 + $0x370] sm:$0xff]
  %v127 = vld [vmem:[%s1 + $0x378] sm:$0xff]
  %v128 = vld [vmem:[%s1 + $0x380] sm:$0xff]
  %v129 = vld [vmem:[%s1 + $0x388] sm:$0xff]
  %v130 = vld [vmem:[%s1 + $0x390] sm:$0xff]
  %v131 = vld [vmem:[%s1 + $0x398] sm:$0xff]
  %v132 = vld [vmem:[%s1 + $0x3a0] sm:$0xff]
  %v133 = vld [vmem:[%s1 + $0x3a8] sm:$0xff]
  %v134 = vld [vmem:[%s1 + $0x3b0] sm:$0xff]
  %v135 = vld [vmem:[%s1 + $0x3b8] sm:$0xff]
  %v136 = vld [vmem:[%s1 + $0x3c0] sm:$0xff]
  %v137 = vld [vmem:[%s1 + $0x3c8] sm:$0xff]
  %v138 = vld [vmem:[%s1 + $0x3d0] sm:$0xff]
  %v139 = vld [vmem:[%s1 + $0x3d8] sm:$0xff]
  %v140 = vld [vmem:[%s1 + $0x3e0] sm:$0xff]
  %v141 = vld [vmem:[%s1 + $0x3e8] sm:$0xff]
  %v142 = vld [vmem:[%s1 + $0x3f0] sm:$0xff]
  %v143 = vld [vmem:[%s1 + $0x3f8] sm:$0xff]
  %v144 = vld [vmem:[%s1 + $0x400] sm:$0xff]
  %v145 = vld [vmem:[%s1 + $0x408] sm:$0xff]
  %v146 = vld [vmem:[%s1 + $0x410] sm:$0xff]
  %v147 = vld [vmem:[%s1 + $0x418] sm:$0xff]
  %v148 = vld [vmem:[%s1 + $0x420] sm:$0xff]
  %v149 = vld [vmem:[%s1 + $0x428] sm:$0xff]
  %v150 = vld [vmem:[%s1 + $0x430] sm:$0xff]
  %v151 = vld [vmem:[%s1 + $0x438] sm:$0xff]
  %v152 = vld [vmem:[%s1 + $0x440] sm:$0xff]
  %v153 = vld [vmem:[%s1 + $0x448] sm:$0xff]
  %v154 = vld [vmem:[%s1 + $0x450] sm:$0xff]
  %v155 = vld [vmem:[%s1 + $0x458] sm:$0xff]
  %v156 = vld [vmem:[%s1 + $0x460] sm:$0xff]
  %v157 = vld [vmem:[%s1 + $0x468] sm:$0xff]
  %v158 = vld [vmem:[%s1 + $0x470] sm:$0xff]
  %v159 = vld [vmem:[%s1 + $0x478] sm:$0xff]
  %v160 = vld [vmem:[%s1 + $0x480] sm:$0xff]
  %v161 = vld [vmem:[%s1 + $0x488] sm:$0xff]
  %v162 = vld [vmem:[%s1 + $0x490] sm:$0xff]
  %v163 = vld [vmem:[%s1 + $0x498] sm:$0xff]
  %v164 = vld [vmem:[%s1 + $0x4a0] sm:$0xff]
  %v165 = vld [vmem:[%s1 + $0x4a8] sm:$0xff]
  %v166 = vld [vmem:[%s1 + $0x4b0] sm:$0xff]
  %v167 = vld [vmem:[%s1 + $0x4b8] sm:$0xff]
  %v168 = vld [vmem:[%s1 + $0x4c0] sm:$0xff]
  %v169 = vld [vmem:[%s1 + $0x4c8] sm:$0xff]
  %v170 = vld [vmem:[%s1 + $0x4d0] sm:$0xff]
  %v171 = vld [vmem:[%s1 + $0x4d8] sm:$0xff]
  %v172 = vld [vmem:[%s1 + $0x4e0] sm:$0xff]
  %v173 = vld [vmem:[%s1 + $0x4e8] sm:$0xff]
  %v174 = vld [vmem:[%s1 + $0x4f0] sm:$0xff]
  %v175 = vld [vmem:[%s1 + $0x4f8] sm:$0xff]
  %v176 = vld [vmem:[%s1 + $0x500] sm:$0xff]
  %v177 = vld [vmem:[%s1 + $0x508] sm:$0xff]
  %v178 = vld [vmem:[%s1 + $0x510] sm:$0xff]
  %v179 = vld [vmem:[%s1 + $0x518] sm:$0xff]
  %v180 = vld [vmem:[%s1 + $0x520] sm:$0xff]
  %v181 = vld [vmem:[%s1 + $0x528] sm:$0xff]
  %v182 = vld [vmem:[%s1 + $0x530] sm:$0xff]
  %v183 = vld [vmem:[%s1 + $0x538] sm:$0xff]
  %v184 = vld [vmem:[%s1 + $0x540] sm:$0xff]
  %v185 = vld [vmem:[%s1 + $0x548] sm:$0xff]
  %v186 = vld [vmem:[%s1 + $0x550] sm:$0xff]
  %v187 = vld [vmem:[%s1 + $0x558] sm:$0xff]
  %v188 = vld [vmem:[%s1 + $0x560] sm:$0xff]
  %v189 = vld [vmem:[%s1 + $0x568] sm:$0xff]
  %v190 = vld [vmem:[%s1 + $0x570] sm:$0xff]
  %v191 = vld [vmem:[%s1 + $0x578] sm:$0xff]
  %v192 = vld [vmem:[%s1 + $0x580] sm:$0xff]
  %v193 = vld [vmem:[%s1 + $0x588] sm:$0xff]
  %v194 = vld [vmem:[%s1 + $0x590] sm:$0xff]
  %v195 = vld [vmem:[%s1 + $0x598] sm:$0xff]
  %v196 = vld [vmem:[%s1 + $0x5a0] sm:$0xff]
  %v197 = vld [vmem:[%s1 + $0x5a8] sm:$0xff]
  %v198 = vld [vmem:[%s1 + $0x5b0] sm:$0xff]
  %v199 = vld [vmem:[%s1 + $0x5b8] sm:$0xff]
  %v200 = vld [vmem:[%s1 + $0x5c0] sm:$0xff]
  %v201 = vld [vmem:[%s1 + $0x5c8] sm:$0xff]
  %v202 = vld [vmem:[%s1 + $0x5d0] sm:$0xff]
  %v203 = vld [vmem:[%s1 + $0x5d8] sm:$0xff]
  %v204 = vld [vmem:[%s1 + $0x5e0] sm:$0xff]
  %v205 = vld [vmem:[%s1 + $0x5e8] sm:$0xff]
  %v206 = vld [vmem:[%s1 + $0x5f0] sm:$0xff]
  %v207 = vld [vmem:[%s1 + $0x5f8] sm:$0xff]
  %v208 = vld [vmem:[%s1 + $0x600] sm:$0xff]
  %v209 = vld [vmem:[%s1 + $0x608] sm:$0xff]
  %v210 = vld [vmem:[%s1 + $0x610] sm:$0xff]
  %v211 = vld [vmem:[%s1 + $0x618] sm:$0xff]
  %v212 = vld [vmem:[%s1 + $0x620] sm:$0xff]
  %v213 = vld [vmem:[%s1 + $0x628] sm:$0xff]
  %v214 = vld [vmem:[%s1 + $0x630] sm:$0xff]
  %v215 = vld [vmem:[%s1 + $0x638] sm:$0xff]
  %v216 = vld [vmem:[%s1 + $0x640] sm:$0xff]
  %v217 = vld [vmem:[%s1 + $0x648] sm:$0xff]
  %v218 = vld [vmem:[%s1 + $0x650] sm:$0xff]
  %v219 = vld [vmem:[%s1 + $0x658] sm:$0xff]
  %v220 = vld [vmem:[%s1 + $0x660] sm:$0xff]
  %v221 = vld [vmem:[%s1 + $0x668] sm:$0xff]
  %v222 = vld [vmem:[%s1 + $0x670] sm:$0xff]
  %v223 = vld [vmem:[%s1 + $0x678] sm:$0xff]
  %v224 = vld [vmem:[%s1 + $0x680] sm:$0xff]
  %v225 = vld [vmem:[%s1 + $0x688] sm:$0xff]
  %v226 = vld [vmem:[%s1 + $0x690] sm:$0xff]
  %v227 = vld [vmem:[%s1 + $0x698] sm:$0xff]
  %v228 = vld [vmem:[%s1 + $0x6a0] sm:$0xff]
  %v229 = vld [vmem:[%s1 + $0x6a8] sm:$0xff]
  %v230 = vld [vmem:[%s1 + $0x6b0] sm:$0xff]
  %v231 = vld [vmem:[%s1 + $0x6b8] sm:$0xff]
  %v232 = vld [vmem:[%s1 + $0x6c0] sm:$0xff]
  %v233 = vld [vmem:[%s1 + $0x6c8] sm:$0xff]
  %v234 = vld [vmem:[%s1 + $0x6d0] sm:$0xff]
  %v235 = vld [vmem:[%s1 + $0x6d8] sm:$0xff]
  %v236 = vld [vmem:[%s1 + $0x6e0] sm:$0xff]
  %v237 = vld [vmem:[%s1 + $0x6e8] sm:$0xff]
  %v238 = vld [vmem:[%s1 + $0x6f0] sm:$0xff]
  %v239 = vld [vmem:[%s1 + $0x6f8] sm:$0xff]
  %v240 = vld [vmem:[%s1 + $0x700] sm:$0xff]
  %v241 = vld [vmem:[%s1 + $0x708] sm:$0xff]
  %v242 = vld [vmem:[%s1 + $0x710] sm:$0xff]
  %v243 = vld [vmem:[%s1 + $0x718] sm:$0xff]
  %v244 = vld [vmem:[%s1 + $0x720] sm:$0xff]
  %v245 = vld [vmem:[%s1 + $0x728] sm:$0xff]
  %v246 = vld [vmem:[%s1 + $0x730] sm:$0xff]
  %v247 = vld [vmem:[%s1 + $0x738] sm:$0xff]
  %v248 = vld [vmem:[%s1 + $0x740] sm:$0xff]
  %v249 = vld [vmem:[%s1 + $0x748] sm:$0xff]
  %v250 = vld [vmem:[%s1 + $0x750] sm:$0xff]
  %v251 = vld [vmem:[%s1 + $0x758] sm:$0xff]
  %v252 = vld [vmem:[%s1 + $0x760] sm:$0xff]
  %v253 = vld [vmem:[%s1 + $0x768] sm:$0xff]
  %v254 = vld [vmem:[%s1 + $0x770] sm:$0xff]
  %v255 = vld [vmem:[%s1 + $0x778] sm:$0xff]
  %v256 = vld [vmem:[%s1 + $0x780] sm:$0xff]
  %v257 = vld [vmem:[%s1 + $0x788] sm:$0xff]
  %v258 = vld [vmem:[%s1 + $0x790] sm:$0xff]
  %v259 = vld [vmem:[%s1 + $0x798] sm:$0xff]
  %v260 = vld [vmem:[%s1 + $0x7a0] sm:$0xff]
  %v261 = vld [vmem:[%s1 + $0x7a8] sm:$0xff]
  %v262 = vld [vmem:[%s1 + $0x7b0] sm:$0xff]
  %v263 = vld [vmem:[%s1 + $0x7b8] sm:$0xff]
  %v264 = vld [vmem:[%s1 + $0x7c0] sm:$0xff]
  %v265 = vld [vmem:[%s1 + $0x7c8] sm:$0xff]
  %v266 = vld [vmem:[%s1 + $0x7d0] sm:$0xff]
  %v267 = vld [vmem:[%s1 + $0x7d8] sm:$0xff]
  %v268 = vld [vmem:[%s1 + $0x7e0] sm:$0xff]
  %v269 = vld [vmem:[%s1 + $0x7e8] sm:$0xff]
  %v270 = vld [vmem:[%s1 + $0x7f0] sm:$0xff]
  %v271 = vld [vmem:[%s1 + $0x7f8] sm:$0xff]
  %v272 = vld [vmem:[%s1 + $0x800] sm:$0xff]
  %v273 = vld [vmem:[%s1 + $0x808] sm:$0xff]
  %v274 = vld [vmem:[%s1 + $0x810] sm:$0xff]
  %v275 = vld [vmem:[%s1 + $0x818] sm:$0xff]
  %v276 = vld [vmem:[%s1 + $0x820] sm:$0xff]
  %v277 = vld [vmem:[%s1 + $0x828] sm:$0xff]
  %v278 = vld [vmem:[%s1 + $0x830] sm:$0xff]
  %v279 = vld [vmem:[%s1 + $0x838] sm:$0xff]
  %v280 = vld [vmem:[%s1 + $0x840] sm:$0xff]
  %v281 = vld [vmem:[%s1 + $0x848] sm:$0xff]
  %v282 = vld [vmem:[%s1 + $0x850] sm:$0xff]
  %v283 = vld [vmem:[%s1 + $0x858] sm:$0xff]
  %v284 = vld [vmem:[%s1 + $0x860] sm:$0xff]
  %v285 = vld [vmem:[%s1 + $0x868] sm:$0xff]
  %v286 = vld [vmem:[%s1 + $0x870] sm:$0xff]
  %v287 = vld [vmem:[%s1 + $0x878] sm:$0xff]
  %v288 = vld [vmem:[%s1 + $0x880] sm:$0xff]
  %v289 = vld [vmem:[%s1 + $0x888] sm:$0xff]
  %v290 = vld [vmem:[%s1 + $0x890] sm:$0xff]
  %v291 = vld [vmem:[%s1 + $0x898] sm:$0xff]
  %v292 = vld [vmem:[%s1 + $0x8a0] sm:$0xff]
  %v293 = vld [vmem:[%s1 + $0x8a8] sm:$0xff]
  %v294 = vld [vmem:[%s1 + $0x8b0] sm:$0xff]
  %v295 = vld [vmem:[%s1 + $0x8b8] sm:$0xff]
  %v296 = vld [vmem:[%s1 + $0x8c0] sm:$0xff]
  %v297 = vld [vmem:[%s1 + $0x8c8] sm:$0xff]
  %v298 = vld [vmem:[%s1 + $0x8d0] sm:$0xff]
  %v299 = vld [vmem:[%s1 + $0x8d8] sm:$0xff]
  %v300 = vld [vmem:[%s1 + $0x8e0] sm:$0xff]
  %v301 = vld [vmem:[%s1 + $0x8e8] sm:$0xff]
  %v302 = vld [vmem:[%s1 + $0x8f0] sm:$0xff]
  %v303 = vld [vmem:[%s1 + $0x8f8] sm:$0xff]
  %v304 = vld [vmem:[%s1 + $0x900] sm:$0xff]
  %v305 = vld [vmem:[%s1 + $0x908] sm:$0xff]
  %v306 = vld [vmem:[%s1 + $0x910] sm:$0xff]
  %v307 = vld [vmem:[%s1 + $0x918] sm:$0xff]
  %v308 = vld [vmem:[%s1 + $0x920] sm:$0xff]
  %v309 = vld [vmem:[%s1 + $0x928] sm:$0xff]
  %v310 = vld [vmem:[%s1 + $0x930] sm:$0xff]
  %v311 = vld [vmem:[%s1 + $0x938] sm:$0xff]
  %v312 = vld [vmem:[%s1 + $0x940] sm:$0xff]
  %v313 = vld [vmem:[%s1 + $0x948] sm:$0xff]
  %v314 = vld [vmem:[%s1 + $0x950] sm:$0xff]
  %v315 = vld [vmem:[%s1 + $0x958] sm:$0xff]
  %v316 = vld [vmem:[%s1 + $0x960] sm:$0xff]
  %v317 = vld [vmem:[%s1 + $0x968] sm:$0xff]
  %v318 = vld [vmem:[%s1 + $0x970] sm:$0xff]
  %v319 = vld [vmem:[%s1 + $0x978] sm:$0xff]
  %v320 = vld [vmem:[%s1 + $0x980] sm:$0xff]
  %v321 = vld [vmem:[%s1 + $0x988] sm:$0xff]
  %v322 = vld [vmem:[%s1 + $0x990] sm:$0xff]
  %v323 = vld [vmem:[%s1 + $0x998] sm:$0xff]
  %v324 = vld [vmem:[%s1 + $0x9a0] sm:$0xff]
  %v325 = vld [vmem:[%s1 + $0x9a8] sm:$0xff]
  %v326 = vld [vmem:[%s1 + $0x9b0] sm:$0xff]
  %v327 = vld [vmem:[%s1 + $0x9b8] sm:$0xff]
  %v328 = vld [vmem:[%s1 + $0x9c0] sm:$0xff]
  %v329 = vld [vmem:[%s1 + $0x9c8] sm:$0xff]
  %v330 = vld [vmem:[%s1 + $0x9d0] sm:$0xff]
  %v331 = vld [vmem:[%s1 + $0x9d8] sm:$0xff]
  %v332 = vld [vmem:[%s1 + $0x9e0] sm:$0xff]
  %v333 = vld [vmem:[%s1 + $0x9e8] sm:$0xff]
  %v334 = vld [vmem:[%s1 + $0x9f0] sm:$0xff]
  %v335 = vld [vmem:[%s1 + $0x9f8] sm:$0xff]
  %v336 = vld [vmem:[%s1 + $0xa00] sm:$0xff]
  %v337 = vld [vmem:[%s1 + $0xa08] sm:$0xff]
  %v338 = vld [vmem:[%s1 + $0xa10] sm:$0xff]
  %v339 = vld [vmem:[%s1 + $0xa18] sm:$0xff]
  %v340 = vld [vmem:[%s1 + $0xa20] sm:$0xff]
  %v341 = vld [vmem:[%s1 + $0xa28] sm:$0xff]
  %v342 = vld [vmem:[%s1 + $0xa30] sm:$0xff]
  %v343 = vld [vmem:[%s1 + $0xa38] sm:$0xff]
  %v344 = vld [vmem:[%s1 + $0xa40] sm:$0xff]
  %v345 = vld [vmem:[%s1 + $0xa48] sm:$0xff]
  %v346 = vld [vmem:[%s1 + $0xa50] sm:$0xff]
  %v347 = vld [vmem:[%s1 + $0xa58] sm:$0xff]
  %v348 = vld [vmem:[%s1 + $0xa60] sm:$0xff]
  %v349 = vld [vmem:[%s1 + $0xa68] sm:$0xff]
  %v350 = vld [vmem:[%s1 + $0xa70] sm:$0xff]
  %v351 = vld [vmem:[%s1 + $0xa78] sm:$0xff]
  %v352 = vld [vmem:[%s1 + $0xa80] sm:$0xff]
  %v353 = vld [vmem:[%s1 + $0xa88] sm:$0xff]
  %v354 = vld [vmem:[%s1 + $0xa90] sm:$0xff]
  %v355 = vld [vmem:[%s1 + $0xa98] sm:$0xff]
  %v356 = vld [vmem:[%s1 + $0xaa0] sm:$0xff]
  %v357 = vld [vmem:[%s1 + $0xaa8] sm:$0xff]
  %v358 = vld [vmem:[%s1 + $0xab0] sm:$0xff]
  %v359 = vld [vmem:[%s1 + $0xab8] sm:$0xff]
  %v360 = vld [vmem:[%s1 + $0xac0] sm:$0xff]
  %v361 = vld [vmem:[%s1 + $0xac8] sm:$0xff]
  %v362 = vld [vmem:[%s1 + $0xad0] sm:$0xff]
  %v363 = vld [vmem:[%s1 + $0xad8] sm:$0xff]
  %v364 = vld [vmem:[%s1 + $0xae0] sm:$0xff]
  %v365 = vld [vmem:[%s1 + $0xae8] sm:$0xff]
  %v366 = vld [vmem:[%s1 + $0xaf0] sm:$0xff]
  %v367 = vld [vmem:[%s1 + $0xaf8] sm:$0xff]
  %v368 = vld [vmem:[%s1 + $0xb00] sm:$0xff]
  %v369 = vld [vmem:[%s1 + $0xb08] sm:$0xff]
  %v370 = vld [vmem:[%s1 + $0xb10] sm:$0xff]
  %v371 = vld [vmem:[%s1 + $0xb18] sm:$0xff]
  %v372 = vld [vmem:[%s1 + $0xb20] sm:$0xff]
  %v373 = vld [vmem:[%s1 + $0xb28] sm:$0xff]
  %v374 = vld [vmem:[%s1 + $0xb30] sm:$0xff]
  %v375 = vld [vmem:[%s1 + $0xb38] sm:$0xff]
  %v376 = vld [vmem:[%s1 + $0xb40] sm:$0xff]
  %v377 = vld [vmem:[%s1 + $0xb48] sm:$0xff]
  %v378 = vld [vmem:[%s1 + $0xb50] sm:$0xff]
  %v379 = vld [vmem:[%s1 + $0xb58] sm:$0xff]
  %v380 = vld [vmem:[%s1 + $0xb60] sm:$0xff]
  %v381 = vld [vmem:[%s1 + $0xb68] sm:$0xff]
  %v382 = vld [vmem:[%s1 + $0xb70] sm:$0xff]
  %v383 = vld [vmem:[%s1 + $0xb78] sm:$0xff]
  %v384 = vld [vmem:[%s1 + $0xb80] sm:$0xff]
  %v385 = vld [vmem:[%s1 + $0xb88] sm:$0xff]
  %v386 = vld [vmem:[%s1 + $0xb90] sm:$0xff]
  %v387 = vld [vmem:[%s1 + $0xb98] sm:$0xff]
  %v388 = vld [vmem:[%s1 + $0xba0] sm:$0xff]
  %v389 = vld [vmem:[%s1 + $0xba8] sm:$0xff]
  %v390 = vld [vmem:[%s1 + $0xbb0] sm:$0xff]
  %v391 = vld [vmem:[%s1 + $0xbb8] sm:$0xff]
  %v392 = vld [vmem:[%s1 + $0xbc0] sm:$0xff]
  %v393 = vld [vmem:[%s1 + $0xbc8] sm:$0xff]
  %v394 = vld [vmem:[%s1 + $0xbd0] sm:$0xff]
  %v395 = vld [vmem:[%s1 + $0xbd8] sm:$0xff]
  %v396 = vld [vmem:[%s1 + $0xbe0] sm:$0xff]
  %v397 = vld [vmem:[%s1 + $0xbe8] sm:$0xff]
  %v398 = vld [vmem:[%s1 + $0xbf0] sm:$0xff]
  %v399 = vld [vmem:[%s1 + $0xbf8] sm:$0xff]
  %v400 = vld [vmem:[%s1 + $0xc00] sm:$0xff]
  %v401 = vld [vmem:[%s1 + $0xc08] sm:$0xff]
  %v402 = vld [vmem:[%s1 + $0xc10] sm:$0xff]
  %v403 = vld [vmem:[%s1 + $0xc18] sm:$0xff]
  %v404 = vld [vmem:[%s1 + $0xc20] sm:$0xff]
  %v405 = vld [vmem:[%s1 + $0xc28] sm:$0xff]
  %v406 = vld [vmem:[%s1 + $0xc30] sm:$0xff]
  %v407 = vld [vmem:[%s1 + $0xc38] sm:$0xff]
  %v408 = vld [vmem:[%s1 + $0xc40] sm:$0xff]
  %v409 = vld [vmem:[%s1 + $0xc48] sm:$0xff]
  %v410 = vld [vmem:[%s1 + $0xc50] sm:$0xff]
  %v411 = vld [vmem:[%s1 + $0xc58] sm:$0xff]
  %v412 = vld [vmem:[%s1 + $0xc60] sm:$0xff]
  %v413 = vld [vmem:[%s1 + $0xc68] sm:$0xff]
  %v414 = vld [vmem:[%s1 + $0xc70] sm:$0xff]
  %v415 = vld [vmem:[%s1 + $0xc78] sm:$0xff]
  %v416 = vld [vmem:[%s2] sm:$0xf]
  %v418 = vlaneseq
  %v419 = vshrl.u32 %v418, 7
  %v420 = vsub.s32 0, %v419
  %v421 = vrot.slane %v416, %v420
  %v422 = vlaneseq
  %v423 = vshrl.u32 %v422, 7
  %v424 = vsub.s32 1, %v423
  %v425 = vrot.slane %v416, %v424
  %v426 = vlaneseq
  %v427 = vshrl.u32 %v426, 7
  %v428 = vsub.s32 2, %v427
  %v429 = vrot.slane %v416, %v428
  %v430 = vlaneseq
  %v431 = vshrl.u32 %v430, 7
  %v432 = vsub.s32 3, %v431
  %v433 = vrot.slane %v416, %v432
  %v440 = vcombine.high %v14, %v14
  %v442 = vunpack.c.l.s4 1983009808
  %v443 = vunpack.c.0.s8 %v442
  %v444 = vlaneseq
  %v445 = vshrl.u32 %v444, 7
  %v446 = vsub.s32 %v443, %v445
  %v447 = vrot.slane %v14, %v446
  %v449 = vunpack.c.l.s4 1983009808
  %v450 = vunpack.c.0.s8 %v449
  %v451 = vlaneseq
  %v452 = vshrl.u32 %v451, 7
  %v453 = vsub.s32 %v450, %v452
  %v454 = vrot.slane %v440, %v453
  %v455 = vcombine.high %v447, %v447
  %v456 = vcombine.high %v454, %v454
  %v457 = vcombine.high %v15, %v15
  %v459 = vunpack.c.l.s4 1983009808
  %v460 = vunpack.c.0.s8 %v459
  %v461 = vlaneseq
  %v462 = vshrl.u32 %v461, 7
  %v463 = vsub.s32 %v460, %v462
  %v464 = vrot.slane %v15, %v463
  %v466 = vunpack.c.l.s4 1983009808
  %v467 = vunpack.c.0.s8 %v466
  %v468 = vlaneseq
  %v469 = vshrl.u32 %v468, 7
  %v470 = vsub.s32 %v467, %v469
  %v471 = vrot.slane %v457, %v470
  %v472 = vcombine.high %v464, %v464
  %vm479 = vcmask 261120
  %v480 = vsel %vm479, %v471, 0
  %482 = vmatprep.subr.mxu0 %v17
  %483 = vmatpush1.msra.mxu0 %v16
  %484 = vmatprep.subr.mxu0 %v21
  %485 = vmatpush1.msra.mxu0 %v20
  %486 = vmatprep.subr.mxu0 %v25
  %487 = vmatpush1.msra.mxu0 %v24
  %488 = vmatprep.subr.mxu0 %v29
  %489 = vmatpush1.msra.mxu0 %v28
  %490 = vmatprep.subr.mxu0 %v33
  %491 = vmatpush1.msra.mxu0 %v32
  %492 = vmatprep.subr.mxu0 %v37
  %493 = vmatpush1.msra.mxu0 %v36
  %494 = vmatprep.subr.mxu0 %v41
  %495 = vmatpush1.msra.mxu0 %v40
  %496 = vmatprep.subr.mxu0 %v45
  %497 = vmatpush1.msra.mxu0 %v44
  %498 = vmatprep.subr.mxu0 %v49
  %499 = vmatpush1.msra.mxu0 %v48
  %500 = vmatprep.subr.mxu0 %v53
  %501 = vmatpush1.msra.mxu0 %v52
  %502 = vmatprep.subr.mxu0 %v57
  %503 = vmatpush1.msra.mxu0 %v56
  %504 = vmatprep.subr.mxu0 %v61
  %505 = vmatpush1.msra.mxu0 %v60
  %506 = vmatprep.subr.mxu0 %v65
  %507 = vmatpush1.msra.mxu0 %v64
  %508 = vmatprep.subr.mxu0 %v69
  %509 = vmatpush1.msra.mxu0 %v68
  %510 = vmatprep.subr.mxu0 %v73
  %511 = vmatpush1.msra.mxu0 %v72
  %512 = vmatprep.subr.mxu0 %v77
  %513 = vmatpush1.msra.mxu0 %v76
  %514 = vmatprep.subr.mxu0 %v81
  %515 = vmatpush1.msra.mxu0 %v80
  %516 = vmatprep.subr.mxu0 %v85
  %517 = vmatpush1.msra.mxu0 %v84
  %518 = vmatprep.subr.mxu0 %v89
  %519 = vmatpush1.msra.mxu0 %v88
  %520 = vmatprep.subr.mxu0 %v93
  %521 = vmatpush1.msra.mxu0 %v92
  %522 = vmatprep.subr.mxu0 %v97
  %523 = vmatpush1.msra.mxu0 %v96
  %524 = vmatprep.subr.mxu0 %v101
  %525 = vmatpush1.msra.mxu0 %v100
  %526 = vmatprep.subr.mxu0 %v105
  %527 = vmatpush1.msra.mxu0 %v104
  %528 = vmatprep.subr.mxu0 %v109
  %529 = vmatpush1.msra.mxu0 %v108
  %530 = vmatprep.subr.mxu0 %v113
  %531 = vmatpush1.msra.mxu0 %v112
  %532 = vmatprep.subr.mxu0 %v117
  %533 = vmatpush1.msra.mxu0 %v116
  %534 = vmatprep.subr.mxu0 %v121
  %535 = vmatpush1.msra.mxu0 %v120
  %536 = vmatprep.subr.mxu0 %v125
  %537 = vmatpush1.msra.mxu0 %v124
  %538 = vmatprep.subr.mxu0 %v129
  %539 = vmatpush1.msra.mxu0 %v128
  %540 = vmatprep.subr.mxu0 %v133
  %541 = vmatpush1.msra.mxu0 %v132
  %542 = vmatprep.subr.mxu0 %v137
  %543 = vmatpush1.msra.mxu0 %v136
  %544 = vmatprep.subr.mxu0 %v141
  %545 = vmatpush1.msra.mxu0 %v140
  %546 = vmatprep.mubr.f32.mxu0 %v455
  %547 = vmatmul.mubr.f32.gmra.mrb[0].mxu0 %v447
  %v548 = vpop.f32.mrb[0].mxu0
  %v549 = vadd.f32 %v421, %v548
  %v550 = vpop.f32.mrb[0].mxu0
  %v551 = vadd.f32 %v425, %v550
  %552 = vdwg.mxu0
  %553 = vmatprep.subr.mxu0 %v145
  %554 = vmatpush1.msra.mxu0 %v144
  %555 = vmatprep.subr.mxu0 %v149
  %556 = vmatpush1.msra.mxu0 %v148
  %557 = vmatprep.subr.mxu0 %v153
  %558 = vmatpush1.msra.mxu0 %v152
  %559 = vmatprep.subr.mxu0 %v157
  %560 = vmatpush1.msra.mxu0 %v156
  %561 = vmatprep.subr.mxu0 %v161
  %562 = vmatpush1.msra.mxu0 %v160
  %563 = vmatprep.subr.mxu0 %v165
  %564 = vmatpush1.msra.mxu0 %v164
  %565 = vmatprep.subr.mxu0 %v169
  %566 = vmatpush1.msra.mxu0 %v168
  %567 = vmatprep.subr.mxu0 %v173
  %568 = vmatpush1.msra.mxu0 %v172
  %569 = vmatprep.subr.mxu0 %v177
  %570 = vmatpush1.msra.mxu0 %v176
  %571 = vmatprep.subr.mxu0 %v181
  %572 = vmatpush1.msra.mxu0 %v180
  %573 = vmatprep.subr.mxu0 %v185
  %574 = vmatpush1.msra.mxu0 %v184
  %575 = vmatprep.subr.mxu0 %v189
  %576 = vmatpush1.msra.mxu0 %v188
  %577 = vmatprep.subr.mxu0 %v193
  %578 = vmatpush1.msra.mxu0 %v192
  %579 = vmatprep.subr.mxu0 %v197
  %580 = vmatpush1.msra.mxu0 %v196
  %581 = vmatprep.subr.mxu0 %v201
  %582 = vmatpush1.msra.mxu0 %v200
  %583 = vmatprep.subr.mxu0 %v205
  %584 = vmatpush1.msra.mxu0 %v204
  %585 = vmatprep.subr.mxu0 %v209
  %586 = vmatpush1.msra.mxu0 %v208
  %587 = vmatprep.subr.mxu0 %v213
  %588 = vmatpush1.msra.mxu0 %v212
  %589 = vmatprep.subr.mxu0 %v217
  %590 = vmatpush1.msra.mxu0 %v216
  %591 = vmatprep.subr.mxu0 %v221
  %592 = vmatpush1.msra.mxu0 %v220
  %593 = vmatprep.subr.mxu0 %v225
  %594 = vmatpush1.msra.mxu0 %v224
  %595 = vmatprep.subr.mxu0 %v229
  %596 = vmatpush1.msra.mxu0 %v228
  %597 = vmatprep.subr.mxu0 %v233
  %598 = vmatpush1.msra.mxu0 %v232
  %599 = vmatprep.subr.mxu0 %v237
  %600 = vmatpush1.msra.mxu0 %v236
  %601 = vmatprep.subr.mxu0 %v241
  %602 = vmatpush1.msra.mxu0 %v240
  %603 = vmatprep.subr.mxu0 %v245
  %604 = vmatpush1.msra.mxu0 %v244
  %605 = vmatprep.subr.mxu0 %v249
  %606 = vmatpush1.msra.mxu0 %v248
  %607 = vmatprep.subr.mxu0 %v253
  %608 = vmatpush1.msra.mxu0 %v252
  %609 = vmatprep.subr.mxu0 %v257
  %610 = vmatpush1.msra.mxu0 %v256
  %611 = vmatprep.subr.mxu0 %v261
  %612 = vmatpush1.msra.mxu0 %v260
  %613 = vmatprep.subr.mxu0 %v265
  %614 = vmatpush1.msra.mxu0 %v264
  %615 = vmatprep.subr.mxu0 %v269
  %616 = vmatpush1.msra.mxu0 %v268
  %617 = vmatprep.mubr.f32.mxu0 %v456
  %618 = vmatmul.mubr.f32.gmra.mrb[0].mxu0 %v454
  %v619 = vpop.f32.mrb[0].mxu0
  %v620 = vadd.f32 %v549, %v619
  %v621 = vpop.f32.mrb[0].mxu0
  %v622 = vadd.f32 %v551, %v621
  %623 = vdwg.mxu0
  %624 = vmatprep.subr.mxu0 %v273
  %625 = vmatpush1.msra.mxu0 %v272
  %626 = vmatprep.subr.mxu0 %v277
  %627 = vmatpush1.msra.mxu0 %v276
  %628 = vmatprep.subr.mxu0 %v281
  %629 = vmatpush1.msra.mxu0 %v280
  %630 = vmatprep.subr.mxu0 %v285
  %631 = vmatpush1.msra.mxu0 %v284
  %632 = vmatprep.subr.mxu0 %v289
  %633 = vmatpush1.msra.mxu0 %v288
  %634 = vmatprep.subr.mxu0 %v293
  %635 = vmatpush1.msra.mxu0 %v292
  %636 = vmatprep.subr.mxu0 %v297
  %637 = vmatpush1.msra.mxu0 %v296
  %638 = vmatprep.subr.mxu0 %v301
  %639 = vmatpush1.msra.mxu0 %v300
  %640 = vmatprep.subr.mxu0 %v305
  %641 = vmatpush1.msra.mxu0 %v304
  %642 = vmatprep.subr.mxu0 %v309
  %643 = vmatpush1.msra.mxu0 %v308
  %644 = vmatprep.subr.mxu0 %v313
  %645 = vmatpush1.msra.mxu0 %v312
  %646 = vmatprep.subr.mxu0 %v317
  %647 = vmatpush1.msra.mxu0 %v316
  %648 = vmatprep.subr.mxu0 %v321
  %649 = vmatpush1.msra.mxu0 %v320
  %650 = vmatprep.subr.mxu0 %v325
  %651 = vmatpush1.msra.mxu0 %v324
  %652 = vmatprep.subr.mxu0 %v329
  %653 = vmatpush1.msra.mxu0 %v328
  %654 = vmatprep.subr.mxu0 %v333
  %655 = vmatpush1.msra.mxu0 %v332
  %656 = vmatprep.subr.mxu0 %v337
  %657 = vmatpush1.msra.mxu0 %v336
  %658 = vmatprep.subr.mxu0 %v341
  %659 = vmatpush1.msra.mxu0 %v340
  %660 = vmatprep.subr.mxu0 %v345
  %661 = vmatpush1.msra.mxu0 %v344
  %662 = vmatprep.subr.mxu0 %v349
  %663 = vmatpush1.msra.mxu0 %v348
  %664 = vmatprep.subr.mxu0 %v353
  %665 = vmatpush1.msra.mxu0 %v352
  %666 = vmatprep.subr.mxu0 %v357
  %667 = vmatpush1.msra.mxu0 %v356
  %668 = vmatprep.subr.mxu0 %v361
  %669 = vmatpush1.msra.mxu0 %v360
  %670 = vmatprep.subr.mxu0 %v365
  %671 = vmatpush1.msra.mxu0 %v364
  %672 = vmatprep.subr.mxu0 %v369
  %673 = vmatpush1.msra.mxu0 %v368
  %674 = vmatprep.subr.mxu0 %v373
  %675 = vmatpush1.msra.mxu0 %v372
  %676 = vmatprep.subr.mxu0 %v377
  %677 = vmatpush1.msra.mxu0 %v376
  %678 = vmatprep.subr.mxu0 %v381
  %679 = vmatpush1.msra.mxu0 %v380
  %680 = vmatprep.subr.mxu0 %v385
  %681 = vmatpush1.msra.mxu0 %v384
  %682 = vmatprep.subr.mxu0 %v389
  %683 = vmatpush1.msra.mxu0 %v388
  %684 = vmatprep.subr.mxu0 %v393
  %685 = vmatpush1.msra.mxu0 %v392
  %686 = vmatprep.subr.mxu0 %v397
  %687 = vmatpush1.msra.mxu0 %v396
  %688 = vmatprep.mubr.f32.mxu0 %v472
  %689 = vmatmul.mubr.f32.gmra.mrb[0].mxu0 %v464
  %v690 = vpop.f32.mrb[0].mxu0
  %v691 = vadd.f32 %v620, %v690
  %v692 = vpop.f32.mrb[0].mxu0
  %v693 = vadd.f32 %v622, %v692
  %694 = vdwg.mxu0
  %695 = vmatprep.subr.mxu0 %v401
  %696 = vmatpush1.msra.mxu0 %v400
  %697 = vmatprep.subr.mxu0 %v405
  %698 = vmatpush1.msra.mxu0 %v404
  %699 = vmatprep.subr.mxu0 %v409
  %700 = vmatpush1.msra.mxu0 %v408
  %701 = vmatprep.subr.mxu0 %v413
  %702 = vmatpush1.msra.mxu0 %v412
  %703 = vmatprep.subr.mxu0 0.0
  %704 = vmatpush1.msra.mxu0 0.0
  %705 = vmatprep.subr.mxu0 0.0
  %706 = vmatpush1.msra.mxu0 0.0
  %707 = vmatprep.subr.mxu0 0.0
  %708 = vmatpush1.msra.mxu0 0.0
  %709 = vmatprep.subr.mxu0 0.0
  %710 = vmatpush1.msra.mxu0 0.0
  %711 = vmatprep.subr.mxu0 0.0
  %712 = vmatpush1.msra.mxu0 0.0
  %713 = vmatprep.subr.mxu0 0.0
  %714 = vmatpush1.msra.mxu0 0.0
  %715 = vmatprep.subr.mxu0 0.0
  %716 = vmatpush1.msra.mxu0 0.0
  %717 = vmatprep.subr.mxu0 0.0
  %718 = vmatpush1.msra.mxu0 0.0
  %719 = vmatprep.subr.mxu0 0.0
  %720 = vmatpush1.msra.mxu0 0.0
  %721 = vmatprep.subr.mxu0 0.0
  %722 = vmatpush1.msra.mxu0 0.0
  %723 = vmatprep.subr.mxu0 0.0
  %724 = vmatpush1.msra.mxu0 0.0
  %725 = vmatprep.subr.mxu0 0.0
  %726 = vmatpush1.msra.mxu0 0.0
  %727 = vmatprep.subr.mxu0 0.0
  %728 = vmatpush1.msra.mxu0 0.0
  %729 = vmatprep.subr.mxu0 0.0
  %730 = vmatpush1.msra.mxu0 0.0
  %731 = vmatprep.subr.mxu0 0.0
  %732 = vmatpush1.msra.mxu0 0.0
  %733 = vmatprep.subr.mxu0 0.0
  %734 = vmatpush1.msra.mxu0 0.0
  %735 = vmatprep.subr.mxu0 0.0
  %736 = vmatpush1.msra.mxu0 0.0
  %737 = vmatprep.subr.mxu0 0.0
  %738 = vmatpush1.msra.mxu0 0.0
  %739 = vmatprep.subr.mxu0 0.0
  %740 = vmatpush1.msra.mxu0 0.0
  %741 = vmatprep.subr.mxu0 0.0
  %742 = vmatpush1.msra.mxu0 0.0
  %743 = vmatprep.subr.mxu0 0.0
  %744 = vmatpush1.msra.mxu0 0.0
  %745 = vmatprep.subr.mxu0 0.0
  %746 = vmatpush1.msra.mxu0 0.0
  %747 = vmatprep.subr.mxu0 0.0
  %748 = vmatpush1.msra.mxu0 0.0
  %749 = vmatprep.subr.mxu0 0.0
  %750 = vmatpush1.msra.mxu0 0.0
  %751 = vmatprep.subr.mxu0 0.0
  %752 = vmatpush1.msra.mxu0 0.0
  %753 = vmatprep.subr.mxu0 0.0
  %754 = vmatpush1.msra.mxu0 0.0
  %755 = vmatprep.subr.mxu0 0.0
  %756 = vmatpush1.msra.mxu0 0.0
  %757 = vmatprep.subr.mxu0 0.0
  %758 = vmatpush1.msra.mxu0 0.0
  %759 = vmatprep.mubr.f32.mxu0 0.0
  %760 = vmatmul.mubr.f32.gmra.mrb[0].mxu0 %v480
  %v761 = vpop.f32.mrb[0].mxu0
  %v762 = vadd.f32 %v691, %v761
  %v763 = vpop.f32.mrb[0].mxu0
  %v764 = vadd.f32 %v693, %v763
  %765 = vdwg.mxu0
  %766 = vmatprep.subr.mxu0 %v19
  %767 = vmatpush1.msra.mxu0 %v18
  %768 = vmatprep.subr.mxu0 %v23
  %769 = vmatpush1.msra.mxu0 %v22
  %770 = vmatprep.subr.mxu0 %v27
  %771 = vmatpush1.msra.mxu0 %v26
  %772 = vmatprep.subr.mxu0 %v31
  %773 = vmatpush1.msra.mxu0 %v30
  %774 = vmatprep.subr.mxu0 %v35
  %775 = vmatpush1.msra.mxu0 %v34
  %776 = vmatprep.subr.mxu0 %v39
  %777 = vmatpush1.msra.mxu0 %v38
  %778 = vmatprep.subr.mxu0 %v43
  %779 = vmatpush1.msra.mxu0 %v42
  %780 = vmatprep.subr.mxu0 %v47
  %781 = vmatpush1.msra.mxu0 %v46
  %782 = vmatprep.subr.mxu0 %v51
  %783 = vmatpush1.msra.mxu0 %v50
  %784 = vmatprep.subr.mxu0 %v55
  %785 = vmatpush1.msra.mxu0 %v54
  %786 = vmatprep.subr.mxu0 %v59
  %787 = vmatpush1.msra.mxu0 %v58
  %788 = vmatprep.subr.mxu0 %v63
  %789 = vmatpush1.msra.mxu0 %v62
  %790 = vmatprep.subr.mxu0 %v67
  %791 = vmatpush1.msra.mxu0 %v66
  %792 = vmatprep.subr.mxu0 %v71
  %793 = vmatpush1.msra.mxu0 %v70
  %794 = vmatprep.subr.mxu0 %v75
  %795 = vmatpush1.msra.mxu0 %v74
  %796 = vmatprep.subr.mxu0 %v79
  %797 = vmatpush1.msra.mxu0 %v78
  %798 = vmatprep.subr.mxu0 %v83
  %799 = vmatpush1.msra.mxu0 %v82
  %800 = vmatprep.subr.mxu0 %v87
  %801 = vmatpush1.msra.mxu0 %v86
  %802 = vmatprep.subr.mxu0 %v91
  %803 = vmatpush1.msra.mxu0 %v90
  %804 = vmatprep.subr.mxu0 %v95
  %805 = vmatpush1.msra.mxu0 %v94
  %806 = vmatprep.subr.mxu0 %v99
  %807 = vmatpush1.msra.mxu0 %v98
  %808 = vmatprep.subr.mxu0 %v103
  %809 = vmatpush1.msra.mxu0 %v102
  %810 = vmatprep.subr.mxu0 %v107
  %811 = vmatpush1.msra.mxu0 %v106
  %812 = vmatprep.subr.mxu0 %v111
  %813 = vmatpush1.msra.mxu0 %v110
  %814 = vmatprep.subr.mxu0 %v115
  %815 = vmatpush1.msra.mxu0 %v114
  %816 = vmatprep.subr.mxu0 %v119
  %817 = vmatpush1.msra.mxu0 %v118
  %818 = vmatprep.subr.mxu0 %v123
  %819 = vmatpush1.msra.mxu0 %v122
  %820 = vmatprep.subr.mxu0 %v127
  %821 = vmatpush1.msra.mxu0 %v126
  %822 = vmatprep.subr.mxu0 %v131
  %823 = vmatpush1.msra.mxu0 %v130
  %824 = vmatprep.subr.mxu0 %v135
  %825 = vmatpush1.msra.mxu0 %v134
  %826 = vmatprep.subr.mxu0 %v139
  %827 = vmatpush1.msra.mxu0 %v138
  %828 = vmatprep.subr.mxu0 %v143
  %829 = vmatpush1.msra.mxu0 %v142
  %830 = vmatprep.mubr.f32.mxu0 %v455
  %831 = vmatmul.mubr.f32.gmra.mrb[0].mxu0 %v447
  %v832 = vpop.f32.mrb[0].mxu0
  %v833 = vadd.f32 %v429, %v832
  %v834 = vpop.f32.mrb[0].mxu0
  %v835 = vadd.f32 %v433, %v834
  %836 = vdwg.mxu0
  %837 = vmatprep.subr.mxu0 %v147
  %838 = vmatpush1.msra.mxu0 %v146
  %839 = vmatprep.subr.mxu0 %v151
  %840 = vmatpush1.msra.mxu0 %v150
  %841 = vmatprep.subr.mxu0 %v155
  %842 = vmatpush1.msra.mxu0 %v154
  %843 = vmatprep.subr.mxu0 %v159
  %844 = vmatpush1.msra.mxu0 %v158
  %845 = vmatprep.subr.mxu0 %v163
  %846 = vmatpush1.msra.mxu0 %v162
  %847 = vmatprep.subr.mxu0 %v167
  %848 = vmatpush1.msra.mxu0 %v166
  %849 = vmatprep.subr.mxu0 %v171
  %850 = vmatpush1.msra.mxu0 %v170
  %851 = vmatprep.subr.mxu0 %v175
  %852 = vmatpush1.msra.mxu0 %v174
  %853 = vmatprep.subr.mxu0 %v179
  %854 = vmatpush1.msra.mxu0 %v178
  %855 = vmatprep.subr.mxu0 %v183
  %856 = vmatpush1.msra.mxu0 %v182
  %857 = vmatprep.subr.mxu0 %v187
  %858 = vmatpush1.msra.mxu0 %v186
  %859 = vmatprep.subr.mxu0 %v191
  %860 = vmatpush1.msra.mxu0 %v190
  %861 = vmatprep.subr.mxu0 %v195
  %862 = vmatpush1.msra.mxu0 %v194
  %863 = vmatprep.subr.mxu0 %v199
  %864 = vmatpush1.msra.mxu0 %v198
  %865 = vmatprep.subr.mxu0 %v203
  %866 = vmatpush1.msra.mxu0 %v202
  %867 = vmatprep.subr.mxu0 %v207
  %868 = vmatpush1.msra.mxu0 %v206
  %869 = vmatprep.subr.mxu0 %v211
  %870 = vmatpush1.msra.mxu0 %v210
  %871 = vmatprep.subr.mxu0 %v215
  %872 = vmatpush1.msra.mxu0 %v214
  %873 = vmatprep.subr.mxu0 %v219
  %874 = vmatpush1.msra.mxu0 %v218
  %875 = vmatprep.subr.mxu0 %v223
  %876 = vmatpush1.msra.mxu0 %v222
  %877 = vmatprep.subr.mxu0 %v227
  %878 = vmatpush1.msra.mxu0 %v226
  %879 = vmatprep.subr.mxu0 %v231
  %880 = vmatpush1.msra.mxu0 %v230
  %881 = vmatprep.subr.mxu0 %v235
  %882 = vmatpush1.msra.mxu0 %v234
  %883 = vmatprep.subr.mxu0 %v239
  %884 = vmatpush1.msra.mxu0 %v238
  %885 = vmatprep.subr.mxu0 %v243
  %886 = vmatpush1.msra.mxu0 %v242
  %887 = vmatprep.subr.mxu0 %v247
  %888 = vmatpush1.msra.mxu0 %v246
  %889 = vmatprep.subr.mxu0 %v251
  %890 = vmatpush1.msra.mxu0 %v250
  %891 = vmatprep.subr.mxu0 %v255
  %892 = vmatpush1.msra.mxu0 %v254
  %893 = vmatprep.subr.mxu0 %v259
  %894 = vmatpush1.msra.mxu0 %v258
  %895 = vmatprep.subr.mxu0 %v263
  %896 = vmatpush1.msra.mxu0 %v262
  %897 = vmatprep.subr.mxu0 %v267
  %898 = vmatpush1.msra.mxu0 %v266
  %899 = vmatprep.subr.mxu0 %v271
  %900 = vmatpush1.msra.mxu0 %v270
  %901 = vmatprep.mubr.f32.mxu0 %v456
  %902 = vmatmul.mubr.f32.gmra.mrb[0].mxu0 %v454
  %v903 = vpop.f32.mrb[0].mxu0
  %v904 = vadd.f32 %v833, %v903
  %v905 = vpop.f32.mrb[0].mxu0
  %v906 = vadd.f32 %v835, %v905
  %907 = vdwg.mxu0
  %908 = vmatprep.subr.mxu0 %v275
  %909 = vmatpush1.msra.mxu0 %v274
  %910 = vmatprep.subr.mxu0 %v279
  %911 = vmatpush1.msra.mxu0 %v278
  %912 = vmatprep.subr.mxu0 %v283
  %913 = vmatpush1.msra.mxu0 %v282
  %914 = vmatprep.subr.mxu0 %v287
  %915 = vmatpush1.msra.mxu0 %v286
  %916 = vmatprep.subr.mxu0 %v291
  %917 = vmatpush1.msra.mxu0 %v290
  %918 = vmatprep.subr.mxu0 %v295
  %919 = vmatpush1.msra.mxu0 %v294
  %920 = vmatprep.subr.mxu0 %v299
  %921 = vmatpush1.msra.mxu0 %v298
  %922 = vmatprep.subr.mxu0 %v303
  %923 = vmatpush1.msra.mxu0 %v302
  %924 = vmatprep.subr.mxu0 %v307
  %925 = vmatpush1.msra.mxu0 %v306
  %926 = vmatprep.subr.mxu0 %v311
  %927 = vmatpush1.msra.mxu0 %v310
  %928 = vmatprep.subr.mxu0 %v315
  %929 = vmatpush1.msra.mxu0 %v314
  %930 = vmatprep.subr.mxu0 %v319
  %931 = vmatpush1.msra.mxu0 %v318
  %932 = vmatprep.subr.mxu0 %v323
  %933 = vmatpush1.msra.mxu0 %v322
  %934 = vmatprep.subr.mxu0 %v327
  %935 = vmatpush1.msra.mxu0 %v326
  %936 = vmatprep.subr.mxu0 %v331
  %937 = vmatpush1.msra.mxu0 %v330
  %938 = vmatprep.subr.mxu0 %v335
  %939 = vmatpush1.msra.mxu0 %v334
  %940 = vmatprep.subr.mxu0 %v339
  %941 = vmatpush1.msra.mxu0 %v338
  %942 = vmatprep.subr.mxu0 %v343
  %943 = vmatpush1.msra.mxu0 %v342
  %944 = vmatprep.subr.mxu0 %v347
  %945 = vmatpush1.msra.mxu0 %v346
  %946 = vmatprep.subr.mxu0 %v351
  %947 = vmatpush1.msra.mxu0 %v350
  %948 = vmatprep.subr.mxu0 %v355
  %949 = vmatpush1.msra.mxu0 %v354
  %950 = vmatprep.subr.mxu0 %v359
  %951 = vmatpush1.msra.mxu0 %v358
  %952 = vmatprep.subr.mxu0 %v363
  %953 = vmatpush1.msra.mxu0 %v362
  %954 = vmatprep.subr.mxu0 %v367
  %955 = vmatpush1.msra.mxu0 %v366
  %956 = vmatprep.subr.mxu0 %v371
  %957 = vmatpush1.msra.mxu0 %v370
  %958 = vmatprep.subr.mxu0 %v375
  %959 = vmatpush1.msra.mxu0 %v374
  %960 = vmatprep.subr.mxu0 %v379
  %961 = vmatpush1.msra.mxu0 %v378
  %962 = vmatprep.subr.mxu0 %v383
  %963 = vmatpush1.msra.mxu0 %v382
  %964 = vmatprep.subr.mxu0 %v387
  %965 = vmatpush1.msra.mxu0 %v386
  %966 = vmatprep.subr.mxu0 %v391
  %967 = vmatpush1.msra.mxu0 %v390
  %968 = vmatprep.subr.mxu0 %v395
  %969 = vmatpush1.msra.mxu0 %v394
  %970 = vmatprep.subr.mxu0 %v399
  %971 = vmatpush1.msra.mxu0 %v398
  %972 = vmatprep.mubr.f32.mxu0 %v472
  %973 = vmatmul.mubr.f32.gmra.mrb[0].mxu0 %v464
  %v974 = vpop.f32.mrb[0].mxu0
  %v975 = vadd.f32 %v904, %v974
  %v976 = vpop.f32.mrb[0].mxu0
  %v977 = vadd.f32 %v906, %v976
  %978 = vdwg.mxu0
  %979 = vmatprep.subr.mxu0 %v403
  %980 = vmatpush1.msra.mxu0 %v402
  %981 = vmatprep.subr.mxu0 %v407
  %982 = vmatpush1.msra.mxu0 %v406
  %983 = vmatprep.subr.mxu0 %v411
  %984 = vmatpush1.msra.mxu0 %v410
  %985 = vmatprep.subr.mxu0 %v415
  %986 = vmatpush1.msra.mxu0 %v414
  %987 = vmatprep.subr.mxu0 0.0
  %988 = vmatpush1.msra.mxu0 0.0
  %989 = vmatprep.subr.mxu0 0.0
  %990 = vmatpush1.msra.mxu0 0.0
  %991 = vmatprep.subr.mxu0 0.0
  %992 = vmatpush1.msra.mxu0 0.0
  %993 = vmatprep.subr.mxu0 0.0
  %994 = vmatpush1.msra.mxu0 0.0
  %995 = vmatprep.subr.mxu0 0.0
  %996 = vmatpush1.msra.mxu0 0.0
  %997 = vmatprep.subr.mxu0 0.0
  %998 = vmatpush1.msra.mxu0 0.0
  %999 = vmatprep.subr.mxu0 0.0
  %1000 = vmatpush1.msra.mxu0 0.0
  %1001 = vmatprep.subr.mxu0 0.0
  %1002 = vmatpush1.msra.mxu0 0.0
  %1003 = vmatprep.subr.mxu0 0.0
  %1004 = vmatpush1.msra.mxu0 0.0
  %1005 = vmatprep.subr.mxu0 0.0
  %1006 = vmatpush1.msra.mxu0 0.0
  %1007 = vmatprep.subr.mxu0 0.0
  %1008 = vmatpush1.msra.mxu0 0.0
  %1009 = vmatprep.subr.mxu0 0.0
  %1010 = vmatpush1.msra.mxu0 0.0
  %1011 = vmatprep.subr.mxu0 0.0
  %1012 = vmatpush1.msra.mxu0 0.0
  %1013 = vmatprep.subr.mxu0 0.0
  %1014 = vmatpush1.msra.mxu0 0.0
  %1015 = vmatprep.subr.mxu0 0.0
  %1016 = vmatpush1.msra.mxu0 0.0
  %1017 = vmatprep.subr.mxu0 0.0
  %1018 = vmatpush1.msra.mxu0 0.0
  %1019 = vmatprep.subr.mxu0 0.0
  %1020 = vmatpush1.msra.mxu0 0.0
  %1021 = vmatprep.subr.mxu0 0.0
  %1022 = vmatpush1.msra.mxu0 0.0
  %1023 = vmatprep.subr.mxu0 0.0
  %1024 = vmatpush1.msra.mxu0 0.0
  %1025 = vmatprep.subr.mxu0 0.0
  %1026 = vmatpush1.msra.mxu0 0.0
  %1027 = vmatprep.subr.mxu0 0.0
  %1028 = vmatpush1.msra.mxu0 0.0
  %1029 = vmatprep.subr.mxu0 0.0
  %1030 = vmatpush1.msra.mxu0 0.0
  %1031 = vmatprep.subr.mxu0 0.0
  %1032 = vmatpush1.msra.mxu0 0.0
  %1033 = vmatprep.subr.mxu0 0.0
  %1034 = vmatpush1.msra.mxu0 0.0
  %1035 = vmatprep.subr.mxu0 0.0
  %1036 = vmatpush1.msra.mxu0 0.0
  %1037 = vmatprep.subr.mxu0 0.0
  %1038 = vmatpush1.msra.mxu0 0.0
  %1039 = vmatprep.subr.mxu0 0.0
  %1040 = vmatpush1.msra.mxu0 0.0
  %1041 = vmatprep.subr.mxu0 0.0
  %1042 = vmatpush1.msra.mxu0 0.0
  %1043 = vmatprep.mubr.f32.mxu0 0.0
  %1044 = vmatmul.mubr.f32.gmra.mrb[0].mxu0 %v480
  %v1045 = vpop.f32.mrb[0].mxu0
  %v1046 = vadd.f32 %v975, %v1045
  %v1047 = vpop.f32.mrb[0].mxu0
  %v1048 = vadd.f32 %v977, %v1047
  %1049 = vdwg.mxu0
  %v1050 = vmax.f32 %v762, 0.0
  %v1051 = vmax.f32 %v764, 0.0
  %v1052 = vmax.f32 %v1046, 0.0
  %v1053 = vmax.f32 %v1048, 0.0
  %v1058 = vcombine.low %v1050, %v1051
  %v1059 = vcombine.low %v1052, %v1053
  %v1061 = vunpack.c.l.s4 1983009808
  %v1062 = vunpack.c.0.s8 %v1061
  %v1063 = vlaneseq
  %v1064 = vshrl.u32 %v1063, 7
  %v1065 = vsub.s32 %v1062, %v1064
  %v1066 = vrot.slane %v1058, %v1065
  %v1068 = vunpack.c.l.s4 1983009808
  %v1069 = vunpack.c.0.s8 %v1068
  %v1070 = vlaneseq
  %v1071 = vshrl.u32 %v1070, 7
  %v1072 = vsub.s32 %v1069, %v1071
  %v1073 = vrot.slane %v1059, %v1072
  %v1074 = vcombine.low %v1066, %v1073
  %vm1076 = vcmask 1041408
  %vm1077 = vcmask 1043458
  %vm1078 = vmor %vm1077, %vm1076
  %vm1079 = vcmask 1045508
  %vm1080 = vmor %vm1079, %vm1078
  %vm1081 = vcmask 949254
  %vm1082 = vmor %vm1081, %vm1080
  %1083 = vst.msk [vmem:[%s3] sm:$0xff] %vm1082, %v1074
  // Predicated region
  $region14: #{forward.6} parent=0 // pred_check
    _
  $region15: #{forward.6} parent=0 // pred_check_branch
    %1085 = sbr.rel (0) target = $region17
  $region16: #{forward.6} parent=0 // pred_region
    _
  $region17: #{forward.6} parent=0 // pred_fallthru
    _
  // Predicated region
  $region18: #{forward.6} parent=0 // pred_check
    _
  $region19: #{forward.6} parent=0 // pred_check_branch
    %1087 = sbr.rel (0) target = $region21
  $region20: #{forward.6} parent=0 // pred_region
    _
  $region21: #{forward.6} parent=0 // pred_fallthru
    _

// kernel: forward.7
$region0: #{forward.7}
  #allocation0 [shape = 'u32[]', space=smem, size = 0x4, offset = 0x4, fixed_abs, tag = 'smem constant byte address 0x4 - core index']
  #allocation1 [shape = 'u32[144,128]{1,0:T(1,128)}', space=vmem, size = 0x12000, scoped, tag = 'internal scratch']
  %s0 = inlined_call_operand.vmem [shape: f32[2,500], index: 0, kind: input, shape index: {}]
  %s1 = inlined_call_operand.vmem [shape: f32[500,10], index: 1, kind: input, shape index: {}]
  %s2 = inlined_call_operand.vmem [shape: f32[1,10], index: 2, kind: input, shape index: {}]
  %s3 = inlined_call_operand.hbm [shape: f32[2,10], index: 3, kind: output, shape index: {}]
  %s4 = sld [smem:[#allocation0]]
  $region22: #{forward.7} parent=0
    _
  %s6 = ssub.s32 1, %s4
  %s7 = scalar_select 0, %s6, %s4
  $region1: #{forward.7} parent=0
    #allocation2 [shape = 'u8[1024]{0}', space=vmem, size = 0x400, scoped, tag = 'output window, operand 0, single buffered']
    #allocation3 [shape = 's32[1]{0}', space=sflag, size = 0x4, scoped, tag = 'scoped memory for forward.7']
    %8 = vsyncpa [#allocation3], 0
    // Predicated region
    $region2: #{forward.7} parent=1 // pred_check
      _
    $region3: #{forward.7} parent=1 // pred_check_branch
      %10 = sbr.rel (0) target = $region5
    $region4: #{forward.7} parent=1 // pred_region
      _
    $region5: #{forward.7} parent=1 // pred_fallthru
      _
    // Predicated region
    $region6: #{forward.7} parent=1 // pred_check
      _
    $region7: #{forward.7} parent=1 // pred_check_branch
      %12 = sbr.rel (0) target = $region9
    $region8: #{forward.7} parent=1 // pred_region
      _
    $region9: #{forward.7} parent=1 // pred_fallthru
      _
    // Predicated region
    $region10: #{forward.7} parent=1 // pred_check
      _
    $region11: #{forward.7} parent=1 // pred_check_branch
      %14 = sbr.rel (0) target = $region13
    $region12: #{forward.7} parent=1 // pred_region
      _
    $region13: #{forward.7} parent=1 // pred_fallthru
      _
    %v15 = vld [vmem:[%s0] sm:$0xff]
    %v16 = vld [vmem:[%s1] sm:$0xff]
    %v17 = vld [vmem:[%s1 + $0x8] sm:$0xff]
    %v18 = vld [vmem:[%s1 + $0x10] sm:$0xff]
    %v19 = vld [vmem:[%s1 + $0x18] sm:$0xff]
    %v20 = vld [vmem:[%s1 + $0x20] sm:$0xff]
    %v21 = vld [vmem:[%s1 + $0x28] sm:$0xff]
    %v22 = vld [vmem:[%s1 + $0x30] sm:$0xff]
    %v23 = vld [vmem:[%s1 + $0x38] sm:$0xff]
    %v24 = vld [vmem:[%s1 + $0x40] sm:$0xff]
    %v25 = vld [vmem:[%s1 + $0x48] sm:$0xff]
    %v26 = vld [vmem:[%s1 + $0x50] sm:$0xff]
    %v27 = vld [vmem:[%s1 + $0x58] sm:$0xff]
    %v28 = vld [vmem:[%s1 + $0x60] sm:$0xff]
    %v29 = vld [vmem:[%s1 + $0x68] sm:$0xff]
    %v30 = vld [vmem:[%s1 + $0x70] sm:$0xff]
    %v31 = vld [vmem:[%s1 + $0x78] sm:$0xff]
    %v32 = vld [vmem:[%s1 + $0x80] sm:$0xff]
    %v33 = vld [vmem:[%s1 + $0x88] sm:$0xff]
    %v34 = vld [vmem:[%s1 + $0x90] sm:$0xff]
    %v35 = vld [vmem:[%s1 + $0x98] sm:$0xff]
    %v36 = vld [vmem:[%s1 + $0xa0] sm:$0xff]
    %v37 = vld [vmem:[%s1 + $0xa8] sm:$0xff]
    %v38 = vld [vmem:[%s1 + $0xb0] sm:$0xff]
    %v39 = vld [vmem:[%s1 + $0xb8] sm:$0xff]
    %v40 = vld [vmem:[%s1 + $0xc0] sm:$0xff]
    %v41 = vld [vmem:[%s1 + $0xc8] sm:$0xff]
    %v42 = vld [vmem:[%s1 + $0xd0] sm:$0xff]
    %v43 = vld [vmem:[%s1 + $0xd8] sm:$0xff]
    %v44 = vld [vmem:[%s1 + $0xe0] sm:$0xff]
    %v45 = vld [vmem:[%s1 + $0xe8] sm:$0xff]
    %v46 = vld [vmem:[%s1 + $0xf0] sm:$0xff]
    %v47 = vld [vmem:[%s1 + $0xf8] sm:$0xff]
    %v48 = vld [vmem:[%s1 + $0x100] sm:$0xff]
    %v49 = vld [vmem:[%s1 + $0x108] sm:$0xff]
    %v50 = vld [vmem:[%s1 + $0x110] sm:$0xff]
    %v51 = vld [vmem:[%s1 + $0x118] sm:$0xff]
    %v52 = vld [vmem:[%s1 + $0x120] sm:$0xff]
    %v53 = vld [vmem:[%s1 + $0x128] sm:$0xff]
    %v54 = vld [vmem:[%s1 + $0x130] sm:$0xff]
    %v55 = vld [vmem:[%s1 + $0x138] sm:$0xff]
    %v56 = vld [vmem:[%s1 + $0x140] sm:$0xff]
    %v57 = vld [vmem:[%s1 + $0x148] sm:$0xff]
    %v58 = vld [vmem:[%s1 + $0x150] sm:$0xff]
    %v59 = vld [vmem:[%s1 + $0x158] sm:$0xff]
    %v60 = vld [vmem:[%s1 + $0x160] sm:$0xff]
    %v61 = vld [vmem:[%s1 + $0x168] sm:$0xff]
    %v62 = vld [vmem:[%s1 + $0x170] sm:$0xff]
    %v63 = vld [vmem:[%s1 + $0x178] sm:$0xff]
    %v64 = vld [vmem:[%s1 + $0x180] sm:$0xff]
    %v65 = vld [vmem:[%s1 + $0x188] sm:$0xff]
    %v66 = vld [vmem:[%s1 + $0x190] sm:$0xff]
    %v67 = vld [vmem:[%s1 + $0x198] sm:$0xff]
    %v68 = vld [vmem:[%s1 + $0x1a0] sm:$0xff]
    %v69 = vld [vmem:[%s1 + $0x1a8] sm:$0xff]
    %v70 = vld [vmem:[%s1 + $0x1b0] sm:$0xff]
    %v71 = vld [vmem:[%s1 + $0x1b8] sm:$0xff]
    %v72 = vld [vmem:[%s1 + $0x1c0] sm:$0xff]
    %v73 = vld [vmem:[%s1 + $0x1c8] sm:$0xff]
    %v74 = vld [vmem:[%s1 + $0x1d0] sm:$0xff]
    %v75 = vld [vmem:[%s1 + $0x1d8] sm:$0xff]
    %v76 = vld [vmem:[%s1 + $0x1e0] sm:$0xff]
    %v77 = vld [vmem:[%s1 + $0x1e8] sm:$0xff]
    %v78 = vld [vmem:[%s1 + $0x1f0] sm:$0xf]
    %v79 = vld [vmem:[%s2] sm:$0x1]
    %v81 = vlaneseq
    %v82 = vshrl.u32 %v81, 7
    %v83 = vsub.s32 0, %v82
    %v84 = vrot.slane %v79, %v83
    %v87 = vcombine.high %v15, %v15
    %v89 = vunpack.c.l.s4 1983009808
    %v90 = vunpack.c.0.s8 %v89
    %v91 = vlaneseq
    %v92 = vshrl.u32 %v91, 7
    %v93 = vsub.s32 %v90, %v92
    %v94 = vrot.slane %v15, %v93
    %v96 = vunpack.c.l.s4 1983009808
    %v97 = vunpack.c.0.s8 %v96
    %v98 = vlaneseq
    %v99 = vshrl.u32 %v98, 7
    %v100 = vsub.s32 %v97, %v99
    %v101 = vrot.slane %v87, %v100
    %v102 = vcombine.high %v94, %v94
    %v103 = vcombine.high %v101, %v101
    %vm107 = vcmask 949248
    %v108 = vsel %vm107, %v103, 0
    %vm110 = vcmask 1043456
    %v112 = vsel %vm110, %v78, 0
    %114 = vmatprep.subr.mxu0 0.0
    %115 = vmatpush1.msra.mxu0 %v16
    %116 = vmatprep.subr.mxu0 0.0
    %117 = vmatpush1.msra.mxu0 %v17
    %118 = vmatprep.subr.mxu0 0.0
    %119 = vmatpush1.msra.mxu0 %v18
    %120 = vmatprep.subr.mxu0 0.0
    %121 = vmatpush1.msra.mxu0 %v19
    %122 = vmatprep.subr.mxu0 0.0
    %123 = vmatpush1.msra.mxu0 %v20
    %124 = vmatprep.subr.mxu0 0.0
    %125 = vmatpush1.msra.mxu0 %v21
    %126 = vmatprep.subr.mxu0 0.0
    %127 = vmatpush1.msra.mxu0 %v22
    %128 = vmatprep.subr.mxu0 0.0
    %129 = vmatpush1.msra.mxu0 %v23
    %130 = vmatprep.subr.mxu0 0.0
    %131 = vmatpush1.msra.mxu0 %v24
    %132 = vmatprep.subr.mxu0 0.0
    %133 = vmatpush1.msra.mxu0 %v25
    %134 = vmatprep.subr.mxu0 0.0
    %135 = vmatpush1.msra.mxu0 %v26
    %136 = vmatprep.subr.mxu0 0.0
    %137 = vmatpush1.msra.mxu0 %v27
    %138 = vmatprep.subr.mxu0 0.0
    %139 = vmatpush1.msra.mxu0 %v28
    %140 = vmatprep.subr.mxu0 0.0
    %141 = vmatpush1.msra.mxu0 %v29
    %142 = vmatprep.subr.mxu0 0.0
    %143 = vmatpush1.msra.mxu0 %v30
    %144 = vmatprep.subr.mxu0 0.0
    %145 = vmatpush1.msra.mxu0 %v31
    %146 = vmatprep.subr.mxu0 0.0
    %147 = vmatpush1.msra.mxu0 %v32
    %148 = vmatprep.subr.mxu0 0.0
    %149 = vmatpush1.msra.mxu0 %v33
    %150 = vmatprep.subr.mxu0 0.0
    %151 = vmatpush1.msra.mxu0 %v34
    %152 = vmatprep.subr.mxu0 0.0
    %153 = vmatpush1.msra.mxu0 %v35
    %154 = vmatprep.subr.mxu0 0.0
    %155 = vmatpush1.msra.mxu0 %v36
    %156 = vmatprep.subr.mxu0 0.0
    %157 = vmatpush1.msra.mxu0 %v37
    %158 = vmatprep.subr.mxu0 0.0
    %159 = vmatpush1.msra.mxu0 %v38
    %160 = vmatprep.subr.mxu0 0.0
    %161 = vmatpush1.msra.mxu0 %v39
    %162 = vmatprep.subr.mxu0 0.0
    %163 = vmatpush1.msra.mxu0 %v40
    %164 = vmatprep.subr.mxu0 0.0
    %165 = vmatpush1.msra.mxu0 %v41
    %166 = vmatprep.subr.mxu0 0.0
    %167 = vmatpush1.msra.mxu0 %v42
    %168 = vmatprep.subr.mxu0 0.0
    %169 = vmatpush1.msra.mxu0 %v43
    %170 = vmatprep.subr.mxu0 0.0
    %171 = vmatpush1.msra.mxu0 %v44
    %172 = vmatprep.subr.mxu0 0.0
    %173 = vmatpush1.msra.mxu0 %v45
    %174 = vmatprep.subr.mxu0 0.0
    %175 = vmatpush1.msra.mxu0 %v46
    %176 = vmatprep.subr.mxu0 0.0
    %177 = vmatpush1.msra.mxu0 %v47
    %178 = vmatprep.mubr.f32.mxu0 %v102
    %179 = vmatmul.mubr.f32.gmra.mrb[0].mxu0 %v94
    %v180 = vpop.f32.mrb[0].mxu0
    %v181 = vadd.f32 %v84, %v180
    %v182 = vpop.f32.mrb[0].mxu0
    %183 = vdwg.mxu0
    %184 = vmatprep.subr.mxu0 0.0
    %185 = vmatpush1.msra.mxu0 %v48
    %186 = vmatprep.subr.mxu0 0.0
    %187 = vmatpush1.msra.mxu0 %v49
    %188 = vmatprep.subr.mxu0 0.0
    %189 = vmatpush1.msra.mxu0 %v50
    %190 = vmatprep.subr.mxu0 0.0
    %191 = vmatpush1.msra.mxu0 %v51
    %192 = vmatprep.subr.mxu0 0.0
    %193 = vmatpush1.msra.mxu0 %v52
    %194 = vmatprep.subr.mxu0 0.0
    %195 = vmatpush1.msra.mxu0 %v53
    %196 = vmatprep.subr.mxu0 0.0
    %197 = vmatpush1.msra.mxu0 %v54
    %198 = vmatprep.subr.mxu0 0.0
    %199 = vmatpush1.msra.mxu0 %v55
    %200 = vmatprep.subr.mxu0 0.0
    %201 = vmatpush1.msra.mxu0 %v56
    %202 = vmatprep.subr.mxu0 0.0
    %203 = vmatpush1.msra.mxu0 %v57
    %204 = vmatprep.subr.mxu0 0.0
    %205 = vmatpush1.msra.mxu0 %v58
    %206 = vmatprep.subr.mxu0 0.0
    %207 = vmatpush1.msra.mxu0 %v59
    %208 = vmatprep.subr.mxu0 0.0
    %209 = vmatpush1.msra.mxu0 %v60
    %210 = vmatprep.subr.mxu0 0.0
    %211 = vmatpush1.msra.mxu0 %v61
    %212 = vmatprep.subr.mxu0 0.0
    %213 = vmatpush1.msra.mxu0 %v62
    %214 = vmatprep.subr.mxu0 0.0
    %215 = vmatpush1.msra.mxu0 %v63
    %216 = vmatprep.subr.mxu0 0.0
    %217 = vmatpush1.msra.mxu0 %v64
    %218 = vmatprep.subr.mxu0 0.0
    %219 = vmatpush1.msra.mxu0 %v65
    %220 = vmatprep.subr.mxu0 0.0
    %221 = vmatpush1.msra.mxu0 %v66
    %222 = vmatprep.subr.mxu0 0.0
    %223 = vmatpush1.msra.mxu0 %v67
    %224 = vmatprep.subr.mxu0 0.0
    %225 = vmatpush1.msra.mxu0 %v68
    %226 = vmatprep.subr.mxu0 0.0
    %227 = vmatpush1.msra.mxu0 %v69
    %228 = vmatprep.subr.mxu0 0.0
    %229 = vmatpush1.msra.mxu0 %v70
    %230 = vmatprep.subr.mxu0 0.0
    %231 = vmatpush1.msra.mxu0 %v71
    %232 = vmatprep.subr.mxu0 0.0
    %233 = vmatpush1.msra.mxu0 %v72
    %234 = vmatprep.subr.mxu0 0.0
    %235 = vmatpush1.msra.mxu0 %v73
    %236 = vmatprep.subr.mxu0 0.0
    %237 = vmatpush1.msra.mxu0 %v74
    %238 = vmatprep.subr.mxu0 0.0
    %239 = vmatpush1.msra.mxu0 %v75
    %240 = vmatprep.subr.mxu0 0.0
    %241 = vmatpush1.msra.mxu0 %v76
    %242 = vmatprep.subr.mxu0 0.0
    %243 = vmatpush1.msra.mxu0 %v77
    %244 = vmatprep.subr.mxu0 0.0
    %245 = vmatpush1.msra.mxu0 %v112
    %246 = vmatprep.subr.mxu0 0.0
    %247 = vmatpush1.msra.mxu0 0.0
    %248 = vmatprep.mubr.f32.mxu0 %v108
    %249 = vmatmul.mubr.f32.gmra.mrb[0].mxu0 %v101
    %v250 = vpop.f32.mrb[0].mxu0
    %v251 = vadd.f32 %v181, %v250
    %v252 = vpop.f32.mrb[0].mxu0
    %253 = vdwg.mxu0
    %vm254 = vcmask 74752
    %255 = vst.msk [vmem:[#allocation2] sm:$0x3] %vm254, %v251
    // Predicated region
    $region14: #{forward.7} parent=1 // pred_check
      _
    $region15: #{forward.7} parent=1 // pred_check_branch
      %257 = sbr.rel (0) target = $region17
    $region16: #{forward.7} parent=1 // pred_region
      %s259 = ssub.s32 32, 32
      %260 = vsyncadd [#allocation3], %s259
      %s262 = sshll.u32 [#allocation2], 4
      %s263 = int_to_ptr.vmem [resolvable:$true] %s262
      %265 = dma.vmem_to_hbm [thread:$0]  %s263, 32, %s3, [#allocation3]
    $region17: #{forward.7} parent=1 // pred_fallthru
      _
    // Predicated region
    $region18: #{forward.7} parent=1 // pred_check
      _
    $region19: #{forward.7} parent=1 // pred_check_branch
      %267 = sbr.rel (0) target = $region21
    $region20: #{forward.7} parent=1 // pred_region
      %268 = dma.done [#allocation3], 32
    $region21: #{forward.7} parent=1 // pred_fallthru
      _
    %269 = vsyncpa [#allocation3], 1

</llo_original>
